<compile_context>
chip_gen: v7x
topology: tpu7x:2x2x1
jax: 0.10.0
libtpu: 0.0.40
codegen_flags: <defaults>
</compile_context>

<pallas_src>
import numpy as np

import jax
import jax.numpy as jnp
from jax.experimental import pallas as pl
from jax.experimental.pallas import tpu as pltpu


# ----------------------------------------------------------------------------
# Fused forward kernel: one grid step = one image, end to end.
# ----------------------------------------------------------------------------
def lenet_fused_kernel(x_ref, t1_ref, b1_ref, t2_ref, b2_ref,
                       wf1_ref, bf1_ref, wf2_ref, bf2_ref, wf3_ref, bf3_ref,
                       out_ref):
    f32 = jnp.float32

    # ---- conv1 (5x5, 1->6) + ReLU + 2x2 max-pool (pool fused in epilogue) --
    # Conv output rows are produced grouped by (row mod 4), so row-pooling is
    # an elementwise max of whole groups.  T1 orders output lanes as
    # [even out-col block | odd out-col block] (each padded to 128 lanes), so
    # column-pooling is a single vreg-aligned lane-half max.
    c1 = []
    for q in range(4):                          # conv rows 4m+q, m = 0..6
        acc = jnp.zeros((7, 256), f32)
        for i in range(5):                      # kernel row offset
            g, d = (q + i) % 4, (q + i) // 4
            acc = acc + jnp.dot(x_ref[0, g, pl.ds(d, 7), :], t1_ref[i],
                                preferred_element_type=f32)
        c1.append(acc)
    p1e = jnp.maximum(c1[0], c1[1])             # pooled rows 0,2,...,12
    p1o = jnp.maximum(c1[2], c1[3])             # pooled rows 1,3,...,13
    p1e = jnp.maximum(jnp.maximum(p1e[:, :128], p1e[:, 128:]) + b1_ref[...], 0.0)
    p1o = jnp.maximum(jnp.maximum(p1o[:, :128], p1o[:, 128:]) + b1_ref[...], 0.0)
    # p1e / p1o: (7, 128); lanes = pooled_col(14) * 6 channels, rest zero-pad.

    # ---- conv2 (5x5, 6->16) + ReLU + 2x2 max-pool ---------------------------
    def conv2(rows):
        acc = jnp.zeros((5, 256), f32)
        for i in range(5):
            acc = acc + jnp.dot(rows[i], t2_ref[i], preferred_element_type=f32)
        return acc

    r_even = conv2([p1e[0:5], p1o[0:5], p1e[1:6], p1o[1:6], p1e[2:7]])
    r_odd = conv2([p1o[0:5], p1e[1:6], p1o[1:6], p1e[2:7], p1o[2:7]])
    hmax = jnp.maximum(r_even, r_odd)           # rows = pooled rows 0..4
    p2 = jnp.maximum(jnp.maximum(hmax[:, :128], hmax[:, 128:]) + b2_ref[...], 0.0)
    # p2: (5, 128); lanes = pooled_col(5) * 16 channels, rest zero-pad.

    # ---- fc1 + ReLU (torch.flatten folded into per-row weight blocks) ------
    z1 = bf1_ref[...]                            # (1, 128)
    for h in range(5):
        z1 = z1 + jnp.dot(p2[h:h + 1, :], wf1_ref[h],
                          preferred_element_type=f32)
    h1 = jnp.maximum(z1, 0.0)                    # (1, 128), 120 valid lanes

    # ---- fc2 + ReLU, fc3 (N and K zero-padded to 128; pads stay exactly 0) -
    h2 = jnp.maximum(
        jnp.dot(h1, wf2_ref[...], preferred_element_type=f32) + bf2_ref[...],
        0.0)
    h3 = jnp.dot(h2, wf3_ref[...], preferred_element_type=f32) + bf3_ref[...]
    out_ref[0, :, :] = h3[:, :10]


# ----------------------------------------------------------------------------
# Forward wrapper: one pallas_call, batch on the grid.
# ----------------------------------------------------------------------------
@jax.jit
def lenet_forward_pallas(packed, x):
    """x: (B, 1, 32, 32) float32 (NCHW, PyTorch convention) -> (B, 10)."""
    B = x.shape[0]
    # Boundary-only layout prep: regroup image rows by (h mod 4) so every row
    # set used inside the kernel is a contiguous sublane slice.
    x4 = x.reshape(B, 8, 4, 32).transpose(0, 2, 1, 3)   # [b, h%4, h//4, w]

    def const_spec(a):
        n = a.ndim
        return pl.BlockSpec(a.shape, lambda b, n=n: (0,) * n)

    out = pl.pallas_call(
        lenet_fused_kernel,
        out_shape=jax.ShapeDtypeStruct((B, 1, 10), jnp.float32),
        grid=(B,),
        in_specs=[
            pl.BlockSpec((1, 4, 8, 32), lambda b: (b, 0, 0, 0)),
            const_spec(packed["t1"]), const_spec(packed["b1"]),
            const_spec(packed["t2"]), const_spec(packed["b2"]),
            const_spec(packed["wf1"]), const_spec(packed["bf1"]),
            const_spec(packed["wf2"]), const_spec(packed["bf2"]),
            const_spec(packed["wf3"]), const_spec(packed["bf3"]),
        ],
        out_specs=pl.BlockSpec((1, 1, 10), lambda b: (b, 0, 0)),
        compiler_params=pltpu.CompilerParams(
            dimension_semantics=("parallel",)),
    )(x4, packed["t1"], packed["b1"], packed["t2"], packed["b2"],
      packed["wf1"], packed["bf1"], packed["wf2"], packed["bf2"],
      packed["wf3"], packed["bf3"])
    return out.reshape(B, 10)


# ----------------------------------------------------------------------------
# Parameters (deterministic synthetic init, shapes from the nn.Module)
# ----------------------------------------------------------------------------
def init_params(key):
    ks = jax.random.split(key, 10)

    def w_init(k, shape, fan_in):
        return (jax.random.normal(k, shape, jnp.float32)
                / jnp.sqrt(fan_in)).astype(jnp.float32)

    return {
        "conv1_w": w_init(ks[0], (6, 1, 5, 5), 25),
        "conv1_b": w_init(ks[1], (6,), 25),
        "conv2_w": w_init(ks[2], (16, 6, 5, 5), 150),
        "conv2_b": w_init(ks[3], (16,), 150),
        "fc1_w": w_init(ks[4], (120, 400), 400),   # PyTorch Linear: (out, in)
        "fc1_b": w_init(ks[5], (120,), 400),
        "fc2_w": w_init(ks[6], (84, 120), 120),
        "fc2_b": w_init(ks[7], (84,), 120),
        "fc3_w": w_init(ks[8], (10, 84), 84),
        "fc3_b": w_init(ks[9], (10,), 84),
    }


def pack_params(params):
    """One-time repacking of the PyTorch-layout weights into the padded,
    lane-ordered operands the fused kernel consumes.  All Toeplitz building,
    reshapes/transposes, torch-flatten reordering and 128-lane zero padding
    happen here, never in the per-forward path."""
    w1 = np.asarray(params["conv1_w"])      # (6, 1, 5, 5)
    b1 = np.asarray(params["conv1_b"])
    w2 = np.asarray(params["conv2_w"])      # (16, 6, 5, 5)
    b2 = np.asarray(params["conv2_b"])
    fw1 = np.asarray(params["fc1_w"])       # (120, 400)
    fb1 = np.asarray(params["fc1_b"])
    fw2 = np.asarray(params["fc2_w"])       # (84, 120)
    fb2 = np.asarray(params["fc2_b"])
    fw3 = np.asarray(params["fc3_w"])       # (10, 84)
    fb3 = np.asarray(params["fc3_b"])

    # conv1 Toeplitz: T1[i, w_in, col], col = (ow%2)*128 + (ow//2)*6 + oc.
    t1 = np.zeros((5, 32, 256), np.float32)
    for i in range(5):
        for ow in range(28):
            col = (ow % 2) * 128 + (ow // 2) * 6
            for j in range(5):
                t1[i, ow + j, col:col + 6] = w1[:, 0, i, j]
    b1_lane = np.zeros((1, 128), np.float32)
    b1_lane[0, :84] = np.tile(b1, 14)

    # conv2 Toeplitz: rows = w_in*6 + c_in, col = (ow%2)*128 + (ow//2)*16 + oc.
    t2 = np.zeros((5, 128, 256), np.float32)
    for i in range(5):
        for ow in range(10):
            col = (ow % 2) * 128 + (ow // 2) * 16
            for j in range(5):
                win = ow + j
                t2[i, win * 6:(win + 1) * 6, col:col + 16] = w2[:, :, i, j].T
    b2_lane = np.zeros((1, 128), np.float32)
    b2_lane[0, :80] = np.tile(b2, 5)

    # fc1: fold torch.flatten((C=16, H=5, W=5)) order into per-pooled-row
    # blocks indexed by h; pad N 120 -> 128, K rows beyond 80 stay zero.
    wf1 = np.zeros((5, 128, 128), np.float32)
    for h in range(5):
        for w in range(5):
            for c in range(16):
                wf1[h, w * 16 + c, :120] = fw1[:, c * 25 + h * 5 + w]
    bf1 = np.zeros((1, 128), np.float32)
    bf1[0, :120] = fb1

    wf2 = np.zeros((128, 128), np.float32)
    wf2[:120, :84] = fw2.T
    bf2 = np.zeros((1, 128), np.float32)
    bf2[0, :84] = fb2

    wf3 = np.zeros((128, 128), np.float32)
    wf3[:84, :10] = fw3.T
    bf3 = np.zeros((1, 128), np.float32)
    bf3[0, :10] = fb3

    pk = dict(t1=t1, b1=b1_lane, t2=t2, b2=b2_lane,
              wf1=wf1, bf1=bf1, wf2=wf2, bf2=bf2, wf3=wf3, bf3=bf3)
    return {k: jnp.asarray(v) for k, v in pk.items()}


# ----------------------------------------------------------------------------
# Pure-jnp reference with identical (PyTorch) math, for a correctness check.
# ----------------------------------------------------------------------------
def lenet_forward_ref(params, x):
    def conv_relu(x, w, b):
        OC, C, KH, KW = w.shape
        B, _, H, W = x.shape
        OH, OW = H - KH + 1, W - KW + 1
        patches = []
        for i in range(KH):
            for j in range(KW):
                patches.append(x[:, :, i:i + OH, j:j + OW])
        p = jnp.stack(patches, axis=2)                  # (B, C, KH*KW, OH, OW)
        p = p.transpose(0, 3, 4, 1, 2).reshape(B * OH * OW, C * KH * KW)
        y = p @ w.reshape(OC, C * KH * KW).T + b[None, :]
        y = jnp.maximum(y, 0.0)
        return y.reshape(B, OH, OW, OC).transpose(0, 3, 1, 2)

    def pool(x):
        return jnp.maximum(
            jnp.maximum(x[:, :, 0::2, 0::2], x[:, :, 0::2, 1::2]),
            jnp.maximum(x[:, :, 1::2, 0::2], x[:, :, 1::2, 1::2]),
        )

    x = pool(conv_relu(x, params["conv1_w"], params["conv1_b"]))
    x = pool(conv_relu(x, params["conv2_w"], params["conv2_b"]))
    x = x.reshape(x.shape[0], 400)
    x = jnp.maximum(x @ params["fc1_w"].T + params["fc1_b"], 0.0)
    x = jnp.maximum(x @ params["fc2_w"].T + params["fc2_b"], 0.0)
    return x @ params["fc3_w"].T + params["fc3_b"]


if __name__ == "__main__":
    key = jax.random.PRNGKey(0)
    k_param, k_x = jax.random.split(key)
    params = init_params(k_param)
    packed = pack_params(params)

    # LeNet expects 32x32 single-channel NCHW input.
    x = jax.random.normal(k_x, (2, 1, 32, 32), jnp.float32)

    out = jax.block_until_ready(lenet_forward_pallas(packed, x))
    assert out.shape == (2, 10) and out.dtype == jnp.float32

    ref = jax.block_until_ready(lenet_forward_ref(params, x))
    assert jnp.allclose(out, ref, rtol=1e-3, atol=1e-3), "mismatch vs reference"

    print("KERNEL_OK")
</pallas_src>

<mosaic_0001>
module attributes {stable_mosaic.version = 11 : i64} {
  func.func @lenet_fused_kernel(%arg0: i32, %arg1: memref<1x4x8x32xf32, #tpu.memory_space<vmem>>, %arg2: memref<5x32x256xf32, #tpu.memory_space<vmem>>, %arg3: memref<1x128xf32, #tpu.memory_space<vmem>>, %arg4: memref<5x128x256xf32, #tpu.memory_space<vmem>>, %arg5: memref<1x128xf32, #tpu.memory_space<vmem>>, %arg6: memref<5x128x128xf32, #tpu.memory_space<vmem>>, %arg7: memref<1x128xf32, #tpu.memory_space<vmem>>, %arg8: memref<128x128xf32, #tpu.memory_space<vmem>>, %arg9: memref<1x128xf32, #tpu.memory_space<vmem>>, %arg10: memref<128x128xf32, #tpu.memory_space<vmem>>, %arg11: memref<1x128xf32, #tpu.memory_space<vmem>>, %arg12: memref<1x1x10xf32, #tpu.memory_space<vmem>>) attributes {dimension_semantics = [#tpu.dimension_semantics<parallel>], iteration_bounds = array<i64: 2>, scalar_prefetch = 0 : i64, scratch_operands = 0 : i64, tpu.core_type = #tpu.core_type<tc>, window_params = [{transform_indices = @transform_0, window_bounds = array<i64: 1, 4, 8, 32>}, {pipeline_mode = #tpu.pipeline_mode<synchronous>, transform_indices = @transform_1, window_bounds = array<i64: 5, 32, 256>}, {pipeline_mode = #tpu.pipeline_mode<synchronous>, transform_indices = @transform_2, window_bounds = array<i64: 1, 128>}, {pipeline_mode = #tpu.pipeline_mode<synchronous>, transform_indices = @transform_3, window_bounds = array<i64: 5, 128, 256>}, {pipeline_mode = #tpu.pipeline_mode<synchronous>, transform_indices = @transform_4, window_bounds = array<i64: 1, 128>}, {pipeline_mode = #tpu.pipeline_mode<synchronous>, transform_indices = @transform_5, window_bounds = array<i64: 5, 128, 128>}, {pipeline_mode = #tpu.pipeline_mode<synchronous>, transform_indices = @transform_6, window_bounds = array<i64: 1, 128>}, {pipeline_mode = #tpu.pipeline_mode<synchronous>, transform_indices = @transform_7, window_bounds = array<i64: 128, 128>}, {pipeline_mode = #tpu.pipeline_mode<synchronous>, transform_indices = @transform_8, window_bounds = array<i64: 1, 128>}, {pipeline_mode = #tpu.pipeline_mode<synchronous>, transform_indices = @transform_9, window_bounds = array<i64: 128, 128>}, {pipeline_mode = #tpu.pipeline_mode<synchronous>, transform_indices = @transform_10, window_bounds = array<i64: 1, 128>}, {transform_indices = @transform_11, window_bounds = array<i64: 1, 1, 10>}]} {
    %cst = arith.constant 0.000000e+00 : f32
    %0 = vector.broadcast %cst : f32 to vector<7x256xf32>
    %c0 = arith.constant 0 : index
    %c0_0 = arith.constant 0 : index
    %c0_1 = arith.constant 0 : index
    %c0_2 = arith.constant 0 : index
    %1 = vector.load %arg1[%c0, %c0_0, %c0_1, %c0_2] : memref<1x4x8x32xf32, #tpu.memory_space<vmem>>, vector<1x1x7x32xf32>
    %2 = vector.shape_cast %1 : vector<1x1x7x32xf32> to vector<7x32xf32>
    %c0_3 = arith.constant 0 : index
    %c0_4 = arith.constant 0 : index
    %c0_5 = arith.constant 0 : index
    %3 = vector.load %arg2[%c0_3, %c0_4, %c0_5] : memref<5x32x256xf32, #tpu.memory_space<vmem>>, vector<1x32x256xf32>
    %4 = vector.shape_cast %3 : vector<1x32x256xf32> to vector<32x256xf32>
    %cst_6 = arith.constant dense<0.000000e+00> : vector<7x256xf32>
    %5 = tpu.matmul %2, %4, %cst_6 {dimension_numbers = #tpu.dot_dimension_numbers<[1], [0], [0], [1], [0, 0, 1, 1], [], []>} : vector<7x32xf32>, vector<32x256xf32>, vector<7x256xf32> -> vector<7x256xf32>
    %6 = arith.addf %0, %5 : vector<7x256xf32>
    %c0_7 = arith.constant 0 : index
    %c1 = arith.constant 1 : index
    %c0_8 = arith.constant 0 : index
    %c0_9 = arith.constant 0 : index
    %7 = vector.load %arg1[%c0_7, %c1, %c0_8, %c0_9] : memref<1x4x8x32xf32, #tpu.memory_space<vmem>>, vector<1x1x7x32xf32>
    %8 = vector.shape_cast %7 : vector<1x1x7x32xf32> to vector<7x32xf32>
    %c1_10 = arith.constant 1 : index
    %c0_11 = arith.constant 0 : index
    %c0_12 = arith.constant 0 : index
    %9 = vector.load %arg2[%c1_10, %c0_11, %c0_12] : memref<5x32x256xf32, #tpu.memory_space<vmem>>, vector<1x32x256xf32>
    %10 = vector.shape_cast %9 : vector<1x32x256xf32> to vector<32x256xf32>
    %cst_13 = arith.constant dense<0.000000e+00> : vector<7x256xf32>
    %11 = tpu.matmul %8, %10, %cst_13 {dimension_numbers = #tpu.dot_dimension_numbers<[1], [0], [0], [1], [0, 0, 1, 1], [], []>} : vector<7x32xf32>, vector<32x256xf32>, vector<7x256xf32> -> vector<7x256xf32>
    %12 = arith.addf %6, %11 : vector<7x256xf32>
    %c0_14 = arith.constant 0 : index
    %c2 = arith.constant 2 : index
    %c0_15 = arith.constant 0 : index
    %c0_16 = arith.constant 0 : index
    %13 = vector.load %arg1[%c0_14, %c2, %c0_15, %c0_16] : memref<1x4x8x32xf32, #tpu.memory_space<vmem>>, vector<1x1x7x32xf32>
    %14 = vector.shape_cast %13 : vector<1x1x7x32xf32> to vector<7x32xf32>
    %c2_17 = arith.constant 2 : index
    %c0_18 = arith.constant 0 : index
    %c0_19 = arith.constant 0 : index
    %15 = vector.load %arg2[%c2_17, %c0_18, %c0_19] : memref<5x32x256xf32, #tpu.memory_space<vmem>>, vector<1x32x256xf32>
    %16 = vector.shape_cast %15 : vector<1x32x256xf32> to vector<32x256xf32>
    %cst_20 = arith.constant dense<0.000000e+00> : vector<7x256xf32>
    %17 = tpu.matmul %14, %16, %cst_20 {dimension_numbers = #tpu.dot_dimension_numbers<[1], [0], [0], [1], [0, 0, 1, 1], [], []>} : vector<7x32xf32>, vector<32x256xf32>, vector<7x256xf32> -> vector<7x256xf32>
    %18 = arith.addf %12, %17 : vector<7x256xf32>
    %c0_21 = arith.constant 0 : index
    %c3 = arith.constant 3 : index
    %c0_22 = arith.constant 0 : index
    %c0_23 = arith.constant 0 : index
    %19 = vector.load %arg1[%c0_21, %c3, %c0_22, %c0_23] : memref<1x4x8x32xf32, #tpu.memory_space<vmem>>, vector<1x1x7x32xf32>
    %20 = vector.shape_cast %19 : vector<1x1x7x32xf32> to vector<7x32xf32>
    %c3_24 = arith.constant 3 : index
    %c0_25 = arith.constant 0 : index
    %c0_26 = arith.constant 0 : index
    %21 = vector.load %arg2[%c3_24, %c0_25, %c0_26] : memref<5x32x256xf32, #tpu.memory_space<vmem>>, vector<1x32x256xf32>
    %22 = vector.shape_cast %21 : vector<1x32x256xf32> to vector<32x256xf32>
    %cst_27 = arith.constant dense<0.000000e+00> : vector<7x256xf32>
    %23 = tpu.matmul %20, %22, %cst_27 {dimension_numbers = #tpu.dot_dimension_numbers<[1], [0], [0], [1], [0, 0, 1, 1], [], []>} : vector<7x32xf32>, vector<32x256xf32>, vector<7x256xf32> -> vector<7x256xf32>
    %24 = arith.addf %18, %23 : vector<7x256xf32>
    %c0_28 = arith.constant 0 : index
    %c0_29 = arith.constant 0 : index
    %c1_30 = arith.constant 1 : index
    %c0_31 = arith.constant 0 : index
    %25 = vector.load %arg1[%c0_28, %c0_29, %c1_30, %c0_31] : memref<1x4x8x32xf32, #tpu.memory_space<vmem>>, vector<1x1x7x32xf32>
    %26 = vector.shape_cast %25 : vector<1x1x7x32xf32> to vector<7x32xf32>
    %c4 = arith.constant 4 : index
    %c0_32 = arith.constant 0 : index
    %c0_33 = arith.constant 0 : index
    %27 = vector.load %arg2[%c4, %c0_32, %c0_33] : memref<5x32x256xf32, #tpu.memory_space<vmem>>, vector<1x32x256xf32>
    %28 = vector.shape_cast %27 : vector<1x32x256xf32> to vector<32x256xf32>
    %cst_34 = arith.constant dense<0.000000e+00> : vector<7x256xf32>
    %29 = tpu.matmul %26, %28, %cst_34 {dimension_numbers = #tpu.dot_dimension_numbers<[1], [0], [0], [1], [0, 0, 1, 1], [], []>} : vector<7x32xf32>, vector<32x256xf32>, vector<7x256xf32> -> vector<7x256xf32>
    %30 = arith.addf %24, %29 : vector<7x256xf32>
    %cst_35 = arith.constant 0.000000e+00 : f32
    %31 = vector.broadcast %cst_35 : f32 to vector<7x256xf32>
    %c0_36 = arith.constant 0 : index
    %c1_37 = arith.constant 1 : index
    %c0_38 = arith.constant 0 : index
    %c0_39 = arith.constant 0 : index
    %32 = vector.load %arg1[%c0_36, %c1_37, %c0_38, %c0_39] : memref<1x4x8x32xf32, #tpu.memory_space<vmem>>, vector<1x1x7x32xf32>
    %33 = vector.shape_cast %32 : vector<1x1x7x32xf32> to vector<7x32xf32>
    %c0_40 = arith.constant 0 : index
    %c0_41 = arith.constant 0 : index
    %c0_42 = arith.constant 0 : index
    %34 = vector.load %arg2[%c0_40, %c0_41, %c0_42] : memref<5x32x256xf32, #tpu.memory_space<vmem>>, vector<1x32x256xf32>
    %35 = vector.shape_cast %34 : vector<1x32x256xf32> to vector<32x256xf32>
    %cst_43 = arith.constant dense<0.000000e+00> : vector<7x256xf32>
    %36 = tpu.matmul %33, %35, %cst_43 {dimension_numbers = #tpu.dot_dimension_numbers<[1], [0], [0], [1], [0, 0, 1, 1], [], []>} : vector<7x32xf32>, vector<32x256xf32>, vector<7x256xf32> -> vector<7x256xf32>
    %37 = arith.addf %31, %36 : vector<7x256xf32>
    %c0_44 = arith.constant 0 : index
    %c2_45 = arith.constant 2 : index
    %c0_46 = arith.constant 0 : index
    %c0_47 = arith.constant 0 : index
    %38 = vector.load %arg1[%c0_44, %c2_45, %c0_46, %c0_47] : memref<1x4x8x32xf32, #tpu.memory_space<vmem>>, vector<1x1x7x32xf32>
    %39 = vector.shape_cast %38 : vector<1x1x7x32xf32> to vector<7x32xf32>
    %c1_48 = arith.constant 1 : index
    %c0_49 = arith.constant 0 : index
    %c0_50 = arith.constant 0 : index
    %40 = vector.load %arg2[%c1_48, %c0_49, %c0_50] : memref<5x32x256xf32, #tpu.memory_space<vmem>>, vector<1x32x256xf32>
    %41 = vector.shape_cast %40 : vector<1x32x256xf32> to vector<32x256xf32>
    %cst_51 = arith.constant dense<0.000000e+00> : vector<7x256xf32>
    %42 = tpu.matmul %39, %41, %cst_51 {dimension_numbers = #tpu.dot_dimension_numbers<[1], [0], [0], [1], [0, 0, 1, 1], [], []>} : vector<7x32xf32>, vector<32x256xf32>, vector<7x256xf32> -> vector<7x256xf32>
    %43 = arith.addf %37, %42 : vector<7x256xf32>
    %c0_52 = arith.constant 0 : index
    %c3_53 = arith.constant 3 : index
    %c0_54 = arith.constant 0 : index
    %c0_55 = arith.constant 0 : index
    %44 = vector.load %arg1[%c0_52, %c3_53, %c0_54, %c0_55] : memref<1x4x8x32xf32, #tpu.memory_space<vmem>>, vector<1x1x7x32xf32>
    %45 = vector.shape_cast %44 : vector<1x1x7x32xf32> to vector<7x32xf32>
    %c2_56 = arith.constant 2 : index
    %c0_57 = arith.constant 0 : index
    %c0_58 = arith.constant 0 : index
    %46 = vector.load %arg2[%c2_56, %c0_57, %c0_58] : memref<5x32x256xf32, #tpu.memory_space<vmem>>, vector<1x32x256xf32>
    %47 = vector.shape_cast %46 : vector<1x32x256xf32> to vector<32x256xf32>
    %cst_59 = arith.constant dense<0.000000e+00> : vector<7x256xf32>
    %48 = tpu.matmul %45, %47, %cst_59 {dimension_numbers = #tpu.dot_dimension_numbers<[1], [0], [0], [1], [0, 0, 1, 1], [], []>} : vector<7x32xf32>, vector<32x256xf32>, vector<7x256xf32> -> vector<7x256xf32>
    %49 = arith.addf %43, %48 : vector<7x256xf32>
    %c0_60 = arith.constant 0 : index
    %c0_61 = arith.constant 0 : index
    %c1_62 = arith.constant 1 : index
    %c0_63 = arith.constant 0 : index
    %50 = vector.load %arg1[%c0_60, %c0_61, %c1_62, %c0_63] : memref<1x4x8x32xf32, #tpu.memory_space<vmem>>, vector<1x1x7x32xf32>
    %51 = vector.shape_cast %50 : vector<1x1x7x32xf32> to vector<7x32xf32>
    %c3_64 = arith.constant 3 : index
    %c0_65 = arith.constant 0 : index
    %c0_66 = arith.constant 0 : index
    %52 = vector.load %arg2[%c3_64, %c0_65, %c0_66] : memref<5x32x256xf32, #tpu.memory_space<vmem>>, vector<1x32x256xf32>
    %53 = vector.shape_cast %52 : vector<1x32x256xf32> to vector<32x256xf32>
    %cst_67 = arith.constant dense<0.000000e+00> : vector<7x256xf32>
    %54 = tpu.matmul %51, %53, %cst_67 {dimension_numbers = #tpu.dot_dimension_numbers<[1], [0], [0], [1], [0, 0, 1, 1], [], []>} : vector<7x32xf32>, vector<32x256xf32>, vector<7x256xf32> -> vector<7x256xf32>
    %55 = arith.addf %49, %54 : vector<7x256xf32>
    %c0_68 = arith.constant 0 : index
    %c1_69 = arith.constant 1 : index
    %c1_70 = arith.constant 1 : index
    %c0_71 = arith.constant 0 : index
    %56 = vector.load %arg1[%c0_68, %c1_69, %c1_70, %c0_71] : memref<1x4x8x32xf32, #tpu.memory_space<vmem>>, vector<1x1x7x32xf32>
    %57 = vector.shape_cast %56 : vector<1x1x7x32xf32> to vector<7x32xf32>
    %c4_72 = arith.constant 4 : index
    %c0_73 = arith.constant 0 : index
    %c0_74 = arith.constant 0 : index
    %58 = vector.load %arg2[%c4_72, %c0_73, %c0_74] : memref<5x32x256xf32, #tpu.memory_space<vmem>>, vector<1x32x256xf32>
    %59 = vector.shape_cast %58 : vector<1x32x256xf32> to vector<32x256xf32>
    %cst_75 = arith.constant dense<0.000000e+00> : vector<7x256xf32>
    %60 = tpu.matmul %57, %59, %cst_75 {dimension_numbers = #tpu.dot_dimension_numbers<[1], [0], [0], [1], [0, 0, 1, 1], [], []>} : vector<7x32xf32>, vector<32x256xf32>, vector<7x256xf32> -> vector<7x256xf32>
    %61 = arith.addf %55, %60 : vector<7x256xf32>
    %cst_76 = arith.constant 0.000000e+00 : f32
    %62 = vector.broadcast %cst_76 : f32 to vector<7x256xf32>
    %c0_77 = arith.constant 0 : index
    %c2_78 = arith.constant 2 : index
    %c0_79 = arith.constant 0 : index
    %c0_80 = arith.constant 0 : index
    %63 = vector.load %arg1[%c0_77, %c2_78, %c0_79, %c0_80] : memref<1x4x8x32xf32, #tpu.memory_space<vmem>>, vector<1x1x7x32xf32>
    %64 = vector.shape_cast %63 : vector<1x1x7x32xf32> to vector<7x32xf32>
    %c0_81 = arith.constant 0 : index
    %c0_82 = arith.constant 0 : index
    %c0_83 = arith.constant 0 : index
    %65 = vector.load %arg2[%c0_81, %c0_82, %c0_83] : memref<5x32x256xf32, #tpu.memory_space<vmem>>, vector<1x32x256xf32>
    %66 = vector.shape_cast %65 : vector<1x32x256xf32> to vector<32x256xf32>
    %cst_84 = arith.constant dense<0.000000e+00> : vector<7x256xf32>
    %67 = tpu.matmul %64, %66, %cst_84 {dimension_numbers = #tpu.dot_dimension_numbers<[1], [0], [0], [1], [0, 0, 1, 1], [], []>} : vector<7x32xf32>, vector<32x256xf32>, vector<7x256xf32> -> vector<7x256xf32>
    %68 = arith.addf %62, %67 : vector<7x256xf32>
    %c0_85 = arith.constant 0 : index
    %c3_86 = arith.constant 3 : index
    %c0_87 = arith.constant 0 : index
    %c0_88 = arith.constant 0 : index
    %69 = vector.load %arg1[%c0_85, %c3_86, %c0_87, %c0_88] : memref<1x4x8x32xf32, #tpu.memory_space<vmem>>, vector<1x1x7x32xf32>
    %70 = vector.shape_cast %69 : vector<1x1x7x32xf32> to vector<7x32xf32>
    %c1_89 = arith.constant 1 : index
    %c0_90 = arith.constant 0 : index
    %c0_91 = arith.constant 0 : index
    %71 = vector.load %arg2[%c1_89, %c0_90, %c0_91] : memref<5x32x256xf32, #tpu.memory_space<vmem>>, vector<1x32x256xf32>
    %72 = vector.shape_cast %71 : vector<1x32x256xf32> to vector<32x256xf32>
    %cst_92 = arith.constant dense<0.000000e+00> : vector<7x256xf32>
    %73 = tpu.matmul %70, %72, %cst_92 {dimension_numbers = #tpu.dot_dimension_numbers<[1], [0], [0], [1], [0, 0, 1, 1], [], []>} : vector<7x32xf32>, vector<32x256xf32>, vector<7x256xf32> -> vector<7x256xf32>
    %74 = arith.addf %68, %73 : vector<7x256xf32>
    %c0_93 = arith.constant 0 : index
    %c0_94 = arith.constant 0 : index
    %c1_95 = arith.constant 1 : index
    %c0_96 = arith.constant 0 : index
    %75 = vector.load %arg1[%c0_93, %c0_94, %c1_95, %c0_96] : memref<1x4x8x32xf32, #tpu.memory_space<vmem>>, vector<1x1x7x32xf32>
    %76 = vector.shape_cast %75 : vector<1x1x7x32xf32> to vector<7x32xf32>
    %c2_97 = arith.constant 2 : index
    %c0_98 = arith.constant 0 : index
    %c0_99 = arith.constant 0 : index
    %77 = vector.load %arg2[%c2_97, %c0_98, %c0_99] : memref<5x32x256xf32, #tpu.memory_space<vmem>>, vector<1x32x256xf32>
    %78 = vector.shape_cast %77 : vector<1x32x256xf32> to vector<32x256xf32>
    %cst_100 = arith.constant dense<0.000000e+00> : vector<7x256xf32>
    %79 = tpu.matmul %76, %78, %cst_100 {dimension_numbers = #tpu.dot_dimension_numbers<[1], [0], [0], [1], [0, 0, 1, 1], [], []>} : vector<7x32xf32>, vector<32x256xf32>, vector<7x256xf32> -> vector<7x256xf32>
    %80 = arith.addf %74, %79 : vector<7x256xf32>
    %c0_101 = arith.constant 0 : index
    %c1_102 = arith.constant 1 : index
    %c1_103 = arith.constant 1 : index
    %c0_104 = arith.constant 0 : index
    %81 = vector.load %arg1[%c0_101, %c1_102, %c1_103, %c0_104] : memref<1x4x8x32xf32, #tpu.memory_space<vmem>>, vector<1x1x7x32xf32>
    %82 = vector.shape_cast %81 : vector<1x1x7x32xf32> to vector<7x32xf32>
    %c3_105 = arith.constant 3 : index
    %c0_106 = arith.constant 0 : index
    %c0_107 = arith.constant 0 : index
    %83 = vector.load %arg2[%c3_105, %c0_106, %c0_107] : memref<5x32x256xf32, #tpu.memory_space<vmem>>, vector<1x32x256xf32>
    %84 = vector.shape_cast %83 : vector<1x32x256xf32> to vector<32x256xf32>
    %cst_108 = arith.constant dense<0.000000e+00> : vector<7x256xf32>
    %85 = tpu.matmul %82, %84, %cst_108 {dimension_numbers = #tpu.dot_dimension_numbers<[1], [0], [0], [1], [0, 0, 1, 1], [], []>} : vector<7x32xf32>, vector<32x256xf32>, vector<7x256xf32> -> vector<7x256xf32>
    %86 = arith.addf %80, %85 : vector<7x256xf32>
    %c0_109 = arith.constant 0 : index
    %c2_110 = arith.constant 2 : index
    %c1_111 = arith.constant 1 : index
    %c0_112 = arith.constant 0 : index
    %87 = vector.load %arg1[%c0_109, %c2_110, %c1_111, %c0_112] : memref<1x4x8x32xf32, #tpu.memory_space<vmem>>, vector<1x1x7x32xf32>
    %88 = vector.shape_cast %87 : vector<1x1x7x32xf32> to vector<7x32xf32>
    %c4_113 = arith.constant 4 : index
    %c0_114 = arith.constant 0 : index
    %c0_115 = arith.constant 0 : index
    %89 = vector.load %arg2[%c4_113, %c0_114, %c0_115] : memref<5x32x256xf32, #tpu.memory_space<vmem>>, vector<1x32x256xf32>
    %90 = vector.shape_cast %89 : vector<1x32x256xf32> to vector<32x256xf32>
    %cst_116 = arith.constant dense<0.000000e+00> : vector<7x256xf32>
    %91 = tpu.matmul %88, %90, %cst_116 {dimension_numbers = #tpu.dot_dimension_numbers<[1], [0], [0], [1], [0, 0, 1, 1], [], []>} : vector<7x32xf32>, vector<32x256xf32>, vector<7x256xf32> -> vector<7x256xf32>
    %92 = arith.addf %86, %91 : vector<7x256xf32>
    %cst_117 = arith.constant 0.000000e+00 : f32
    %93 = vector.broadcast %cst_117 : f32 to vector<7x256xf32>
    %c0_118 = arith.constant 0 : index
    %c3_119 = arith.constant 3 : index
    %c0_120 = arith.constant 0 : index
    %c0_121 = arith.constant 0 : index
    %94 = vector.load %arg1[%c0_118, %c3_119, %c0_120, %c0_121] : memref<1x4x8x32xf32, #tpu.memory_space<vmem>>, vector<1x1x7x32xf32>
    %95 = vector.shape_cast %94 : vector<1x1x7x32xf32> to vector<7x32xf32>
    %c0_122 = arith.constant 0 : index
    %c0_123 = arith.constant 0 : index
    %c0_124 = arith.constant 0 : index
    %96 = vector.load %arg2[%c0_122, %c0_123, %c0_124] : memref<5x32x256xf32, #tpu.memory_space<vmem>>, vector<1x32x256xf32>
    %97 = vector.shape_cast %96 : vector<1x32x256xf32> to vector<32x256xf32>
    %cst_125 = arith.constant dense<0.000000e+00> : vector<7x256xf32>
    %98 = tpu.matmul %95, %97, %cst_125 {dimension_numbers = #tpu.dot_dimension_numbers<[1], [0], [0], [1], [0, 0, 1, 1], [], []>} : vector<7x32xf32>, vector<32x256xf32>, vector<7x256xf32> -> vector<7x256xf32>
    %99 = arith.addf %93, %98 : vector<7x256xf32>
    %c0_126 = arith.constant 0 : index
    %c0_127 = arith.constant 0 : index
    %c1_128 = arith.constant 1 : index
    %c0_129 = arith.constant 0 : index
    %100 = vector.load %arg1[%c0_126, %c0_127, %c1_128, %c0_129] : memref<1x4x8x32xf32, #tpu.memory_space<vmem>>, vector<1x1x7x32xf32>
    %101 = vector.shape_cast %100 : vector<1x1x7x32xf32> to vector<7x32xf32>
    %c1_130 = arith.constant 1 : index
    %c0_131 = arith.constant 0 : index
    %c0_132 = arith.constant 0 : index
    %102 = vector.load %arg2[%c1_130, %c0_131, %c0_132] : memref<5x32x256xf32, #tpu.memory_space<vmem>>, vector<1x32x256xf32>
    %103 = vector.shape_cast %102 : vector<1x32x256xf32> to vector<32x256xf32>
    %cst_133 = arith.constant dense<0.000000e+00> : vector<7x256xf32>
    %104 = tpu.matmul %101, %103, %cst_133 {dimension_numbers = #tpu.dot_dimension_numbers<[1], [0], [0], [1], [0, 0, 1, 1], [], []>} : vector<7x32xf32>, vector<32x256xf32>, vector<7x256xf32> -> vector<7x256xf32>
    %105 = arith.addf %99, %104 : vector<7x256xf32>
    %c0_134 = arith.constant 0 : index
    %c1_135 = arith.constant 1 : index
    %c1_136 = arith.constant 1 : index
    %c0_137 = arith.constant 0 : index
    %106 = vector.load %arg1[%c0_134, %c1_135, %c1_136, %c0_137] : memref<1x4x8x32xf32, #tpu.memory_space<vmem>>, vector<1x1x7x32xf32>
    %107 = vector.shape_cast %106 : vector<1x1x7x32xf32> to vector<7x32xf32>
    %c2_138 = arith.constant 2 : index
    %c0_139 = arith.constant 0 : index
    %c0_140 = arith.constant 0 : index
    %108 = vector.load %arg2[%c2_138, %c0_139, %c0_140] : memref<5x32x256xf32, #tpu.memory_space<vmem>>, vector<1x32x256xf32>
    %109 = vector.shape_cast %108 : vector<1x32x256xf32> to vector<32x256xf32>
    %cst_141 = arith.constant dense<0.000000e+00> : vector<7x256xf32>
    %110 = tpu.matmul %107, %109, %cst_141 {dimension_numbers = #tpu.dot_dimension_numbers<[1], [0], [0], [1], [0, 0, 1, 1], [], []>} : vector<7x32xf32>, vector<32x256xf32>, vector<7x256xf32> -> vector<7x256xf32>
    %111 = arith.addf %105, %110 : vector<7x256xf32>
    %c0_142 = arith.constant 0 : index
    %c2_143 = arith.constant 2 : index
    %c1_144 = arith.constant 1 : index
    %c0_145 = arith.constant 0 : index
    %112 = vector.load %arg1[%c0_142, %c2_143, %c1_144, %c0_145] : memref<1x4x8x32xf32, #tpu.memory_space<vmem>>, vector<1x1x7x32xf32>
    %113 = vector.shape_cast %112 : vector<1x1x7x32xf32> to vector<7x32xf32>
    %c3_146 = arith.constant 3 : index
    %c0_147 = arith.constant 0 : index
    %c0_148 = arith.constant 0 : index
    %114 = vector.load %arg2[%c3_146, %c0_147, %c0_148] : memref<5x32x256xf32, #tpu.memory_space<vmem>>, vector<1x32x256xf32>
    %115 = vector.shape_cast %114 : vector<1x32x256xf32> to vector<32x256xf32>
    %cst_149 = arith.constant dense<0.000000e+00> : vector<7x256xf32>
    %116 = tpu.matmul %113, %115, %cst_149 {dimension_numbers = #tpu.dot_dimension_numbers<[1], [0], [0], [1], [0, 0, 1, 1], [], []>} : vector<7x32xf32>, vector<32x256xf32>, vector<7x256xf32> -> vector<7x256xf32>
    %117 = arith.addf %111, %116 : vector<7x256xf32>
    %c0_150 = arith.constant 0 : index
    %c3_151 = arith.constant 3 : index
    %c1_152 = arith.constant 1 : index
    %c0_153 = arith.constant 0 : index
    %118 = vector.load %arg1[%c0_150, %c3_151, %c1_152, %c0_153] : memref<1x4x8x32xf32, #tpu.memory_space<vmem>>, vector<1x1x7x32xf32>
    %119 = vector.shape_cast %118 : vector<1x1x7x32xf32> to vector<7x32xf32>
    %c4_154 = arith.constant 4 : index
    %c0_155 = arith.constant 0 : index
    %c0_156 = arith.constant 0 : index
    %120 = vector.load %arg2[%c4_154, %c0_155, %c0_156] : memref<5x32x256xf32, #tpu.memory_space<vmem>>, vector<1x32x256xf32>
    %121 = vector.shape_cast %120 : vector<1x32x256xf32> to vector<32x256xf32>
    %cst_157 = arith.constant dense<0.000000e+00> : vector<7x256xf32>
    %122 = tpu.matmul %119, %121, %cst_157 {dimension_numbers = #tpu.dot_dimension_numbers<[1], [0], [0], [1], [0, 0, 1, 1], [], []>} : vector<7x32xf32>, vector<32x256xf32>, vector<7x256xf32> -> vector<7x256xf32>
    %123 = arith.addf %117, %122 : vector<7x256xf32>
    %124 = arith.maximumf %30, %61 : vector<7x256xf32>
    %125 = arith.maximumf %92, %123 : vector<7x256xf32>
    %126 = vector.extract_strided_slice %124 {offsets = [0, 0], sizes = [7, 128], strides = [1, 1]} : vector<7x256xf32> to vector<7x128xf32>
    %127 = vector.extract_strided_slice %124 {offsets = [0, 128], sizes = [7, 128], strides = [1, 1]} : vector<7x256xf32> to vector<7x128xf32>
    %128 = arith.maximumf %126, %127 : vector<7x128xf32>
    %c0_158 = arith.constant 0 : index
    %c0_159 = arith.constant 0 : index
    %129 = vector.load %arg3[%c0_158, %c0_159] : memref<1x128xf32, #tpu.memory_space<vmem>>, vector<1x128xf32>
    %130 = vector.broadcast %129 : vector<1x128xf32> to vector<7x128xf32>
    %131 = arith.addf %128, %130 : vector<7x128xf32>
    %cst_160 = arith.constant 0.000000e+00 : f32
    %132 = vector.broadcast %cst_160 : f32 to vector<7x128xf32>
    %133 = arith.maximumf %131, %132 : vector<7x128xf32>
    %134 = vector.extract_strided_slice %125 {offsets = [0, 0], sizes = [7, 128], strides = [1, 1]} : vector<7x256xf32> to vector<7x128xf32>
    %135 = vector.extract_strided_slice %125 {offsets = [0, 128], sizes = [7, 128], strides = [1, 1]} : vector<7x256xf32> to vector<7x128xf32>
    %136 = arith.maximumf %134, %135 : vector<7x128xf32>
    %c0_161 = arith.constant 0 : index
    %c0_162 = arith.constant 0 : index
    %137 = vector.load %arg3[%c0_161, %c0_162] : memref<1x128xf32, #tpu.memory_space<vmem>>, vector<1x128xf32>
    %138 = vector.broadcast %137 : vector<1x128xf32> to vector<7x128xf32>
    %139 = arith.addf %136, %138 : vector<7x128xf32>
    %cst_163 = arith.constant 0.000000e+00 : f32
    %140 = vector.broadcast %cst_163 : f32 to vector<7x128xf32>
    %141 = arith.maximumf %139, %140 : vector<7x128xf32>
    %142 = vector.extract_strided_slice %133 {offsets = [0, 0], sizes = [5, 128], strides = [1, 1]} : vector<7x128xf32> to vector<5x128xf32>
    %143 = vector.extract_strided_slice %141 {offsets = [0, 0], sizes = [5, 128], strides = [1, 1]} : vector<7x128xf32> to vector<5x128xf32>
    %144 = vector.extract_strided_slice %133 {offsets = [1, 0], sizes = [5, 128], strides = [1, 1]} : vector<7x128xf32> to vector<5x128xf32>
    %145 = vector.extract_strided_slice %141 {offsets = [1, 0], sizes = [5, 128], strides = [1, 1]} : vector<7x128xf32> to vector<5x128xf32>
    %146 = vector.extract_strided_slice %133 {offsets = [2, 0], sizes = [5, 128], strides = [1, 1]} : vector<7x128xf32> to vector<5x128xf32>
    %cst_164 = arith.constant 0.000000e+00 : f32
    %147 = vector.broadcast %cst_164 : f32 to vector<5x256xf32>
    %c0_165 = arith.constant 0 : index
    %c0_166 = arith.constant 0 : index
    %c0_167 = arith.constant 0 : index
    %148 = vector.load %arg4[%c0_165, %c0_166, %c0_167] : memref<5x128x256xf32, #tpu.memory_space<vmem>>, vector<1x128x256xf32>
    %149 = vector.shape_cast %148 : vector<1x128x256xf32> to vector<128x256xf32>
    %cst_168 = arith.constant dense<0.000000e+00> : vector<5x256xf32>
    %150 = tpu.matmul %142, %149, %cst_168 {dimension_numbers = #tpu.dot_dimension_numbers<[1], [0], [0], [1], [0, 0, 1, 1], [], []>} : vector<5x128xf32>, vector<128x256xf32>, vector<5x256xf32> -> vector<5x256xf32>
    %151 = arith.addf %147, %150 : vector<5x256xf32>
    %c1_169 = arith.constant 1 : index
    %c0_170 = arith.constant 0 : index
    %c0_171 = arith.constant 0 : index
    %152 = vector.load %arg4[%c1_169, %c0_170, %c0_171] : memref<5x128x256xf32, #tpu.memory_space<vmem>>, vector<1x128x256xf32>
    %153 = vector.shape_cast %152 : vector<1x128x256xf32> to vector<128x256xf32>
    %cst_172 = arith.constant dense<0.000000e+00> : vector<5x256xf32>
    %154 = tpu.matmul %143, %153, %cst_172 {dimension_numbers = #tpu.dot_dimension_numbers<[1], [0], [0], [1], [0, 0, 1, 1], [], []>} : vector<5x128xf32>, vector<128x256xf32>, vector<5x256xf32> -> vector<5x256xf32>
    %155 = arith.addf %151, %154 : vector<5x256xf32>
    %c2_173 = arith.constant 2 : index
    %c0_174 = arith.constant 0 : index
    %c0_175 = arith.constant 0 : index
    %156 = vector.load %arg4[%c2_173, %c0_174, %c0_175] : memref<5x128x256xf32, #tpu.memory_space<vmem>>, vector<1x128x256xf32>
    %157 = vector.shape_cast %156 : vector<1x128x256xf32> to vector<128x256xf32>
    %cst_176 = arith.constant dense<0.000000e+00> : vector<5x256xf32>
    %158 = tpu.matmul %144, %157, %cst_176 {dimension_numbers = #tpu.dot_dimension_numbers<[1], [0], [0], [1], [0, 0, 1, 1], [], []>} : vector<5x128xf32>, vector<128x256xf32>, vector<5x256xf32> -> vector<5x256xf32>
    %159 = arith.addf %155, %158 : vector<5x256xf32>
    %c3_177 = arith.constant 3 : index
    %c0_178 = arith.constant 0 : index
    %c0_179 = arith.constant 0 : index
    %160 = vector.load %arg4[%c3_177, %c0_178, %c0_179] : memref<5x128x256xf32, #tpu.memory_space<vmem>>, vector<1x128x256xf32>
    %161 = vector.shape_cast %160 : vector<1x128x256xf32> to vector<128x256xf32>
    %cst_180 = arith.constant dense<0.000000e+00> : vector<5x256xf32>
    %162 = tpu.matmul %145, %161, %cst_180 {dimension_numbers = #tpu.dot_dimension_numbers<[1], [0], [0], [1], [0, 0, 1, 1], [], []>} : vector<5x128xf32>, vector<128x256xf32>, vector<5x256xf32> -> vector<5x256xf32>
    %163 = arith.addf %159, %162 : vector<5x256xf32>
    %c4_181 = arith.constant 4 : index
    %c0_182 = arith.constant 0 : index
    %c0_183 = arith.constant 0 : index
    %164 = vector.load %arg4[%c4_181, %c0_182, %c0_183] : memref<5x128x256xf32, #tpu.memory_space<vmem>>, vector<1x128x256xf32>
    %165 = vector.shape_cast %164 : vector<1x128x256xf32> to vector<128x256xf32>
    %cst_184 = arith.constant dense<0.000000e+00> : vector<5x256xf32>
    %166 = tpu.matmul %146, %165, %cst_184 {dimension_numbers = #tpu.dot_dimension_numbers<[1], [0], [0], [1], [0, 0, 1, 1], [], []>} : vector<5x128xf32>, vector<128x256xf32>, vector<5x256xf32> -> vector<5x256xf32>
    %167 = arith.addf %163, %166 : vector<5x256xf32>
    %168 = vector.extract_strided_slice %141 {offsets = [0, 0], sizes = [5, 128], strides = [1, 1]} : vector<7x128xf32> to vector<5x128xf32>
    %169 = vector.extract_strided_slice %133 {offsets = [1, 0], sizes = [5, 128], strides = [1, 1]} : vector<7x128xf32> to vector<5x128xf32>
    %170 = vector.extract_strided_slice %141 {offsets = [1, 0], sizes = [5, 128], strides = [1, 1]} : vector<7x128xf32> to vector<5x128xf32>
    %171 = vector.extract_strided_slice %133 {offsets = [2, 0], sizes = [5, 128], strides = [1, 1]} : vector<7x128xf32> to vector<5x128xf32>
    %172 = vector.extract_strided_slice %141 {offsets = [2, 0], sizes = [5, 128], strides = [1, 1]} : vector<7x128xf32> to vector<5x128xf32>
    %cst_185 = arith.constant 0.000000e+00 : f32
    %173 = vector.broadcast %cst_185 : f32 to vector<5x256xf32>
    %c0_186 = arith.constant 0 : index
    %c0_187 = arith.constant 0 : index
    %c0_188 = arith.constant 0 : index
    %174 = vector.load %arg4[%c0_186, %c0_187, %c0_188] : memref<5x128x256xf32, #tpu.memory_space<vmem>>, vector<1x128x256xf32>
    %175 = vector.shape_cast %174 : vector<1x128x256xf32> to vector<128x256xf32>
    %cst_189 = arith.constant dense<0.000000e+00> : vector<5x256xf32>
    %176 = tpu.matmul %168, %175, %cst_189 {dimension_numbers = #tpu.dot_dimension_numbers<[1], [0], [0], [1], [0, 0, 1, 1], [], []>} : vector<5x128xf32>, vector<128x256xf32>, vector<5x256xf32> -> vector<5x256xf32>
    %177 = arith.addf %173, %176 : vector<5x256xf32>
    %c1_190 = arith.constant 1 : index
    %c0_191 = arith.constant 0 : index
    %c0_192 = arith.constant 0 : index
    %178 = vector.load %arg4[%c1_190, %c0_191, %c0_192] : memref<5x128x256xf32, #tpu.memory_space<vmem>>, vector<1x128x256xf32>
    %179 = vector.shape_cast %178 : vector<1x128x256xf32> to vector<128x256xf32>
    %cst_193 = arith.constant dense<0.000000e+00> : vector<5x256xf32>
    %180 = tpu.matmul %169, %179, %cst_193 {dimension_numbers = #tpu.dot_dimension_numbers<[1], [0], [0], [1], [0, 0, 1, 1], [], []>} : vector<5x128xf32>, vector<128x256xf32>, vector<5x256xf32> -> vector<5x256xf32>
    %181 = arith.addf %177, %180 : vector<5x256xf32>
    %c2_194 = arith.constant 2 : index
    %c0_195 = arith.constant 0 : index
    %c0_196 = arith.constant 0 : index
    %182 = vector.load %arg4[%c2_194, %c0_195, %c0_196] : memref<5x128x256xf32, #tpu.memory_space<vmem>>, vector<1x128x256xf32>
    %183 = vector.shape_cast %182 : vector<1x128x256xf32> to vector<128x256xf32>
    %cst_197 = arith.constant dense<0.000000e+00> : vector<5x256xf32>
    %184 = tpu.matmul %170, %183, %cst_197 {dimension_numbers = #tpu.dot_dimension_numbers<[1], [0], [0], [1], [0, 0, 1, 1], [], []>} : vector<5x128xf32>, vector<128x256xf32>, vector<5x256xf32> -> vector<5x256xf32>
    %185 = arith.addf %181, %184 : vector<5x256xf32>
    %c3_198 = arith.constant 3 : index
    %c0_199 = arith.constant 0 : index
    %c0_200 = arith.constant 0 : index
    %186 = vector.load %arg4[%c3_198, %c0_199, %c0_200] : memref<5x128x256xf32, #tpu.memory_space<vmem>>, vector<1x128x256xf32>
    %187 = vector.shape_cast %186 : vector<1x128x256xf32> to vector<128x256xf32>
    %cst_201 = arith.constant dense<0.000000e+00> : vector<5x256xf32>
    %188 = tpu.matmul %171, %187, %cst_201 {dimension_numbers = #tpu.dot_dimension_numbers<[1], [0], [0], [1], [0, 0, 1, 1], [], []>} : vector<5x128xf32>, vector<128x256xf32>, vector<5x256xf32> -> vector<5x256xf32>
    %189 = arith.addf %185, %188 : vector<5x256xf32>
    %c4_202 = arith.constant 4 : index
    %c0_203 = arith.constant 0 : index
    %c0_204 = arith.constant 0 : index
    %190 = vector.load %arg4[%c4_202, %c0_203, %c0_204] : memref<5x128x256xf32, #tpu.memory_space<vmem>>, vector<1x128x256xf32>
    %191 = vector.shape_cast %190 : vector<1x128x256xf32> to vector<128x256xf32>
    %cst_205 = arith.constant dense<0.000000e+00> : vector<5x256xf32>
    %192 = tpu.matmul %172, %191, %cst_205 {dimension_numbers = #tpu.dot_dimension_numbers<[1], [0], [0], [1], [0, 0, 1, 1], [], []>} : vector<5x128xf32>, vector<128x256xf32>, vector<5x256xf32> -> vector<5x256xf32>
    %193 = arith.addf %189, %192 : vector<5x256xf32>
    %194 = arith.maximumf %167, %193 : vector<5x256xf32>
    %195 = vector.extract_strided_slice %194 {offsets = [0, 0], sizes = [5, 128], strides = [1, 1]} : vector<5x256xf32> to vector<5x128xf32>
    %196 = vector.extract_strided_slice %194 {offsets = [0, 128], sizes = [5, 128], strides = [1, 1]} : vector<5x256xf32> to vector<5x128xf32>
    %197 = arith.maximumf %195, %196 : vector<5x128xf32>
    %c0_206 = arith.constant 0 : index
    %c0_207 = arith.constant 0 : index
    %198 = vector.load %arg5[%c0_206, %c0_207] : memref<1x128xf32, #tpu.memory_space<vmem>>, vector<1x128xf32>
    %199 = vector.broadcast %198 : vector<1x128xf32> to vector<5x128xf32>
    %200 = arith.addf %197, %199 : vector<5x128xf32>
    %cst_208 = arith.constant 0.000000e+00 : f32
    %201 = vector.broadcast %cst_208 : f32 to vector<5x128xf32>
    %202 = arith.maximumf %200, %201 : vector<5x128xf32>
    %c0_209 = arith.constant 0 : index
    %c0_210 = arith.constant 0 : index
    %203 = vector.load %arg7[%c0_209, %c0_210] : memref<1x128xf32, #tpu.memory_space<vmem>>, vector<1x128xf32>
    %204 = vector.extract_strided_slice %202 {offsets = [0, 0], sizes = [1, 128], strides = [1, 1]} : vector<5x128xf32> to vector<1x128xf32>
    %c0_211 = arith.constant 0 : index
    %c0_212 = arith.constant 0 : index
    %c0_213 = arith.constant 0 : index
    %205 = vector.load %arg6[%c0_211, %c0_212, %c0_213] : memref<5x128x128xf32, #tpu.memory_space<vmem>>, vector<1x128x128xf32>
    %206 = vector.shape_cast %205 : vector<1x128x128xf32> to vector<128x128xf32>
    %cst_214 = arith.constant dense<0.000000e+00> : vector<1x128xf32>
    %207 = tpu.matmul %204, %206, %cst_214 {dimension_numbers = #tpu.dot_dimension_numbers<[1], [0], [0], [1], [0, 0, 1, 1], [], []>} : vector<1x128xf32>, vector<128x128xf32>, vector<1x128xf32> -> vector<1x128xf32>
    %208 = arith.addf %203, %207 : vector<1x128xf32>
    %209 = vector.extract_strided_slice %202 {offsets = [1, 0], sizes = [1, 128], strides = [1, 1]} : vector<5x128xf32> to vector<1x128xf32>
    %c1_215 = arith.constant 1 : index
    %c0_216 = arith.constant 0 : index
    %c0_217 = arith.constant 0 : index
    %210 = vector.load %arg6[%c1_215, %c0_216, %c0_217] : memref<5x128x128xf32, #tpu.memory_space<vmem>>, vector<1x128x128xf32>
    %211 = vector.shape_cast %210 : vector<1x128x128xf32> to vector<128x128xf32>
    %cst_218 = arith.constant dense<0.000000e+00> : vector<1x128xf32>
    %212 = tpu.matmul %209, %211, %cst_218 {dimension_numbers = #tpu.dot_dimension_numbers<[1], [0], [0], [1], [0, 0, 1, 1], [], []>} : vector<1x128xf32>, vector<128x128xf32>, vector<1x128xf32> -> vector<1x128xf32>
    %213 = arith.addf %208, %212 : vector<1x128xf32>
    %214 = vector.extract_strided_slice %202 {offsets = [2, 0], sizes = [1, 128], strides = [1, 1]} : vector<5x128xf32> to vector<1x128xf32>
    %c2_219 = arith.constant 2 : index
    %c0_220 = arith.constant 0 : index
    %c0_221 = arith.constant 0 : index
    %215 = vector.load %arg6[%c2_219, %c0_220, %c0_221] : memref<5x128x128xf32, #tpu.memory_space<vmem>>, vector<1x128x128xf32>
    %216 = vector.shape_cast %215 : vector<1x128x128xf32> to vector<128x128xf32>
    %cst_222 = arith.constant dense<0.000000e+00> : vector<1x128xf32>
    %217 = tpu.matmul %214, %216, %cst_222 {dimension_numbers = #tpu.dot_dimension_numbers<[1], [0], [0], [1], [0, 0, 1, 1], [], []>} : vector<1x128xf32>, vector<128x128xf32>, vector<1x128xf32> -> vector<1x128xf32>
    %218 = arith.addf %213, %217 : vector<1x128xf32>
    %219 = vector.extract_strided_slice %202 {offsets = [3, 0], sizes = [1, 128], strides = [1, 1]} : vector<5x128xf32> to vector<1x128xf32>
    %c3_223 = arith.constant 3 : index
    %c0_224 = arith.constant 0 : index
    %c0_225 = arith.constant 0 : index
    %220 = vector.load %arg6[%c3_223, %c0_224, %c0_225] : memref<5x128x128xf32, #tpu.memory_space<vmem>>, vector<1x128x128xf32>
    %221 = vector.shape_cast %220 : vector<1x128x128xf32> to vector<128x128xf32>
    %cst_226 = arith.constant dense<0.000000e+00> : vector<1x128xf32>
    %222 = tpu.matmul %219, %221, %cst_226 {dimension_numbers = #tpu.dot_dimension_numbers<[1], [0], [0], [1], [0, 0, 1, 1], [], []>} : vector<1x128xf32>, vector<128x128xf32>, vector<1x128xf32> -> vector<1x128xf32>
    %223 = arith.addf %218, %222 : vector<1x128xf32>
    %224 = vector.extract_strided_slice %202 {offsets = [4, 0], sizes = [1, 128], strides = [1, 1]} : vector<5x128xf32> to vector<1x128xf32>
    %c4_227 = arith.constant 4 : index
    %c0_228 = arith.constant 0 : index
    %c0_229 = arith.constant 0 : index
    %225 = vector.load %arg6[%c4_227, %c0_228, %c0_229] : memref<5x128x128xf32, #tpu.memory_space<vmem>>, vector<1x128x128xf32>
    %226 = vector.shape_cast %225 : vector<1x128x128xf32> to vector<128x128xf32>
    %cst_230 = arith.constant dense<0.000000e+00> : vector<1x128xf32>
    %227 = tpu.matmul %224, %226, %cst_230 {dimension_numbers = #tpu.dot_dimension_numbers<[1], [0], [0], [1], [0, 0, 1, 1], [], []>} : vector<1x128xf32>, vector<128x128xf32>, vector<1x128xf32> -> vector<1x128xf32>
    %228 = arith.addf %223, %227 : vector<1x128xf32>
    %cst_231 = arith.constant 0.000000e+00 : f32
    %229 = vector.broadcast %cst_231 : f32 to vector<1x128xf32>
    %230 = arith.maximumf %228, %229 : vector<1x128xf32>
    %c0_232 = arith.constant 0 : index
    %c0_233 = arith.constant 0 : index
    %231 = vector.load %arg8[%c0_232, %c0_233] : memref<128x128xf32, #tpu.memory_space<vmem>>, vector<128x128xf32>
    %cst_234 = arith.constant dense<0.000000e+00> : vector<1x128xf32>
    %232 = tpu.matmul %230, %231, %cst_234 {dimension_numbers = #tpu.dot_dimension_numbers<[1], [0], [0], [1], [0, 0, 1, 1], [], []>} : vector<1x128xf32>, vector<128x128xf32>, vector<1x128xf32> -> vector<1x128xf32>
    %c0_235 = arith.constant 0 : index
    %c0_236 = arith.constant 0 : index
    %233 = vector.load %arg9[%c0_235, %c0_236] : memref<1x128xf32, #tpu.memory_space<vmem>>, vector<1x128xf32>
    %234 = arith.addf %232, %233 : vector<1x128xf32>
    %cst_237 = arith.constant 0.000000e+00 : f32
    %235 = vector.broadcast %cst_237 : f32 to vector<1x128xf32>
    %236 = arith.maximumf %234, %235 : vector<1x128xf32>
    %c0_238 = arith.constant 0 : index
    %c0_239 = arith.constant 0 : index
    %237 = vector.load %arg10[%c0_238, %c0_239] : memref<128x128xf32, #tpu.memory_space<vmem>>, vector<128x128xf32>
    %cst_240 = arith.constant dense<0.000000e+00> : vector<1x128xf32>
    %238 = tpu.matmul %236, %237, %cst_240 {dimension_numbers = #tpu.dot_dimension_numbers<[1], [0], [0], [1], [0, 0, 1, 1], [], []>} : vector<1x128xf32>, vector<128x128xf32>, vector<1x128xf32> -> vector<1x128xf32>
    %c0_241 = arith.constant 0 : index
    %c0_242 = arith.constant 0 : index
    %239 = vector.load %arg11[%c0_241, %c0_242] : memref<1x128xf32, #tpu.memory_space<vmem>>, vector<1x128xf32>
    %240 = arith.addf %238, %239 : vector<1x128xf32>
    %241 = vector.extract_strided_slice %240 {offsets = [0, 0], sizes = [1, 10], strides = [1, 1]} : vector<1x128xf32> to vector<1x10xf32>
    %c0_243 = arith.constant 0 : index
    %c0_244 = arith.constant 0 : index
    %c0_245 = arith.constant 0 : index
    %242 = vector.load %arg12[%c0_243, %c0_244, %c0_245] : memref<1x1x10xf32, #tpu.memory_space<vmem>>, vector<1x1x10xf32>
    %243 = vector.shape_cast %242 : vector<1x1x10xf32> to vector<1x10xf32>
    %244 = vector.shape_cast %241 : vector<1x10xf32> to vector<1x1x10xf32>
    tpu.vector_store %arg12[%c0_243, %c0_244, %c0_245], %244 {strides = array<i32>} : memref<1x1x10xf32, #tpu.memory_space<vmem>>, vector<1x1x10xf32>,
    return
  }
  func.func @transform_0(%arg0: i32) -> (i32, i32, i32, i32) {
    %c0_i32 = arith.constant 0 : i32
    %c0_i32_0 = arith.constant 0 : i32
    %c0_i32_1 = arith.constant 0 : i32
    %c0_i32_2 = arith.constant 0 : i32
    return %arg0, %c0_i32, %c0_i32_0, %c0_i32_1 : i32, i32, i32, i32
  }
  func.func @transform_1(%arg0: i32) -> (i32, i32, i32) {
    %c0_i32 = arith.constant 0 : i32
    %c0_i32_0 = arith.constant 0 : i32
    %c0_i32_1 = arith.constant 0 : i32
    %c0_i32_2 = arith.constant 0 : i32
    return %c0_i32, %c0_i32_0, %c0_i32_1 : i32, i32, i32
  }
  func.func @transform_2(%arg0: i32) -> (i32, i32) {
    %c0_i32 = arith.constant 0 : i32
    %c0_i32_0 = arith.constant 0 : i32
    %c0_i32_1 = arith.constant 0 : i32
    return %c0_i32, %c0_i32_0 : i32, i32
  }
  func.func @transform_3(%arg0: i32) -> (i32, i32, i32) {
    %c0_i32 = arith.constant 0 : i32
    %c0_i32_0 = arith.constant 0 : i32
    %c0_i32_1 = arith.constant 0 : i32
    %c0_i32_2 = arith.constant 0 : i32
    return %c0_i32, %c0_i32_0, %c0_i32_1 : i32, i32, i32
  }
  func.func @transform_4(%arg0: i32) -> (i32, i32) {
    %c0_i32 = arith.constant 0 : i32
    %c0_i32_0 = arith.constant 0 : i32
    %c0_i32_1 = arith.constant 0 : i32
    return %c0_i32, %c0_i32_0 : i32, i32
  }
  func.func @transform_5(%arg0: i32) -> (i32, i32, i32) {
    %c0_i32 = arith.constant 0 : i32
    %c0_i32_0 = arith.constant 0 : i32
    %c0_i32_1 = arith.constant 0 : i32
    %c0_i32_2 = arith.constant 0 : i32
    return %c0_i32, %c0_i32_0, %c0_i32_1 : i32, i32, i32
  }
  func.func @transform_6(%arg0: i32) -> (i32, i32) {
    %c0_i32 = arith.constant 0 : i32
    %c0_i32_0 = arith.constant 0 : i32
    %c0_i32_1 = arith.constant 0 : i32
    return %c0_i32, %c0_i32_0 : i32, i32
  }
  func.func @transform_7(%arg0: i32) -> (i32, i32) {
    %c0_i32 = arith.constant 0 : i32
    %c0_i32_0 = arith.constant 0 : i32
    %c0_i32_1 = arith.constant 0 : i32
    return %c0_i32, %c0_i32_0 : i32, i32
  }
  func.func @transform_8(%arg0: i32) -> (i32, i32) {
    %c0_i32 = arith.constant 0 : i32
    %c0_i32_0 = arith.constant 0 : i32
    %c0_i32_1 = arith.constant 0 : i32
    return %c0_i32, %c0_i32_0 : i32, i32
  }
  func.func @transform_9(%arg0: i32) -> (i32, i32) {
    %c0_i32 = arith.constant 0 : i32
    %c0_i32_0 = arith.constant 0 : i32
    %c0_i32_1 = arith.constant 0 : i32
    return %c0_i32, %c0_i32_0 : i32, i32
  }
  func.func @transform_10(%arg0: i32) -> (i32, i32) {
    %c0_i32 = arith.constant 0 : i32
    %c0_i32_0 = arith.constant 0 : i32
    %c0_i32_1 = arith.constant 0 : i32
    return %c0_i32, %c0_i32_0 : i32, i32
  }
  func.func @transform_11(%arg0: i32) -> (i32, i32, i32) {
    %c0_i32 = arith.constant 0 : i32
    %c0_i32_0 = arith.constant 0 : i32
    %c0_i32_1 = arith.constant 0 : i32
    return %arg0, %c0_i32, %c0_i32_0 : i32, i32, i32
  }
}

</mosaic_0001>

<llo_original>
// kernel: lenet_forward_pallas.1
$region0: #{lenet_forward_pallas.1}
  #allocation0 [shape = 'u32[]', space=smem, size = 0x4, offset = 0x4, fixed_abs, tag = 'smem constant byte address 0x4 - core index']
  #allocation1 [shape = 'u32[144,128]{1,0:T(1,128)}', space=vmem, size = 0x12000, scoped, tag = 'internal scratch']
  %s0 = inlined_call_operand.vmem [shape: f32[2,4,8,32], index: 0, kind: input, shape index: {}]
  %s1 = inlined_call_operand.hbm [shape: f32[5,32,256], index: 1, kind: input, shape index: {}]
  %s2 = inlined_call_operand.vmem [shape: f32[1,128], index: 2, kind: input, shape index: {}]
  %s3 = inlined_call_operand.hbm [shape: f32[5,128,256], index: 3, kind: input, shape index: {}]
  %s4 = inlined_call_operand.vmem [shape: f32[1,128], index: 4, kind: input, shape index: {}]
  %s5 = inlined_call_operand.hbm [shape: f32[5,128,128], index: 5, kind: input, shape index: {}]
  %s6 = inlined_call_operand.vmem [shape: f32[1,128], index: 6, kind: input, shape index: {}]
  %s7 = inlined_call_operand.vmem [shape: f32[128,128], index: 7, kind: input, shape index: {}]
  %s8 = inlined_call_operand.vmem [shape: f32[1,128], index: 8, kind: input, shape index: {}]
  %s9 = inlined_call_operand.hbm [shape: f32[128,128], index: 9, kind: input, shape index: {}]
  %s10 = inlined_call_operand.vmem [shape: f32[1,128], index: 10, kind: input, shape index: {}]
  %s11 = inlined_call_operand.hbm [shape: f32[2,1,10], index: 11, kind: output, shape index: {}]
  %s12 = sld [smem:[#allocation0]]
  $region93: #{lenet_forward_pallas.1} parent=0
    _
  %s14 = ssub.s32 1, %s12
  %s15 = scalar_select 0, %s14, %s12
  $region1: #{lenet_forward_pallas.1} parent=0
    #allocation2 [shape = 'u8[163840]{0}', space=vmem, size = 0x28000, scoped, tag = 'input window, operand 1, single buffered']
    #allocation3 [shape = 's32[2]{0}', space=sflag, size = 0x8, scoped, tag = 'scoped memory for lenet_forward_pallas.1']
    #allocation4 [shape = 's32[2]{0}', space=sflag, size = 0x8, scoped, tag = 'scoped memory for lenet_forward_pallas.1']
    #allocation5 [shape = 'u8[655360]{0}', space=vmem, size = 0xa0000, scoped, tag = 'input window, operand 3, single buffered']
    #allocation6 [shape = 's32[1]{0}', space=sflag, size = 0x4, scoped, tag = 'scoped memory for lenet_forward_pallas.1']
    #allocation7 [shape = 'u8[327680]{0}', space=vmem, size = 0x50000, scoped, tag = 'input window, operand 5, single buffered']
    #allocation8 [shape = 'u8[65536]{0}', space=vmem, size = 0x10000, scoped, tag = 'input window, operand 9, single buffered']
    #allocation9 [shape = 's32[1]{0}', space=sflag, size = 0x4, scoped, tag = 'scoped memory for lenet_forward_pallas.1']
    #allocation10 [shape = 'u8[1024]{0}', space=vmem, size = 0x400, scoped, tag = 'output window, operand 0']
    %16 = vsyncpa [#allocation3], 0
    %17 = vsyncpa [#allocation6], 0
    %18 = vsyncpa [#allocation9], 0
    %19 = vsyncpa [#allocation4], 0
    %s20 = scalar_lea.sflag [#allocation4], 1
    %21 = vsyncpa %s20, 0
    loop: start=0, step=1, limit=4
    $region2: #{lenet_forward_pallas.1} parent=1 // loop_pre_header
      _
    $region3: #{lenet_forward_pallas.1} parent=1 // loop_header
      %s23 = sphi 0, %s27
      %p24 = scmp.ge.s32.totalorder %s23, 4
      %s33 = sphi 0, %s35
      %s36 = sphi 0, %s33
      %s37 = sphi 0, %s36
      %s53 = sphi 0, %s37
      %s57 = sphi 0, %s57
      %s59 = sphi 0, %s57
      %s60 = sphi 0, %s59
      %s74 = sphi 0, %s60
      %s78 = sphi 0, %s78
      %s80 = sphi 0, %s78
      %s81 = sphi 0, %s80
      %s95 = sphi 0, %s81
      %s99 = sphi 0, %s99
      %s101 = sphi 0, %s99
      %s102 = sphi 0, %s101
      %s116 = sphi 0, %s102
      %s120 = sphi 0, %s120
      %s122 = sphi 0, %s120
      %s123 = sphi 0, %s122
      %s137 = sphi 0, %s123
      %s141 = sphi 0, %s141
      %s143 = sphi 0, %s141
      %s144 = sphi 0, %s143
      %s158 = sphi 0, %s144
      %s162 = sphi 0, %s162
      %s164 = sphi 0, %s162
      %s165 = sphi 0, %s164
      %s179 = sphi 0, %s165
      %s183 = sphi 0, %s183
      %s185 = sphi 0, %s183
      %s186 = sphi 0, %s185
      %s200 = sphi 0, %s186
      %s204 = sphi 0, %s204
      %s206 = sphi 0, %s204
      %s207 = sphi 0, %s206
      %s221 = sphi 0, %s207
      %s225 = sphi 0, %s225
      %s227 = sphi 0, %s225
      %s228 = sphi 0, %s227
      %s242 = sphi 0, %s228
      %s246 = sphi 0, %s246
      %s248 = sphi 0, %s246
      %s249 = sphi 0, %s248
      %s263 = sphi 0, %s249
      %s269 = sphi 0, %s271
      %s272 = sphi 0, %s269
      %s273 = sphi 0, %s272
      %s289 = sphi 0, %s273
    $region4: #{lenet_forward_pallas.1} parent=1 // loop_header_branch
      %26 = sbr.rel (%p24) target = $region8
    $region5: #{lenet_forward_pallas.1} parent=1 // loop_body
      %s28 = ssub.s32 %s23, 1
      %s29 = ssub.s32 %s23, 2
      %s30 = sadd.s32 %s23, 1
      %s31 = ssub.s32 %s23, %s30
      %p32 = scmp.eq.s32.totalorder %s31, 0
      %s34 = sadd.s32 %s33, 1
      %s35 = scalar_select %p32, %s33, %s34
      %p38 = pneg %p32
      %p39 = scmp.eq.s32.totalorder %s23, 1
      %p40 = por %p38, %p39
      %p41 = scmp.ne.s32.totalorder %s33, %s36
      %p42 = scmp.eq.s32.totalorder %s23, 0
      %p43 = por %p41, %p42
      %p44 = scmp.ne.s32.totalorder %s33, %s36
      %p45 = scmp.eq.s32.totalorder %s28, 1
      %p46 = por %p44, %p45
      %p47 = scmp.ne.s32.totalorder %s36, %s37
      %p48 = scmp.eq.s32.totalorder %s28, 0
      %p49 = por %p47, %p48
      %p50 = scmp.ne.s32.totalorder %s36, %s37
      %p51 = scmp.eq.s32.totalorder %s29, 1
      %p52 = por %p50, %p51
      %p54 = scmp.ne.s32.totalorder %s37, %s53
      %p55 = scmp.eq.s32.totalorder %s29, 0
      %p56 = por %p54, %p55
      %s58 = sadd.s32 %s57, 1
      %p61 = scmp.eq.s32.totalorder %s23, 1
      %p62 = scmp.ne.s32.totalorder %s57, %s59
      %p63 = scmp.eq.s32.totalorder %s23, 0
      %p64 = por %p62, %p63
      %p65 = scmp.ne.s32.totalorder %s57, %s59
      %p66 = scmp.eq.s32.totalorder %s28, 1
      %p67 = por %p65, %p66
      %p68 = scmp.ne.s32.totalorder %s59, %s60
      %p69 = scmp.eq.s32.totalorder %s28, 0
      %p70 = por %p68, %p69
      %p71 = scmp.ne.s32.totalorder %s59, %s60
      %p72 = scmp.eq.s32.totalorder %s29, 1
      %p73 = por %p71, %p72
      %p75 = scmp.ne.s32.totalorder %s60, %s74
      %p76 = scmp.eq.s32.totalorder %s29, 0
      %p77 = por %p75, %p76
      %s79 = sadd.s32 %s78, 1
      %p82 = scmp.eq.s32.totalorder %s23, 1
      %p83 = scmp.ne.s32.totalorder %s78, %s80
      %p84 = scmp.eq.s32.totalorder %s23, 0
      %p85 = por %p83, %p84
      %p86 = scmp.ne.s32.totalorder %s78, %s80
      %p87 = scmp.eq.s32.totalorder %s28, 1
      %p88 = por %p86, %p87
      %p89 = scmp.ne.s32.totalorder %s80, %s81
      %p90 = scmp.eq.s32.totalorder %s28, 0
      %p91 = por %p89, %p90
      %p92 = scmp.ne.s32.totalorder %s80, %s81
      %p93 = scmp.eq.s32.totalorder %s29, 1
      %p94 = por %p92, %p93
      %p96 = scmp.ne.s32.totalorder %s81, %s95
      %p97 = scmp.eq.s32.totalorder %s29, 0
      %p98 = por %p96, %p97
      %s100 = sadd.s32 %s99, 1
      %p103 = scmp.eq.s32.totalorder %s23, 1
      %p104 = scmp.ne.s32.totalorder %s99, %s101
      %p105 = scmp.eq.s32.totalorder %s23, 0
      %p106 = por %p104, %p105
      %p107 = scmp.ne.s32.totalorder %s99, %s101
      %p108 = scmp.eq.s32.totalorder %s28, 1
      %p109 = por %p107, %p108
      %p110 = scmp.ne.s32.totalorder %s101, %s102
      %p111 = scmp.eq.s32.totalorder %s28, 0
      %p112 = por %p110, %p111
      %p113 = scmp.ne.s32.totalorder %s101, %s102
      %p114 = scmp.eq.s32.totalorder %s29, 1
      %p115 = por %p113, %p114
      %p117 = scmp.ne.s32.totalorder %s102, %s116
      %p118 = scmp.eq.s32.totalorder %s29, 0
      %p119 = por %p117, %p118
      %s121 = sadd.s32 %s120, 1
      %p124 = scmp.eq.s32.totalorder %s23, 1
      %p125 = scmp.ne.s32.totalorder %s120, %s122
      %p126 = scmp.eq.s32.totalorder %s23, 0
      %p127 = por %p125, %p126
      %p128 = scmp.ne.s32.totalorder %s120, %s122
      %p129 = scmp.eq.s32.totalorder %s28, 1
      %p130 = por %p128, %p129
      %p131 = scmp.ne.s32.totalorder %s122, %s123
      %p132 = scmp.eq.s32.totalorder %s28, 0
      %p133 = por %p131, %p132
      %p134 = scmp.ne.s32.totalorder %s122, %s123
      %p135 = scmp.eq.s32.totalorder %s29, 1
      %p136 = por %p134, %p135
      %p138 = scmp.ne.s32.totalorder %s123, %s137
      %p139 = scmp.eq.s32.totalorder %s29, 0
      %p140 = por %p138, %p139
      %s142 = sadd.s32 %s141, 1
      %p145 = scmp.eq.s32.totalorder %s23, 1
      %p146 = scmp.ne.s32.totalorder %s141, %s143
      %p147 = scmp.eq.s32.totalorder %s23, 0
      %p148 = por %p146, %p147
      %p149 = scmp.ne.s32.totalorder %s141, %s143
      %p150 = scmp.eq.s32.totalorder %s28, 1
      %p151 = por %p149, %p150
      %p152 = scmp.ne.s32.totalorder %s143, %s144
      %p153 = scmp.eq.s32.totalorder %s28, 0
      %p154 = por %p152, %p153
      %p155 = scmp.ne.s32.totalorder %s143, %s144
      %p156 = scmp.eq.s32.totalorder %s29, 1
      %p157 = por %p155, %p156
      %p159 = scmp.ne.s32.totalorder %s144, %s158
      %p160 = scmp.eq.s32.totalorder %s29, 0
      %p161 = por %p159, %p160
      %s163 = sadd.s32 %s162, 1
      %p166 = scmp.eq.s32.totalorder %s23, 1
      %p167 = scmp.ne.s32.totalorder %s162, %s164
      %p168 = scmp.eq.s32.totalorder %s23, 0
      %p169 = por %p167, %p168
      %p170 = scmp.ne.s32.totalorder %s162, %s164
      %p171 = scmp.eq.s32.totalorder %s28, 1
      %p172 = por %p170, %p171
      %p173 = scmp.ne.s32.totalorder %s164, %s165
      %p174 = scmp.eq.s32.totalorder %s28, 0
      %p175 = por %p173, %p174
      %p176 = scmp.ne.s32.totalorder %s164, %s165
      %p177 = scmp.eq.s32.totalorder %s29, 1
      %p178 = por %p176, %p177
      %p180 = scmp.ne.s32.totalorder %s165, %s179
      %p181 = scmp.eq.s32.totalorder %s29, 0
      %p182 = por %p180, %p181
      %s184 = sadd.s32 %s183, 1
      %p187 = scmp.eq.s32.totalorder %s23, 1
      %p188 = scmp.ne.s32.totalorder %s183, %s185
      %p189 = scmp.eq.s32.totalorder %s23, 0
      %p190 = por %p188, %p189
      %p191 = scmp.ne.s32.totalorder %s183, %s185
      %p192 = scmp.eq.s32.totalorder %s28, 1
      %p193 = por %p191, %p192
      %p194 = scmp.ne.s32.totalorder %s185, %s186
      %p195 = scmp.eq.s32.totalorder %s28, 0
      %p196 = por %p194, %p195
      %p197 = scmp.ne.s32.totalorder %s185, %s186
      %p198 = scmp.eq.s32.totalorder %s29, 1
      %p199 = por %p197, %p198
      %p201 = scmp.ne.s32.totalorder %s186, %s200
      %p202 = scmp.eq.s32.totalorder %s29, 0
      %p203 = por %p201, %p202
      %s205 = sadd.s32 %s204, 1
      %p208 = scmp.eq.s32.totalorder %s23, 1
      %p209 = scmp.ne.s32.totalorder %s204, %s206
      %p210 = scmp.eq.s32.totalorder %s23, 0
      %p211 = por %p209, %p210
      %p212 = scmp.ne.s32.totalorder %s204, %s206
      %p213 = scmp.eq.s32.totalorder %s28, 1
      %p214 = por %p212, %p213
      %p215 = scmp.ne.s32.totalorder %s206, %s207
      %p216 = scmp.eq.s32.totalorder %s28, 0
      %p217 = por %p215, %p216
      %p218 = scmp.ne.s32.totalorder %s206, %s207
      %p219 = scmp.eq.s32.totalorder %s29, 1
      %p220 = por %p218, %p219
      %p222 = scmp.ne.s32.totalorder %s207, %s221
      %p223 = scmp.eq.s32.totalorder %s29, 0
      %p224 = por %p222, %p223
      %s226 = sadd.s32 %s225, 1
      %p229 = scmp.eq.s32.totalorder %s23, 1
      %p230 = scmp.ne.s32.totalorder %s225, %s227
      %p231 = scmp.eq.s32.totalorder %s23, 0
      %p232 = por %p230, %p231
      %p233 = scmp.ne.s32.totalorder %s225, %s227
      %p234 = scmp.eq.s32.totalorder %s28, 1
      %p235 = por %p233, %p234
      %p236 = scmp.ne.s32.totalorder %s227, %s228
      %p237 = scmp.eq.s32.totalorder %s28, 0
      %p238 = por %p236, %p237
      %p239 = scmp.ne.s32.totalorder %s227, %s228
      %p240 = scmp.eq.s32.totalorder %s29, 1
      %p241 = por %p239, %p240
      %p243 = scmp.ne.s32.totalorder %s228, %s242
      %p244 = scmp.eq.s32.totalorder %s29, 0
      %p245 = por %p243, %p244
      %s247 = sadd.s32 %s246, 1
      %p250 = scmp.eq.s32.totalorder %s23, 1
      %p251 = scmp.ne.s32.totalorder %s246, %s248
      %p252 = scmp.eq.s32.totalorder %s23, 0
      %p253 = por %p251, %p252
      %p254 = scmp.ne.s32.totalorder %s246, %s248
      %p255 = scmp.eq.s32.totalorder %s28, 1
      %p256 = por %p254, %p255
      %p257 = scmp.ne.s32.totalorder %s248, %s249
      %p258 = scmp.eq.s32.totalorder %s28, 0
      %p259 = por %p257, %p258
      %p260 = scmp.ne.s32.totalorder %s248, %s249
      %p261 = scmp.eq.s32.totalorder %s29, 1
      %p262 = por %p260, %p261
      %p264 = scmp.ne.s32.totalorder %s249, %s263
      %p265 = scmp.eq.s32.totalorder %s29, 0
      %p266 = por %p264, %p265
      %s267 = ssub.s32 %s23, %s30
      %p268 = scmp.eq.s32.totalorder %s267, 0
      %s270 = sadd.s32 %s269, 1
      %s271 = scalar_select %p268, %s269, %s270
      %p274 = pneg %p268
      %p275 = scmp.eq.s32.totalorder %s23, 1
      %p276 = por %p274, %p275
      %p277 = scmp.ne.s32.totalorder %s269, %s272
      %p278 = scmp.eq.s32.totalorder %s23, 0
      %p279 = por %p277, %p278
      %p280 = scmp.ne.s32.totalorder %s269, %s272
      %p281 = scmp.eq.s32.totalorder %s28, 1
      %p282 = por %p280, %p281
      %p283 = scmp.ne.s32.totalorder %s272, %s273
      %p284 = scmp.eq.s32.totalorder %s28, 0
      %p285 = por %p283, %p284
      %p286 = scmp.ne.s32.totalorder %s272, %s273
      %p287 = scmp.eq.s32.totalorder %s29, 1
      %p288 = por %p286, %p287
      %p290 = scmp.ne.s32.totalorder %s273, %s289
      %p291 = scmp.eq.s32.totalorder %s29, 0
      %p292 = por %p290, %p291
      %p293 = scmp.le.s32.totalorder 1, %s23
      %p294 = scmp.lt.s32.totalorder %s23, 3
      %p295 = pnand %p293, %p294
      %p296 = pneg %p295
      // Predicated region
      $region9: #{lenet_forward_pallas.1} parent=5 // pred_check
        _
      $region10: #{lenet_forward_pallas.1} parent=5 // pred_check_branch
        %298 = sbr.rel (%p295) target = $region12
      $region11: #{lenet_forward_pallas.1} parent=5 // pred_region
        %s299 = ssub.s32 %s23, 1
        // Predicated region
        $region13: #{lenet_forward_pallas.1} parent=11 // pred_check
          %p300 = pneg %p70
        $region14: #{lenet_forward_pallas.1} parent=11 // pred_check_branch
          %302 = sbr.rel (%p300) target = $region16
        $region15: #{lenet_forward_pallas.1} parent=11 // pred_region
          %s304 = ssub.s32 5120, 5120
          %305 = vsyncadd [#allocation3], %s304
          %s306 = sshll.u32 [#allocation2], 4
          %s307 = int_to_ptr.vmem [resolvable:$true] %s306
          %312 = dma.hbm_to_vmem [thread:$0]  %s1, 5120, %s307, [#allocation3], 256, 256, 16
        $region16: #{lenet_forward_pallas.1} parent=11 // pred_fallthru
          _
        // Predicated region
        $region17: #{lenet_forward_pallas.1} parent=11 // pred_check
          %p313 = pneg %p91
        $region18: #{lenet_forward_pallas.1} parent=11 // pred_check_branch
          %315 = sbr.rel (%p313) target = $region20
        $region19: #{lenet_forward_pallas.1} parent=11 // pred_region
          _
        $region20: #{lenet_forward_pallas.1} parent=11 // pred_fallthru
          _
        // Predicated region
        $region21: #{lenet_forward_pallas.1} parent=11 // pred_check
          %p316 = pneg %p112
        $region22: #{lenet_forward_pallas.1} parent=11 // pred_check_branch
          %318 = sbr.rel (%p316) target = $region24
        $region23: #{lenet_forward_pallas.1} parent=11 // pred_region
          %s320 = ssub.s32 20480, 20480
          %321 = vsyncadd [#allocation6], %s320
          %s322 = sshll.u32 [#allocation5], 4
          %s323 = int_to_ptr.vmem [resolvable:$true] %s322
          %328 = dma.hbm_to_vmem [thread:$0]  %s3, 20480, %s323, [#allocation6], 256, 256, 16
        $region24: #{lenet_forward_pallas.1} parent=11 // pred_fallthru
          _
        // Predicated region
        $region25: #{lenet_forward_pallas.1} parent=11 // pred_check
          %p329 = pneg %p133
        $region26: #{lenet_forward_pallas.1} parent=11 // pred_check_branch
          %331 = sbr.rel (%p329) target = $region28
        $region27: #{lenet_forward_pallas.1} parent=11 // pred_region
          _
        $region28: #{lenet_forward_pallas.1} parent=11 // pred_fallthru
          _
        // Predicated region
        $region29: #{lenet_forward_pallas.1} parent=11 // pred_check
          %p332 = pneg %p154
        $region30: #{lenet_forward_pallas.1} parent=11 // pred_check_branch
          %334 = sbr.rel (%p332) target = $region32
        $region31: #{lenet_forward_pallas.1} parent=11 // pred_region
          %s336 = ssub.s32 10240, 10240
          %337 = vsyncadd [#allocation6], %s336
          %s338 = sshll.u32 [#allocation7], 4
          %s339 = int_to_ptr.vmem [resolvable:$true] %s338
          %344 = dma.hbm_to_vmem [thread:$0]  %s5, 10240, %s339, [#allocation6], 128, 128, 8
        $region32: #{lenet_forward_pallas.1} parent=11 // pred_fallthru
          _
        // Predicated region
        $region33: #{lenet_forward_pallas.1} parent=11 // pred_check
          %p345 = pneg %p175
        $region34: #{lenet_forward_pallas.1} parent=11 // pred_check_branch
          %347 = sbr.rel (%p345) target = $region36
        $region35: #{lenet_forward_pallas.1} parent=11 // pred_region
          _
        $region36: #{lenet_forward_pallas.1} parent=11 // pred_fallthru
          _
        // Predicated region
        $region37: #{lenet_forward_pallas.1} parent=11 // pred_check
          %p348 = pneg %p196
        $region38: #{lenet_forward_pallas.1} parent=11 // pred_check_branch
          %350 = sbr.rel (%p348) target = $region40
        $region39: #{lenet_forward_pallas.1} parent=11 // pred_region
          _
        $region40: #{lenet_forward_pallas.1} parent=11 // pred_fallthru
          _
        // Predicated region
        $region41: #{lenet_forward_pallas.1} parent=11 // pred_check
          %p351 = pneg %p217
        $region42: #{lenet_forward_pallas.1} parent=11 // pred_check_branch
          %353 = sbr.rel (%p351) target = $region44
        $region43: #{lenet_forward_pallas.1} parent=11 // pred_region
          _
        $region44: #{lenet_forward_pallas.1} parent=11 // pred_fallthru
          _
        // Predicated region
        $region45: #{lenet_forward_pallas.1} parent=11 // pred_check
          %p354 = pneg %p238
        $region46: #{lenet_forward_pallas.1} parent=11 // pred_check_branch
          %356 = sbr.rel (%p354) target = $region48
        $region47: #{lenet_forward_pallas.1} parent=11 // pred_region
          %s358 = ssub.s32 2048, 2048
          %359 = vsyncadd [#allocation9], %s358
          %s360 = sshll.u32 [#allocation8], 4
          %s361 = int_to_ptr.vmem [resolvable:$true] %s360
          %366 = dma.hbm_to_vmem [thread:$0]  %s9, 2048, %s361, [#allocation9], 128, 128, 8
        $region48: #{lenet_forward_pallas.1} parent=11 // pred_fallthru
          _
        // Predicated region
        $region49: #{lenet_forward_pallas.1} parent=11 // pred_check
          %p367 = pneg %p259
        $region50: #{lenet_forward_pallas.1} parent=11 // pred_check_branch
          %369 = sbr.rel (%p367) target = $region52
        $region51: #{lenet_forward_pallas.1} parent=11 // pred_region
          _
        $region52: #{lenet_forward_pallas.1} parent=11 // pred_fallthru
          _
      $region12: #{lenet_forward_pallas.1} parent=5 // pred_fallthru
        _
      %p370 = scmp.lt.s32.totalorder %s23, 2
      // Predicated region
      $region53: #{lenet_forward_pallas.1} parent=5 // pred_check
        %p371 = pneg %p370
      $region54: #{lenet_forward_pallas.1} parent=5 // pred_check_branch
        %373 = sbr.rel (%p371) target = $region56
      $region55: #{lenet_forward_pallas.1} parent=5 // pred_region
        // Predicated region
        $region57: #{lenet_forward_pallas.1} parent=55 // pred_check
          %p374 = pneg %p43
        $region58: #{lenet_forward_pallas.1} parent=55 // pred_check_branch
          %376 = sbr.rel (%p374) target = $region60
        $region59: #{lenet_forward_pallas.1} parent=55 // pred_region
          %p377 = scmp.lt.s32.totalorder %s23, 1
          %s378 = scalar_select %p377, %s23, 1
          %s379 = smul.addr %s378, 4
          %s380 = smul.addr %s379, 8
          %s381 = scalar_lea.vmem %s0, %s380
        $region60: #{lenet_forward_pallas.1} parent=55 // pred_fallthru
          _
      $region56: #{lenet_forward_pallas.1} parent=5 // pred_fallthru
        _
      %p382 = scmp.le.s32.totalorder 1, %s23
      %p383 = scmp.lt.s32.totalorder %s23, 3
      %p384 = pnand %p382, %p383
      %p385 = pneg %p384
      // Predicated region
      $region61: #{lenet_forward_pallas.1} parent=5 // pred_check
        _
      $region62: #{lenet_forward_pallas.1} parent=5 // pred_check_branch
        %387 = sbr.rel (%p384) target = $region64
      $region63: #{lenet_forward_pallas.1} parent=5 // pred_region
        %s388 = ssub.s32 %s23, 1
        // Predicated region
        $region65: #{lenet_forward_pallas.1} parent=63 // pred_check
          %p389 = pneg %p70
        $region66: #{lenet_forward_pallas.1} parent=63 // pred_check_branch
          %391 = sbr.rel (%p389) target = $region68
        $region67: #{lenet_forward_pallas.1} parent=63 // pred_region
          %392 = dma.done [#allocation3], 5120
        $region68: #{lenet_forward_pallas.1} parent=63 // pred_fallthru
          _
        // Predicated region
        $region69: #{lenet_forward_pallas.1} parent=63 // pred_check
          %p393 = pneg %p112
        $region70: #{lenet_forward_pallas.1} parent=63 // pred_check_branch
          %395 = sbr.rel (%p393) target = $region72
        $region71: #{lenet_forward_pallas.1} parent=63 // pred_region
          %396 = dma.done [#allocation6], 20480
        $region72: #{lenet_forward_pallas.1} parent=63 // pred_fallthru
          _
        // Predicated region
        $region73: #{lenet_forward_pallas.1} parent=63 // pred_check
          %p397 = pneg %p154
        $region74: #{lenet_forward_pallas.1} parent=63 // pred_check_branch
          %399 = sbr.rel (%p397) target = $region76
        $region75: #{lenet_forward_pallas.1} parent=63 // pred_region
          %400 = dma.done [#allocation6], 10240
        $region76: #{lenet_forward_pallas.1} parent=63 // pred_fallthru
          _
        // Predicated region
        $region77: #{lenet_forward_pallas.1} parent=63 // pred_check
          %p401 = pneg %p238
        $region78: #{lenet_forward_pallas.1} parent=63 // pred_check_branch
          %403 = sbr.rel (%p401) target = $region80
        $region79: #{lenet_forward_pallas.1} parent=63 // pred_region
          %404 = dma.done [#allocation9], 2048
        $region80: #{lenet_forward_pallas.1} parent=63 // pred_fallthru
          _
        %p405 = scmp.lt.s32.totalorder %s28, 1
        %s406 = scalar_select %p405, %s28, 1
        %s407 = smul.addr %s406, 4
        %s408 = smul.addr %s407, 8
        %s409 = scalar_lea.vmem %s0, %s408
        %p410 = pneg %p49
        %p411 = pneg %p46
        %p412 = pneg %p70
        %p413 = pneg %p67
        %p414 = pneg %p91
        %p415 = pneg %p88
        %p416 = pneg %p112
        %p417 = pneg %p109
        %p418 = pneg %p133
        %p419 = pneg %p130
        %p420 = pneg %p154
        %p421 = pneg %p151
        %p422 = pneg %p175
        %p423 = pneg %p172
        %p424 = pneg %p196
        %p425 = pneg %p193
        %p426 = pneg %p217
        %p427 = pneg %p214
        %p428 = pneg %p238
        %p429 = pneg %p235
        %p430 = pneg %p259
        %p431 = pneg %p256
        %p432 = pneg %p285
        %p433 = pneg %p282
        %s434 = sand.u32 %s272, 1
        %s435 = scalar_lea.sflag [#allocation4], %s434
        %s436 = sand.u32 %s272, 1
        %s437 = scalar_lea.vmem [#allocation10], %s436
        %p438 = scmp.lt.s32.totalorder %s28, 1
        %s439 = scalar_select %p438, %s28, 1
        %s440 = smul.addr %s439, 4
        %s441 = smul.addr %s440, 8
        %s442 = scalar_lea.vmem %s0, %s441
        %v443 = vld [vmem:[%s442] sm:$0x7f]
        %v444 = vld [vmem:[#allocation2] sm:$0xff]
        %v445 = vld [vmem:[#allocation2 + $0x8] sm:$0xff]
        %v446 = vld [vmem:[#allocation2 + $0x10] sm:$0xff]
        %v447 = vld [vmem:[#allocation2 + $0x18] sm:$0xff]
        %v448 = vld [vmem:[#allocation2 + $0x20] sm:$0xff]
        %v449 = vld [vmem:[#allocation2 + $0x28] sm:$0xff]
        %v450 = vld [vmem:[#allocation2 + $0x30] sm:$0xff]
        %v451 = vld [vmem:[#allocation2 + $0x38] sm:$0xff]
        %s452 = scalar_lea.vmem %s442, 8
        %v453 = vld [vmem:[%s452] sm:$0x7f]
        %s454 = scalar_lea.vmem [#allocation2], 64
        %v455 = vld [vmem:[%s454] sm:$0xff]
        %v456 = vld [vmem:[%s454 + $0x8] sm:$0xff]
        %v457 = vld [vmem:[%s454 + $0x10] sm:$0xff]
        %v458 = vld [vmem:[%s454 + $0x18] sm:$0xff]
        %v459 = vld [vmem:[%s454 + $0x20] sm:$0xff]
        %v460 = vld [vmem:[%s454 + $0x28] sm:$0xff]
        %v461 = vld [vmem:[%s454 + $0x30] sm:$0xff]
        %v462 = vld [vmem:[%s454 + $0x38] sm:$0xff]
        %vm463 = vcmask 261120
        %v465 = vsel %vm463, %v453, 0
        %467 = vmatprep.subr.mxu0 %v456
        %468 = vmatpush1.msra.mxu0 %v455
        %469 = vmatprep.subr.mxu0 %v458
        %470 = vmatpush1.msra.mxu0 %v457
        %471 = vmatprep.subr.mxu0 %v460
        %472 = vmatpush1.msra.mxu0 %v459
        %473 = vmatprep.subr.mxu0 %v462
        %474 = vmatpush1.msra.mxu0 %v461
        %475 = vmatprep.subr.mxu0 0.0
        %476 = vmatpush1.msra.mxu0 0.0
        %477 = vmatprep.subr.mxu0 0.0
        %478 = vmatpush1.msra.mxu0 0.0
        %479 = vmatprep.subr.mxu0 0.0
        %480 = vmatpush1.msra.mxu0 0.0
        %481 = vmatprep.subr.mxu0 0.0
        %482 = vmatpush1.msra.mxu0 0.0
        %483 = vmatprep.subr.mxu0 0.0
        %484 = vmatpush1.msra.mxu0 0.0
        %485 = vmatprep.subr.mxu0 0.0
        %486 = vmatpush1.msra.mxu0 0.0
        %487 = vmatprep.subr.mxu0 0.0
        %488 = vmatpush1.msra.mxu0 0.0
        %489 = vmatprep.subr.mxu0 0.0
        %490 = vmatpush1.msra.mxu0 0.0
        %491 = vmatprep.subr.mxu0 0.0
        %492 = vmatpush1.msra.mxu0 0.0
        %493 = vmatprep.subr.mxu0 0.0
        %494 = vmatpush1.msra.mxu0 0.0
        %495 = vmatprep.subr.mxu0 0.0
        %496 = vmatpush1.msra.mxu0 0.0
        %497 = vmatprep.subr.mxu0 0.0
        %498 = vmatpush1.msra.mxu0 0.0
        %499 = vmatprep.subr.mxu0 0.0
        %500 = vmatpush1.msra.mxu0 0.0
        %501 = vmatprep.subr.mxu0 0.0
        %502 = vmatpush1.msra.mxu0 0.0
        %503 = vmatprep.subr.mxu0 0.0
        %504 = vmatpush1.msra.mxu0 0.0
        %505 = vmatprep.subr.mxu0 0.0
        %506 = vmatpush1.msra.mxu0 0.0
        %507 = vmatprep.subr.mxu0 0.0
        %508 = vmatpush1.msra.mxu0 0.0
        %509 = vmatprep.subr.mxu0 0.0
        %510 = vmatpush1.msra.mxu0 0.0
        %511 = vmatprep.subr.mxu0 0.0
        %512 = vmatpush1.msra.mxu0 0.0
        %513 = vmatprep.subr.mxu0 0.0
        %514 = vmatpush1.msra.mxu0 0.0
        %515 = vmatprep.subr.mxu0 0.0
        %516 = vmatpush1.msra.mxu0 0.0
        %517 = vmatprep.subr.mxu0 0.0
        %518 = vmatpush1.msra.mxu0 0.0
        %519 = vmatprep.subr.mxu0 0.0
        %520 = vmatpush1.msra.mxu0 0.0
        %521 = vmatprep.subr.mxu0 0.0
        %522 = vmatpush1.msra.mxu0 0.0
        %523 = vmatprep.subr.mxu0 0.0
        %524 = vmatpush1.msra.mxu0 0.0
        %525 = vmatprep.subr.mxu0 0.0
        %526 = vmatpush1.msra.mxu0 0.0
        %527 = vmatprep.subr.mxu0 0.0
        %528 = vmatpush1.msra.mxu0 0.0
        %529 = vmatprep.subr.mxu0 0.0
        %530 = vmatpush1.msra.mxu0 0.0
        %531 = vmatprep.mubr.f32.mxu0 0.0
        %532 = vmatmul.mubr.f32.gmra.mrb[0].mxu0 %v465
        %v533 = vpop.f32.mrb[0].mxu0
        %v534 = vadd.f32 0.0, %v533
        %v535 = vpop.f32.mrb[0].mxu0
        %v536 = vadd.f32 0.0, %v535
        %537 = vdwg.mxu0
        %v539 = vsel %vm463, %v443, 0
        %541 = vmatprep.subr.mxu0 %v445
        %542 = vmatpush1.msra.mxu0 %v444
        %543 = vmatprep.subr.mxu0 %v447
        %544 = vmatpush1.msra.mxu0 %v446
        %545 = vmatprep.subr.mxu0 %v449
        %546 = vmatpush1.msra.mxu0 %v448
        %547 = vmatprep.subr.mxu0 %v451
        %548 = vmatpush1.msra.mxu0 %v450
        %549 = vmatprep.subr.mxu0 0.0
        %550 = vmatpush1.msra.mxu0 0.0
        %551 = vmatprep.subr.mxu0 0.0
        %552 = vmatpush1.msra.mxu0 0.0
        %553 = vmatprep.subr.mxu0 0.0
        %554 = vmatpush1.msra.mxu0 0.0
        %555 = vmatprep.subr.mxu0 0.0
        %556 = vmatpush1.msra.mxu0 0.0
        %557 = vmatprep.subr.mxu0 0.0
        %558 = vmatpush1.msra.mxu0 0.0
        %559 = vmatprep.subr.mxu0 0.0
        %560 = vmatpush1.msra.mxu0 0.0
        %561 = vmatprep.subr.mxu0 0.0
        %562 = vmatpush1.msra.mxu0 0.0
        %563 = vmatprep.subr.mxu0 0.0
        %564 = vmatpush1.msra.mxu0 0.0
        %565 = vmatprep.subr.mxu0 0.0
        %566 = vmatpush1.msra.mxu0 0.0
        %567 = vmatprep.subr.mxu0 0.0
        %568 = vmatpush1.msra.mxu0 0.0
        %569 = vmatprep.subr.mxu0 0.0
        %570 = vmatpush1.msra.mxu0 0.0
        %571 = vmatprep.subr.mxu0 0.0
        %572 = vmatpush1.msra.mxu0 0.0
        %573 = vmatprep.subr.mxu0 0.0
        %574 = vmatpush1.msra.mxu0 0.0
        %575 = vmatprep.subr.mxu0 0.0
        %576 = vmatpush1.msra.mxu0 0.0
        %577 = vmatprep.subr.mxu0 0.0
        %578 = vmatpush1.msra.mxu0 0.0
        %579 = vmatprep.subr.mxu0 0.0
        %580 = vmatpush1.msra.mxu0 0.0
        %581 = vmatprep.subr.mxu0 0.0
        %582 = vmatpush1.msra.mxu0 0.0
        %583 = vmatprep.subr.mxu0 0.0
        %584 = vmatpush1.msra.mxu0 0.0
        %585 = vmatprep.subr.mxu0 0.0
        %586 = vmatpush1.msra.mxu0 0.0
        %587 = vmatprep.subr.mxu0 0.0
        %588 = vmatpush1.msra.mxu0 0.0
        %589 = vmatprep.subr.mxu0 0.0
        %590 = vmatpush1.msra.mxu0 0.0
        %591 = vmatprep.subr.mxu0 0.0
        %592 = vmatpush1.msra.mxu0 0.0
        %593 = vmatprep.subr.mxu0 0.0
        %594 = vmatpush1.msra.mxu0 0.0
        %595 = vmatprep.subr.mxu0 0.0
        %596 = vmatpush1.msra.mxu0 0.0
        %597 = vmatprep.subr.mxu0 0.0
        %598 = vmatpush1.msra.mxu0 0.0
        %599 = vmatprep.subr.mxu0 0.0
        %600 = vmatpush1.msra.mxu0 0.0
        %601 = vmatprep.subr.mxu0 0.0
        %602 = vmatpush1.msra.mxu0 0.0
        %603 = vmatprep.subr.mxu0 0.0
        %604 = vmatpush1.msra.mxu0 0.0
        %605 = vmatprep.mubr.f32.mxu0 0.0
        %606 = vmatmul.mubr.f32.gmra.mrb[0].mxu0 %v539
        %v607 = vpop.f32.mrb[0].mxu0
        %v608 = vadd.f32 %v534, %v607
        %v609 = vpop.f32.mrb[0].mxu0
        %v610 = vadd.f32 %v536, %v609
        %611 = vdwg.mxu0
        %s612 = scalar_lea.vmem %s442, 16
        %v613 = vld [vmem:[%s612] sm:$0x7f]
        %s614 = scalar_lea.vmem [#allocation2], 128
        %v615 = vld [vmem:[%s614] sm:$0xff]
        %v616 = vld [vmem:[%s614 + $0x8] sm:$0xff]
        %v617 = vld [vmem:[%s614 + $0x10] sm:$0xff]
        %v618 = vld [vmem:[%s614 + $0x18] sm:$0xff]
        %v619 = vld [vmem:[%s614 + $0x20] sm:$0xff]
        %v620 = vld [vmem:[%s614 + $0x28] sm:$0xff]
        %v621 = vld [vmem:[%s614 + $0x30] sm:$0xff]
        %v622 = vld [vmem:[%s614 + $0x38] sm:$0xff]
        %v624 = vsel %vm463, %v613, 0
        %626 = vmatprep.subr.mxu0 %v616
        %627 = vmatpush1.msra.mxu0 %v615
        %628 = vmatprep.subr.mxu0 %v618
        %629 = vmatpush1.msra.mxu0 %v617
        %630 = vmatprep.subr.mxu0 %v620
        %631 = vmatpush1.msra.mxu0 %v619
        %632 = vmatprep.subr.mxu0 %v622
        %633 = vmatpush1.msra.mxu0 %v621
        %634 = vmatprep.subr.mxu0 0.0
        %635 = vmatpush1.msra.mxu0 0.0
        %636 = vmatprep.subr.mxu0 0.0
        %637 = vmatpush1.msra.mxu0 0.0
        %638 = vmatprep.subr.mxu0 0.0
        %639 = vmatpush1.msra.mxu0 0.0
        %640 = vmatprep.subr.mxu0 0.0
        %641 = vmatpush1.msra.mxu0 0.0
        %642 = vmatprep.subr.mxu0 0.0
        %643 = vmatpush1.msra.mxu0 0.0
        %644 = vmatprep.subr.mxu0 0.0
        %645 = vmatpush1.msra.mxu0 0.0
        %646 = vmatprep.subr.mxu0 0.0
        %647 = vmatpush1.msra.mxu0 0.0
        %648 = vmatprep.subr.mxu0 0.0
        %649 = vmatpush1.msra.mxu0 0.0
        %650 = vmatprep.subr.mxu0 0.0
        %651 = vmatpush1.msra.mxu0 0.0
        %652 = vmatprep.subr.mxu0 0.0
        %653 = vmatpush1.msra.mxu0 0.0
        %654 = vmatprep.subr.mxu0 0.0
        %655 = vmatpush1.msra.mxu0 0.0
        %656 = vmatprep.subr.mxu0 0.0
        %657 = vmatpush1.msra.mxu0 0.0
        %658 = vmatprep.subr.mxu0 0.0
        %659 = vmatpush1.msra.mxu0 0.0
        %660 = vmatprep.subr.mxu0 0.0
        %661 = vmatpush1.msra.mxu0 0.0
        %662 = vmatprep.subr.mxu0 0.0
        %663 = vmatpush1.msra.mxu0 0.0
        %664 = vmatprep.subr.mxu0 0.0
        %665 = vmatpush1.msra.mxu0 0.0
        %666 = vmatprep.subr.mxu0 0.0
        %667 = vmatpush1.msra.mxu0 0.0
        %668 = vmatprep.subr.mxu0 0.0
        %669 = vmatpush1.msra.mxu0 0.0
        %670 = vmatprep.subr.mxu0 0.0
        %671 = vmatpush1.msra.mxu0 0.0
        %672 = vmatprep.subr.mxu0 0.0
        %673 = vmatpush1.msra.mxu0 0.0
        %674 = vmatprep.subr.mxu0 0.0
        %675 = vmatpush1.msra.mxu0 0.0
        %676 = vmatprep.subr.mxu0 0.0
        %677 = vmatpush1.msra.mxu0 0.0
        %678 = vmatprep.subr.mxu0 0.0
        %679 = vmatpush1.msra.mxu0 0.0
        %680 = vmatprep.subr.mxu0 0.0
        %681 = vmatpush1.msra.mxu0 0.0
        %682 = vmatprep.subr.mxu0 0.0
        %683 = vmatpush1.msra.mxu0 0.0
        %684 = vmatprep.subr.mxu0 0.0
        %685 = vmatpush1.msra.mxu0 0.0
        %686 = vmatprep.subr.mxu0 0.0
        %687 = vmatpush1.msra.mxu0 0.0
        %688 = vmatprep.subr.mxu0 0.0
        %689 = vmatpush1.msra.mxu0 0.0
        %690 = vmatprep.mubr.f32.mxu0 0.0
        %691 = vmatmul.mubr.f32.gmra.mrb[0].mxu0 %v624
        %v692 = vpop.f32.mrb[0].mxu0
        %v693 = vadd.f32 0.0, %v692
        %v694 = vpop.f32.mrb[0].mxu0
        %v695 = vadd.f32 0.0, %v694
        %696 = vdwg.mxu0
        %v697 = vadd.f32 %v608, %v693
        %v698 = vadd.f32 %v610, %v695
        %s699 = scalar_lea.vmem %s442, 24
        %v700 = vld [vmem:[%s699] sm:$0x7f]
        %s701 = scalar_lea.vmem [#allocation2], 192
        %v702 = vld [vmem:[%s701] sm:$0xff]
        %v703 = vld [vmem:[%s701 + $0x8] sm:$0xff]
        %v704 = vld [vmem:[%s701 + $0x10] sm:$0xff]
        %v705 = vld [vmem:[%s701 + $0x18] sm:$0xff]
        %v706 = vld [vmem:[%s701 + $0x20] sm:$0xff]
        %v707 = vld [vmem:[%s701 + $0x28] sm:$0xff]
        %v708 = vld [vmem:[%s701 + $0x30] sm:$0xff]
        %v709 = vld [vmem:[%s701 + $0x38] sm:$0xff]
        %v711 = vsel %vm463, %v700, 0
        %713 = vmatprep.subr.mxu0 %v703
        %714 = vmatpush1.msra.mxu0 %v702
        %715 = vmatprep.subr.mxu0 %v705
        %716 = vmatpush1.msra.mxu0 %v704
        %717 = vmatprep.subr.mxu0 %v707
        %718 = vmatpush1.msra.mxu0 %v706
        %719 = vmatprep.subr.mxu0 %v709
        %720 = vmatpush1.msra.mxu0 %v708
        %721 = vmatprep.subr.mxu0 0.0
        %722 = vmatpush1.msra.mxu0 0.0
        %723 = vmatprep.subr.mxu0 0.0
        %724 = vmatpush1.msra.mxu0 0.0
        %725 = vmatprep.subr.mxu0 0.0
        %726 = vmatpush1.msra.mxu0 0.0
        %727 = vmatprep.subr.mxu0 0.0
        %728 = vmatpush1.msra.mxu0 0.0
        %729 = vmatprep.subr.mxu0 0.0
        %730 = vmatpush1.msra.mxu0 0.0
        %731 = vmatprep.subr.mxu0 0.0
        %732 = vmatpush1.msra.mxu0 0.0
        %733 = vmatprep.subr.mxu0 0.0
        %734 = vmatpush1.msra.mxu0 0.0
        %735 = vmatprep.subr.mxu0 0.0
        %736 = vmatpush1.msra.mxu0 0.0
        %737 = vmatprep.subr.mxu0 0.0
        %738 = vmatpush1.msra.mxu0 0.0
        %739 = vmatprep.subr.mxu0 0.0
        %740 = vmatpush1.msra.mxu0 0.0
        %741 = vmatprep.subr.mxu0 0.0
        %742 = vmatpush1.msra.mxu0 0.0
        %743 = vmatprep.subr.mxu0 0.0
        %744 = vmatpush1.msra.mxu0 0.0
        %745 = vmatprep.subr.mxu0 0.0
        %746 = vmatpush1.msra.mxu0 0.0
        %747 = vmatprep.subr.mxu0 0.0
        %748 = vmatpush1.msra.mxu0 0.0
        %749 = vmatprep.subr.mxu0 0.0
        %750 = vmatpush1.msra.mxu0 0.0
        %751 = vmatprep.subr.mxu0 0.0
        %752 = vmatpush1.msra.mxu0 0.0
        %753 = vmatprep.subr.mxu0 0.0
        %754 = vmatpush1.msra.mxu0 0.0
        %755 = vmatprep.subr.mxu0 0.0
        %756 = vmatpush1.msra.mxu0 0.0
        %757 = vmatprep.subr.mxu0 0.0
        %758 = vmatpush1.msra.mxu0 0.0
        %759 = vmatprep.subr.mxu0 0.0
        %760 = vmatpush1.msra.mxu0 0.0
        %761 = vmatprep.subr.mxu0 0.0
        %762 = vmatpush1.msra.mxu0 0.0
        %763 = vmatprep.subr.mxu0 0.0
        %764 = vmatpush1.msra.mxu0 0.0
        %765 = vmatprep.subr.mxu0 0.0
        %766 = vmatpush1.msra.mxu0 0.0
        %767 = vmatprep.subr.mxu0 0.0
        %768 = vmatpush1.msra.mxu0 0.0
        %769 = vmatprep.subr.mxu0 0.0
        %770 = vmatpush1.msra.mxu0 0.0
        %771 = vmatprep.subr.mxu0 0.0
        %772 = vmatpush1.msra.mxu0 0.0
        %773 = vmatprep.subr.mxu0 0.0
        %774 = vmatpush1.msra.mxu0 0.0
        %775 = vmatprep.subr.mxu0 0.0
        %776 = vmatpush1.msra.mxu0 0.0
        %777 = vmatprep.mubr.f32.mxu0 0.0
        %778 = vmatmul.mubr.f32.gmra.mrb[0].mxu0 %v711
        %v779 = vpop.f32.mrb[0].mxu0
        %v780 = vadd.f32 0.0, %v779
        %v781 = vpop.f32.mrb[0].mxu0
        %v782 = vadd.f32 0.0, %v781
        %783 = vdwg.mxu0
        %v784 = vadd.f32 %v697, %v780
        %v785 = vadd.f32 %v698, %v782
        %v786 = vld [vmem:[%s442 + $0x1] sm:$0x7f]
        %s787 = scalar_lea.vmem [#allocation2], 256
        %v788 = vld [vmem:[%s787] sm:$0xff]
        %v789 = vld [vmem:[%s787 + $0x8] sm:$0xff]
        %v790 = vld [vmem:[%s787 + $0x10] sm:$0xff]
        %v791 = vld [vmem:[%s787 + $0x18] sm:$0xff]
        %v792 = vld [vmem:[%s787 + $0x20] sm:$0xff]
        %v793 = vld [vmem:[%s787 + $0x28] sm:$0xff]
        %v794 = vld [vmem:[%s787 + $0x30] sm:$0xff]
        %v795 = vld [vmem:[%s787 + $0x38] sm:$0xff]
        %v797 = vsel %vm463, %v786, 0
        %799 = vmatprep.subr.mxu0 %v789
        %800 = vmatpush1.msra.mxu0 %v788
        %801 = vmatprep.subr.mxu0 %v791
        %802 = vmatpush1.msra.mxu0 %v790
        %803 = vmatprep.subr.mxu0 %v793
        %804 = vmatpush1.msra.mxu0 %v792
        %805 = vmatprep.subr.mxu0 %v795
        %806 = vmatpush1.msra.mxu0 %v794
        %807 = vmatprep.subr.mxu0 0.0
        %808 = vmatpush1.msra.mxu0 0.0
        %809 = vmatprep.subr.mxu0 0.0
        %810 = vmatpush1.msra.mxu0 0.0
        %811 = vmatprep.subr.mxu0 0.0
        %812 = vmatpush1.msra.mxu0 0.0
        %813 = vmatprep.subr.mxu0 0.0
        %814 = vmatpush1.msra.mxu0 0.0
        %815 = vmatprep.subr.mxu0 0.0
        %816 = vmatpush1.msra.mxu0 0.0
        %817 = vmatprep.subr.mxu0 0.0
        %818 = vmatpush1.msra.mxu0 0.0
        %819 = vmatprep.subr.mxu0 0.0
        %820 = vmatpush1.msra.mxu0 0.0
        %821 = vmatprep.subr.mxu0 0.0
        %822 = vmatpush1.msra.mxu0 0.0
        %823 = vmatprep.subr.mxu0 0.0
        %824 = vmatpush1.msra.mxu0 0.0
        %825 = vmatprep.subr.mxu0 0.0
        %826 = vmatpush1.msra.mxu0 0.0
        %827 = vmatprep.subr.mxu0 0.0
        %828 = vmatpush1.msra.mxu0 0.0
        %829 = vmatprep.subr.mxu0 0.0
        %830 = vmatpush1.msra.mxu0 0.0
        %831 = vmatprep.subr.mxu0 0.0
        %832 = vmatpush1.msra.mxu0 0.0
        %833 = vmatprep.subr.mxu0 0.0
        %834 = vmatpush1.msra.mxu0 0.0
        %835 = vmatprep.subr.mxu0 0.0
        %836 = vmatpush1.msra.mxu0 0.0
        %837 = vmatprep.subr.mxu0 0.0
        %838 = vmatpush1.msra.mxu0 0.0
        %839 = vmatprep.subr.mxu0 0.0
        %840 = vmatpush1.msra.mxu0 0.0
        %841 = vmatprep.subr.mxu0 0.0
        %842 = vmatpush1.msra.mxu0 0.0
        %843 = vmatprep.subr.mxu0 0.0
        %844 = vmatpush1.msra.mxu0 0.0
        %845 = vmatprep.subr.mxu0 0.0
        %846 = vmatpush1.msra.mxu0 0.0
        %847 = vmatprep.subr.mxu0 0.0
        %848 = vmatpush1.msra.mxu0 0.0
        %849 = vmatprep.subr.mxu0 0.0
        %850 = vmatpush1.msra.mxu0 0.0
        %851 = vmatprep.subr.mxu0 0.0
        %852 = vmatpush1.msra.mxu0 0.0
        %853 = vmatprep.subr.mxu0 0.0
        %854 = vmatpush1.msra.mxu0 0.0
        %855 = vmatprep.subr.mxu0 0.0
        %856 = vmatpush1.msra.mxu0 0.0
        %857 = vmatprep.subr.mxu0 0.0
        %858 = vmatpush1.msra.mxu0 0.0
        %859 = vmatprep.subr.mxu0 0.0
        %860 = vmatpush1.msra.mxu0 0.0
        %861 = vmatprep.subr.mxu0 0.0
        %862 = vmatpush1.msra.mxu0 0.0
        %863 = vmatprep.mubr.f32.mxu0 0.0
        %864 = vmatmul.mubr.f32.gmra.mrb[0].mxu0 %v797
        %v865 = vpop.f32.mrb[0].mxu0
        %v866 = vadd.f32 0.0, %v865
        %v867 = vpop.f32.mrb[0].mxu0
        %v868 = vadd.f32 0.0, %v867
        %869 = vdwg.mxu0
        %v870 = vadd.f32 %v784, %v866
        %v871 = vadd.f32 %v785, %v868
        %872 = vmatprep.subr.mxu0 %v456
        %873 = vmatpush1.msra.mxu0 %v455
        %874 = vmatprep.subr.mxu0 %v458
        %875 = vmatpush1.msra.mxu0 %v457
        %876 = vmatprep.subr.mxu0 %v460
        %877 = vmatpush1.msra.mxu0 %v459
        %878 = vmatprep.subr.mxu0 %v462
        %879 = vmatpush1.msra.mxu0 %v461
        %880 = vmatprep.subr.mxu0 0.0
        %881 = vmatpush1.msra.mxu0 0.0
        %882 = vmatprep.subr.mxu0 0.0
        %883 = vmatpush1.msra.mxu0 0.0
        %884 = vmatprep.subr.mxu0 0.0
        %885 = vmatpush1.msra.mxu0 0.0
        %886 = vmatprep.subr.mxu0 0.0
        %887 = vmatpush1.msra.mxu0 0.0
        %888 = vmatprep.subr.mxu0 0.0
        %889 = vmatpush1.msra.mxu0 0.0
        %890 = vmatprep.subr.mxu0 0.0
        %891 = vmatpush1.msra.mxu0 0.0
        %892 = vmatprep.subr.mxu0 0.0
        %893 = vmatpush1.msra.mxu0 0.0
        %894 = vmatprep.subr.mxu0 0.0
        %895 = vmatpush1.msra.mxu0 0.0
        %896 = vmatprep.subr.mxu0 0.0
        %897 = vmatpush1.msra.mxu0 0.0
        %898 = vmatprep.subr.mxu0 0.0
        %899 = vmatpush1.msra.mxu0 0.0
        %900 = vmatprep.subr.mxu0 0.0
        %901 = vmatpush1.msra.mxu0 0.0
        %902 = vmatprep.subr.mxu0 0.0
        %903 = vmatpush1.msra.mxu0 0.0
        %904 = vmatprep.subr.mxu0 0.0
        %905 = vmatpush1.msra.mxu0 0.0
        %906 = vmatprep.subr.mxu0 0.0
        %907 = vmatpush1.msra.mxu0 0.0
        %908 = vmatprep.subr.mxu0 0.0
        %909 = vmatpush1.msra.mxu0 0.0
        %910 = vmatprep.subr.mxu0 0.0
        %911 = vmatpush1.msra.mxu0 0.0
        %912 = vmatprep.subr.mxu0 0.0
        %913 = vmatpush1.msra.mxu0 0.0
        %914 = vmatprep.subr.mxu0 0.0
        %915 = vmatpush1.msra.mxu0 0.0
        %916 = vmatprep.subr.mxu0 0.0
        %917 = vmatpush1.msra.mxu0 0.0
        %918 = vmatprep.subr.mxu0 0.0
        %919 = vmatpush1.msra.mxu0 0.0
        %920 = vmatprep.subr.mxu0 0.0
        %921 = vmatpush1.msra.mxu0 0.0
        %922 = vmatprep.subr.mxu0 0.0
        %923 = vmatpush1.msra.mxu0 0.0
        %924 = vmatprep.subr.mxu0 0.0
        %925 = vmatpush1.msra.mxu0 0.0
        %926 = vmatprep.subr.mxu0 0.0
        %927 = vmatpush1.msra.mxu0 0.0
        %928 = vmatprep.subr.mxu0 0.0
        %929 = vmatpush1.msra.mxu0 0.0
        %930 = vmatprep.subr.mxu0 0.0
        %931 = vmatpush1.msra.mxu0 0.0
        %932 = vmatprep.subr.mxu0 0.0
        %933 = vmatpush1.msra.mxu0 0.0
        %934 = vmatprep.subr.mxu0 0.0
        %935 = vmatpush1.msra.mxu0 0.0
        %936 = vmatprep.mubr.f32.mxu0 0.0
        %937 = vmatmul.mubr.f32.gmra.mrb[0].mxu0 %v624
        %v938 = vpop.f32.mrb[0].mxu0
        %v939 = vadd.f32 0.0, %v938
        %v940 = vpop.f32.mrb[0].mxu0
        %v941 = vadd.f32 0.0, %v940
        %942 = vdwg.mxu0
        %943 = vmatprep.subr.mxu0 %v445
        %944 = vmatpush1.msra.mxu0 %v444
        %945 = vmatprep.subr.mxu0 %v447
        %946 = vmatpush1.msra.mxu0 %v446
        %947 = vmatprep.subr.mxu0 %v449
        %948 = vmatpush1.msra.mxu0 %v448
        %949 = vmatprep.subr.mxu0 %v451
        %950 = vmatpush1.msra.mxu0 %v450
        %951 = vmatprep.subr.mxu0 0.0
        %952 = vmatpush1.msra.mxu0 0.0
        %953 = vmatprep.subr.mxu0 0.0
        %954 = vmatpush1.msra.mxu0 0.0
        %955 = vmatprep.subr.mxu0 0.0
        %956 = vmatpush1.msra.mxu0 0.0
        %957 = vmatprep.subr.mxu0 0.0
        %958 = vmatpush1.msra.mxu0 0.0
        %959 = vmatprep.subr.mxu0 0.0
        %960 = vmatpush1.msra.mxu0 0.0
        %961 = vmatprep.subr.mxu0 0.0
        %962 = vmatpush1.msra.mxu0 0.0
        %963 = vmatprep.subr.mxu0 0.0
        %964 = vmatpush1.msra.mxu0 0.0
        %965 = vmatprep.subr.mxu0 0.0
        %966 = vmatpush1.msra.mxu0 0.0
        %967 = vmatprep.subr.mxu0 0.0
        %968 = vmatpush1.msra.mxu0 0.0
        %969 = vmatprep.subr.mxu0 0.0
        %970 = vmatpush1.msra.mxu0 0.0
        %971 = vmatprep.subr.mxu0 0.0
        %972 = vmatpush1.msra.mxu0 0.0
        %973 = vmatprep.subr.mxu0 0.0
        %974 = vmatpush1.msra.mxu0 0.0
        %975 = vmatprep.subr.mxu0 0.0
        %976 = vmatpush1.msra.mxu0 0.0
        %977 = vmatprep.subr.mxu0 0.0
        %978 = vmatpush1.msra.mxu0 0.0
        %979 = vmatprep.subr.mxu0 0.0
        %980 = vmatpush1.msra.mxu0 0.0
        %981 = vmatprep.subr.mxu0 0.0
        %982 = vmatpush1.msra.mxu0 0.0
        %983 = vmatprep.subr.mxu0 0.0
        %984 = vmatpush1.msra.mxu0 0.0
        %985 = vmatprep.subr.mxu0 0.0
        %986 = vmatpush1.msra.mxu0 0.0
        %987 = vmatprep.subr.mxu0 0.0
        %988 = vmatpush1.msra.mxu0 0.0
        %989 = vmatprep.subr.mxu0 0.0
        %990 = vmatpush1.msra.mxu0 0.0
        %991 = vmatprep.subr.mxu0 0.0
        %992 = vmatpush1.msra.mxu0 0.0
        %993 = vmatprep.subr.mxu0 0.0
        %994 = vmatpush1.msra.mxu0 0.0
        %995 = vmatprep.subr.mxu0 0.0
        %996 = vmatpush1.msra.mxu0 0.0
        %997 = vmatprep.subr.mxu0 0.0
        %998 = vmatpush1.msra.mxu0 0.0
        %999 = vmatprep.subr.mxu0 0.0
        %1000 = vmatpush1.msra.mxu0 0.0
        %1001 = vmatprep.subr.mxu0 0.0
        %1002 = vmatpush1.msra.mxu0 0.0
        %1003 = vmatprep.subr.mxu0 0.0
        %1004 = vmatpush1.msra.mxu0 0.0
        %1005 = vmatprep.subr.mxu0 0.0
        %1006 = vmatpush1.msra.mxu0 0.0
        %1007 = vmatprep.mubr.f32.mxu0 0.0
        %1008 = vmatmul.mubr.f32.gmra.mrb[0].mxu0 %v465
        %v1009 = vpop.f32.mrb[0].mxu0
        %v1010 = vadd.f32 %v939, %v1009
        %v1011 = vpop.f32.mrb[0].mxu0
        %v1012 = vadd.f32 %v941, %v1011
        %1013 = vdwg.mxu0
        %1014 = vmatprep.subr.mxu0 %v616
        %1015 = vmatpush1.msra.mxu0 %v615
        %1016 = vmatprep.subr.mxu0 %v618
        %1017 = vmatpush1.msra.mxu0 %v617
        %1018 = vmatprep.subr.mxu0 %v620
        %1019 = vmatpush1.msra.mxu0 %v619
        %1020 = vmatprep.subr.mxu0 %v622
        %1021 = vmatpush1.msra.mxu0 %v621
        %1022 = vmatprep.subr.mxu0 0.0
        %1023 = vmatpush1.msra.mxu0 0.0
        %1024 = vmatprep.subr.mxu0 0.0
        %1025 = vmatpush1.msra.mxu0 0.0
        %1026 = vmatprep.subr.mxu0 0.0
        %1027 = vmatpush1.msra.mxu0 0.0
        %1028 = vmatprep.subr.mxu0 0.0
        %1029 = vmatpush1.msra.mxu0 0.0
        %1030 = vmatprep.subr.mxu0 0.0
        %1031 = vmatpush1.msra.mxu0 0.0
        %1032 = vmatprep.subr.mxu0 0.0
        %1033 = vmatpush1.msra.mxu0 0.0
        %1034 = vmatprep.subr.mxu0 0.0
        %1035 = vmatpush1.msra.mxu0 0.0
        %1036 = vmatprep.subr.mxu0 0.0
        %1037 = vmatpush1.msra.mxu0 0.0
        %1038 = vmatprep.subr.mxu0 0.0
        %1039 = vmatpush1.msra.mxu0 0.0
        %1040 = vmatprep.subr.mxu0 0.0
        %1041 = vmatpush1.msra.mxu0 0.0
        %1042 = vmatprep.subr.mxu0 0.0
        %1043 = vmatpush1.msra.mxu0 0.0
        %1044 = vmatprep.subr.mxu0 0.0
        %1045 = vmatpush1.msra.mxu0 0.0
        %1046 = vmatprep.subr.mxu0 0.0
        %1047 = vmatpush1.msra.mxu0 0.0
        %1048 = vmatprep.subr.mxu0 0.0
        %1049 = vmatpush1.msra.mxu0 0.0
        %1050 = vmatprep.subr.mxu0 0.0
        %1051 = vmatpush1.msra.mxu0 0.0
        %1052 = vmatprep.subr.mxu0 0.0
        %1053 = vmatpush1.msra.mxu0 0.0
        %1054 = vmatprep.subr.mxu0 0.0
        %1055 = vmatpush1.msra.mxu0 0.0
        %1056 = vmatprep.subr.mxu0 0.0
        %1057 = vmatpush1.msra.mxu0 0.0
        %1058 = vmatprep.subr.mxu0 0.0
        %1059 = vmatpush1.msra.mxu0 0.0
        %1060 = vmatprep.subr.mxu0 0.0
        %1061 = vmatpush1.msra.mxu0 0.0
        %1062 = vmatprep.subr.mxu0 0.0
        %1063 = vmatpush1.msra.mxu0 0.0
        %1064 = vmatprep.subr.mxu0 0.0
        %1065 = vmatpush1.msra.mxu0 0.0
        %1066 = vmatprep.subr.mxu0 0.0
        %1067 = vmatpush1.msra.mxu0 0.0
        %1068 = vmatprep.subr.mxu0 0.0
        %1069 = vmatpush1.msra.mxu0 0.0
        %1070 = vmatprep.subr.mxu0 0.0
        %1071 = vmatpush1.msra.mxu0 0.0
        %1072 = vmatprep.subr.mxu0 0.0
        %1073 = vmatpush1.msra.mxu0 0.0
        %1074 = vmatprep.subr.mxu0 0.0
        %1075 = vmatpush1.msra.mxu0 0.0
        %1076 = vmatprep.subr.mxu0 0.0
        %1077 = vmatpush1.msra.mxu0 0.0
        %1078 = vmatprep.mubr.f32.mxu0 0.0
        %1079 = vmatmul.mubr.f32.gmra.mrb[0].mxu0 %v711
        %v1080 = vpop.f32.mrb[0].mxu0
        %v1081 = vadd.f32 0.0, %v1080
        %v1082 = vpop.f32.mrb[0].mxu0
        %v1083 = vadd.f32 0.0, %v1082
        %1084 = vdwg.mxu0
        %v1085 = vadd.f32 %v1010, %v1081
        %v1086 = vadd.f32 %v1012, %v1083
        %1087 = vmatprep.subr.mxu0 %v703
        %1088 = vmatpush1.msra.mxu0 %v702
        %1089 = vmatprep.subr.mxu0 %v705
        %1090 = vmatpush1.msra.mxu0 %v704
        %1091 = vmatprep.subr.mxu0 %v707
        %1092 = vmatpush1.msra.mxu0 %v706
        %1093 = vmatprep.subr.mxu0 %v709
        %1094 = vmatpush1.msra.mxu0 %v708
        %1095 = vmatprep.subr.mxu0 0.0
        %1096 = vmatpush1.msra.mxu0 0.0
        %1097 = vmatprep.subr.mxu0 0.0
        %1098 = vmatpush1.msra.mxu0 0.0
        %1099 = vmatprep.subr.mxu0 0.0
        %1100 = vmatpush1.msra.mxu0 0.0
        %1101 = vmatprep.subr.mxu0 0.0
        %1102 = vmatpush1.msra.mxu0 0.0
        %1103 = vmatprep.subr.mxu0 0.0
        %1104 = vmatpush1.msra.mxu0 0.0
        %1105 = vmatprep.subr.mxu0 0.0
        %1106 = vmatpush1.msra.mxu0 0.0
        %1107 = vmatprep.subr.mxu0 0.0
        %1108 = vmatpush1.msra.mxu0 0.0
        %1109 = vmatprep.subr.mxu0 0.0
        %1110 = vmatpush1.msra.mxu0 0.0
        %1111 = vmatprep.subr.mxu0 0.0
        %1112 = vmatpush1.msra.mxu0 0.0
        %1113 = vmatprep.subr.mxu0 0.0
        %1114 = vmatpush1.msra.mxu0 0.0
        %1115 = vmatprep.subr.mxu0 0.0
        %1116 = vmatpush1.msra.mxu0 0.0
        %1117 = vmatprep.subr.mxu0 0.0
        %1118 = vmatpush1.msra.mxu0 0.0
        %1119 = vmatprep.subr.mxu0 0.0
        %1120 = vmatpush1.msra.mxu0 0.0
        %1121 = vmatprep.subr.mxu0 0.0
        %1122 = vmatpush1.msra.mxu0 0.0
        %1123 = vmatprep.subr.mxu0 0.0
        %1124 = vmatpush1.msra.mxu0 0.0
        %1125 = vmatprep.subr.mxu0 0.0
        %1126 = vmatpush1.msra.mxu0 0.0
        %1127 = vmatprep.subr.mxu0 0.0
        %1128 = vmatpush1.msra.mxu0 0.0
        %1129 = vmatprep.subr.mxu0 0.0
        %1130 = vmatpush1.msra.mxu0 0.0
        %1131 = vmatprep.subr.mxu0 0.0
        %1132 = vmatpush1.msra.mxu0 0.0
        %1133 = vmatprep.subr.mxu0 0.0
        %1134 = vmatpush1.msra.mxu0 0.0
        %1135 = vmatprep.subr.mxu0 0.0
        %1136 = vmatpush1.msra.mxu0 0.0
        %1137 = vmatprep.subr.mxu0 0.0
        %1138 = vmatpush1.msra.mxu0 0.0
        %1139 = vmatprep.subr.mxu0 0.0
        %1140 = vmatpush1.msra.mxu0 0.0
        %1141 = vmatprep.subr.mxu0 0.0
        %1142 = vmatpush1.msra.mxu0 0.0
        %1143 = vmatprep.subr.mxu0 0.0
        %1144 = vmatpush1.msra.mxu0 0.0
        %1145 = vmatprep.subr.mxu0 0.0
        %1146 = vmatpush1.msra.mxu0 0.0
        %1147 = vmatprep.subr.mxu0 0.0
        %1148 = vmatpush1.msra.mxu0 0.0
        %1149 = vmatprep.subr.mxu0 0.0
        %1150 = vmatpush1.msra.mxu0 0.0
        %1151 = vmatprep.mubr.f32.mxu0 0.0
        %1152 = vmatmul.mubr.f32.gmra.mrb[0].mxu0 %v797
        %v1153 = vpop.f32.mrb[0].mxu0
        %v1154 = vadd.f32 0.0, %v1153
        %v1155 = vpop.f32.mrb[0].mxu0
        %v1156 = vadd.f32 0.0, %v1155
        %1157 = vdwg.mxu0
        %v1158 = vadd.f32 %v1085, %v1154
        %v1159 = vadd.f32 %v1086, %v1156
        %v1160 = vld [vmem:[%s452 + $0x1] sm:$0x7f]
        %v1162 = vsel %vm463, %v1160, 0
        %1164 = vmatprep.subr.mxu0 %v789
        %1165 = vmatpush1.msra.mxu0 %v788
        %1166 = vmatprep.subr.mxu0 %v791
        %1167 = vmatpush1.msra.mxu0 %v790
        %1168 = vmatprep.subr.mxu0 %v793
        %1169 = vmatpush1.msra.mxu0 %v792
        %1170 = vmatprep.subr.mxu0 %v795
        %1171 = vmatpush1.msra.mxu0 %v794
        %1172 = vmatprep.subr.mxu0 0.0
        %1173 = vmatpush1.msra.mxu0 0.0
        %1174 = vmatprep.subr.mxu0 0.0
        %1175 = vmatpush1.msra.mxu0 0.0
        %1176 = vmatprep.subr.mxu0 0.0
        %1177 = vmatpush1.msra.mxu0 0.0
        %1178 = vmatprep.subr.mxu0 0.0
        %1179 = vmatpush1.msra.mxu0 0.0
        %1180 = vmatprep.subr.mxu0 0.0
        %1181 = vmatpush1.msra.mxu0 0.0
        %1182 = vmatprep.subr.mxu0 0.0
        %1183 = vmatpush1.msra.mxu0 0.0
        %1184 = vmatprep.subr.mxu0 0.0
        %1185 = vmatpush1.msra.mxu0 0.0
        %1186 = vmatprep.subr.mxu0 0.0
        %1187 = vmatpush1.msra.mxu0 0.0
        %1188 = vmatprep.subr.mxu0 0.0
        %1189 = vmatpush1.msra.mxu0 0.0
        %1190 = vmatprep.subr.mxu0 0.0
        %1191 = vmatpush1.msra.mxu0 0.0
        %1192 = vmatprep.subr.mxu0 0.0
        %1193 = vmatpush1.msra.mxu0 0.0
        %1194 = vmatprep.subr.mxu0 0.0
        %1195 = vmatpush1.msra.mxu0 0.0
        %1196 = vmatprep.subr.mxu0 0.0
        %1197 = vmatpush1.msra.mxu0 0.0
        %1198 = vmatprep.subr.mxu0 0.0
        %1199 = vmatpush1.msra.mxu0 0.0
        %1200 = vmatprep.subr.mxu0 0.0
        %1201 = vmatpush1.msra.mxu0 0.0
        %1202 = vmatprep.subr.mxu0 0.0
        %1203 = vmatpush1.msra.mxu0 0.0
        %1204 = vmatprep.subr.mxu0 0.0
        %1205 = vmatpush1.msra.mxu0 0.0
        %1206 = vmatprep.subr.mxu0 0.0
        %1207 = vmatpush1.msra.mxu0 0.0
        %1208 = vmatprep.subr.mxu0 0.0
        %1209 = vmatpush1.msra.mxu0 0.0
        %1210 = vmatprep.subr.mxu0 0.0
        %1211 = vmatpush1.msra.mxu0 0.0
        %1212 = vmatprep.subr.mxu0 0.0
        %1213 = vmatpush1.msra.mxu0 0.0
        %1214 = vmatprep.subr.mxu0 0.0
        %1215 = vmatpush1.msra.mxu0 0.0
        %1216 = vmatprep.subr.mxu0 0.0
        %1217 = vmatpush1.msra.mxu0 0.0
        %1218 = vmatprep.subr.mxu0 0.0
        %1219 = vmatpush1.msra.mxu0 0.0
        %1220 = vmatprep.subr.mxu0 0.0
        %1221 = vmatpush1.msra.mxu0 0.0
        %1222 = vmatprep.subr.mxu0 0.0
        %1223 = vmatpush1.msra.mxu0 0.0
        %1224 = vmatprep.subr.mxu0 0.0
        %1225 = vmatpush1.msra.mxu0 0.0
        %1226 = vmatprep.subr.mxu0 0.0
        %1227 = vmatpush1.msra.mxu0 0.0
        %1228 = vmatprep.mubr.f32.mxu0 0.0
        %1229 = vmatmul.mubr.f32.gmra.mrb[0].mxu0 %v1162
        %v1230 = vpop.f32.mrb[0].mxu0
        %v1231 = vadd.f32 0.0, %v1230
        %v1232 = vpop.f32.mrb[0].mxu0
        %v1233 = vadd.f32 0.0, %v1232
        %1234 = vdwg.mxu0
        %v1235 = vadd.f32 %v1158, %v1231
        %v1236 = vadd.f32 %v1159, %v1233
        %1237 = vmatprep.subr.mxu0 %v456
        %1238 = vmatpush1.msra.mxu0 %v455
        %1239 = vmatprep.subr.mxu0 %v458
        %1240 = vmatpush1.msra.mxu0 %v457
        %1241 = vmatprep.subr.mxu0 %v460
        %1242 = vmatpush1.msra.mxu0 %v459
        %1243 = vmatprep.subr.mxu0 %v462
        %1244 = vmatpush1.msra.mxu0 %v461
        %1245 = vmatprep.subr.mxu0 0.0
        %1246 = vmatpush1.msra.mxu0 0.0
        %1247 = vmatprep.subr.mxu0 0.0
        %1248 = vmatpush1.msra.mxu0 0.0
        %1249 = vmatprep.subr.mxu0 0.0
        %1250 = vmatpush1.msra.mxu0 0.0
        %1251 = vmatprep.subr.mxu0 0.0
        %1252 = vmatpush1.msra.mxu0 0.0
        %1253 = vmatprep.subr.mxu0 0.0
        %1254 = vmatpush1.msra.mxu0 0.0
        %1255 = vmatprep.subr.mxu0 0.0
        %1256 = vmatpush1.msra.mxu0 0.0
        %1257 = vmatprep.subr.mxu0 0.0
        %1258 = vmatpush1.msra.mxu0 0.0
        %1259 = vmatprep.subr.mxu0 0.0
        %1260 = vmatpush1.msra.mxu0 0.0
        %1261 = vmatprep.subr.mxu0 0.0
        %1262 = vmatpush1.msra.mxu0 0.0
        %1263 = vmatprep.subr.mxu0 0.0
        %1264 = vmatpush1.msra.mxu0 0.0
        %1265 = vmatprep.subr.mxu0 0.0
        %1266 = vmatpush1.msra.mxu0 0.0
        %1267 = vmatprep.subr.mxu0 0.0
        %1268 = vmatpush1.msra.mxu0 0.0
        %1269 = vmatprep.subr.mxu0 0.0
        %1270 = vmatpush1.msra.mxu0 0.0
        %1271 = vmatprep.subr.mxu0 0.0
        %1272 = vmatpush1.msra.mxu0 0.0
        %1273 = vmatprep.subr.mxu0 0.0
        %1274 = vmatpush1.msra.mxu0 0.0
        %1275 = vmatprep.subr.mxu0 0.0
        %1276 = vmatpush1.msra.mxu0 0.0
        %1277 = vmatprep.subr.mxu0 0.0
        %1278 = vmatpush1.msra.mxu0 0.0
        %1279 = vmatprep.subr.mxu0 0.0
        %1280 = vmatpush1.msra.mxu0 0.0
        %1281 = vmatprep.subr.mxu0 0.0
        %1282 = vmatpush1.msra.mxu0 0.0
        %1283 = vmatprep.subr.mxu0 0.0
        %1284 = vmatpush1.msra.mxu0 0.0
        %1285 = vmatprep.subr.mxu0 0.0
        %1286 = vmatpush1.msra.mxu0 0.0
        %1287 = vmatprep.subr.mxu0 0.0
        %1288 = vmatpush1.msra.mxu0 0.0
        %1289 = vmatprep.subr.mxu0 0.0
        %1290 = vmatpush1.msra.mxu0 0.0
        %1291 = vmatprep.subr.mxu0 0.0
        %1292 = vmatpush1.msra.mxu0 0.0
        %1293 = vmatprep.subr.mxu0 0.0
        %1294 = vmatpush1.msra.mxu0 0.0
        %1295 = vmatprep.subr.mxu0 0.0
        %1296 = vmatpush1.msra.mxu0 0.0
        %1297 = vmatprep.subr.mxu0 0.0
        %1298 = vmatpush1.msra.mxu0 0.0
        %1299 = vmatprep.subr.mxu0 0.0
        %1300 = vmatpush1.msra.mxu0 0.0
        %1301 = vmatprep.mubr.f32.mxu0 0.0
        %1302 = vmatmul.mubr.f32.gmra.mrb[0].mxu0 %v711
        %v1303 = vpop.f32.mrb[0].mxu0
        %v1304 = vadd.f32 0.0, %v1303
        %v1305 = vpop.f32.mrb[0].mxu0
        %v1306 = vadd.f32 0.0, %v1305
        %1307 = vdwg.mxu0
        %1308 = vmatprep.subr.mxu0 %v445
        %1309 = vmatpush1.msra.mxu0 %v444
        %1310 = vmatprep.subr.mxu0 %v447
        %1311 = vmatpush1.msra.mxu0 %v446
        %1312 = vmatprep.subr.mxu0 %v449
        %1313 = vmatpush1.msra.mxu0 %v448
        %1314 = vmatprep.subr.mxu0 %v451
        %1315 = vmatpush1.msra.mxu0 %v450
        %1316 = vmatprep.subr.mxu0 0.0
        %1317 = vmatpush1.msra.mxu0 0.0
        %1318 = vmatprep.subr.mxu0 0.0
        %1319 = vmatpush1.msra.mxu0 0.0
        %1320 = vmatprep.subr.mxu0 0.0
        %1321 = vmatpush1.msra.mxu0 0.0
        %1322 = vmatprep.subr.mxu0 0.0
        %1323 = vmatpush1.msra.mxu0 0.0
        %1324 = vmatprep.subr.mxu0 0.0
        %1325 = vmatpush1.msra.mxu0 0.0
        %1326 = vmatprep.subr.mxu0 0.0
        %1327 = vmatpush1.msra.mxu0 0.0
        %1328 = vmatprep.subr.mxu0 0.0
        %1329 = vmatpush1.msra.mxu0 0.0
        %1330 = vmatprep.subr.mxu0 0.0
        %1331 = vmatpush1.msra.mxu0 0.0
        %1332 = vmatprep.subr.mxu0 0.0
        %1333 = vmatpush1.msra.mxu0 0.0
        %1334 = vmatprep.subr.mxu0 0.0
        %1335 = vmatpush1.msra.mxu0 0.0
        %1336 = vmatprep.subr.mxu0 0.0
        %1337 = vmatpush1.msra.mxu0 0.0
        %1338 = vmatprep.subr.mxu0 0.0
        %1339 = vmatpush1.msra.mxu0 0.0
        %1340 = vmatprep.subr.mxu0 0.0
        %1341 = vmatpush1.msra.mxu0 0.0
        %1342 = vmatprep.subr.mxu0 0.0
        %1343 = vmatpush1.msra.mxu0 0.0
        %1344 = vmatprep.subr.mxu0 0.0
        %1345 = vmatpush1.msra.mxu0 0.0
        %1346 = vmatprep.subr.mxu0 0.0
        %1347 = vmatpush1.msra.mxu0 0.0
        %1348 = vmatprep.subr.mxu0 0.0
        %1349 = vmatpush1.msra.mxu0 0.0
        %1350 = vmatprep.subr.mxu0 0.0
        %1351 = vmatpush1.msra.mxu0 0.0
        %1352 = vmatprep.subr.mxu0 0.0
        %1353 = vmatpush1.msra.mxu0 0.0
        %1354 = vmatprep.subr.mxu0 0.0
        %1355 = vmatpush1.msra.mxu0 0.0
        %1356 = vmatprep.subr.mxu0 0.0
        %1357 = vmatpush1.msra.mxu0 0.0
        %1358 = vmatprep.subr.mxu0 0.0
        %1359 = vmatpush1.msra.mxu0 0.0
        %1360 = vmatprep.subr.mxu0 0.0
        %1361 = vmatpush1.msra.mxu0 0.0
        %1362 = vmatprep.subr.mxu0 0.0
        %1363 = vmatpush1.msra.mxu0 0.0
        %1364 = vmatprep.subr.mxu0 0.0
        %1365 = vmatpush1.msra.mxu0 0.0
        %1366 = vmatprep.subr.mxu0 0.0
        %1367 = vmatpush1.msra.mxu0 0.0
        %1368 = vmatprep.subr.mxu0 0.0
        %1369 = vmatpush1.msra.mxu0 0.0
        %1370 = vmatprep.subr.mxu0 0.0
        %1371 = vmatpush1.msra.mxu0 0.0
        %1372 = vmatprep.mubr.f32.mxu0 0.0
        %1373 = vmatmul.mubr.f32.gmra.mrb[0].mxu0 %v624
        %v1374 = vpop.f32.mrb[0].mxu0
        %v1375 = vadd.f32 %v1304, %v1374
        %v1376 = vpop.f32.mrb[0].mxu0
        %v1377 = vadd.f32 %v1306, %v1376
        %1378 = vdwg.mxu0
        %1379 = vmatprep.subr.mxu0 %v616
        %1380 = vmatpush1.msra.mxu0 %v615
        %1381 = vmatprep.subr.mxu0 %v618
        %1382 = vmatpush1.msra.mxu0 %v617
        %1383 = vmatprep.subr.mxu0 %v620
        %1384 = vmatpush1.msra.mxu0 %v619
        %1385 = vmatprep.subr.mxu0 %v622
        %1386 = vmatpush1.msra.mxu0 %v621
        %1387 = vmatprep.subr.mxu0 0.0
        %1388 = vmatpush1.msra.mxu0 0.0
        %1389 = vmatprep.subr.mxu0 0.0
        %1390 = vmatpush1.msra.mxu0 0.0
        %1391 = vmatprep.subr.mxu0 0.0
        %1392 = vmatpush1.msra.mxu0 0.0
        %1393 = vmatprep.subr.mxu0 0.0
        %1394 = vmatpush1.msra.mxu0 0.0
        %1395 = vmatprep.subr.mxu0 0.0
        %1396 = vmatpush1.msra.mxu0 0.0
        %1397 = vmatprep.subr.mxu0 0.0
        %1398 = vmatpush1.msra.mxu0 0.0
        %1399 = vmatprep.subr.mxu0 0.0
        %1400 = vmatpush1.msra.mxu0 0.0
        %1401 = vmatprep.subr.mxu0 0.0
        %1402 = vmatpush1.msra.mxu0 0.0
        %1403 = vmatprep.subr.mxu0 0.0
        %1404 = vmatpush1.msra.mxu0 0.0
        %1405 = vmatprep.subr.mxu0 0.0
        %1406 = vmatpush1.msra.mxu0 0.0
        %1407 = vmatprep.subr.mxu0 0.0
        %1408 = vmatpush1.msra.mxu0 0.0
        %1409 = vmatprep.subr.mxu0 0.0
        %1410 = vmatpush1.msra.mxu0 0.0
        %1411 = vmatprep.subr.mxu0 0.0
        %1412 = vmatpush1.msra.mxu0 0.0
        %1413 = vmatprep.subr.mxu0 0.0
        %1414 = vmatpush1.msra.mxu0 0.0
        %1415 = vmatprep.subr.mxu0 0.0
        %1416 = vmatpush1.msra.mxu0 0.0
        %1417 = vmatprep.subr.mxu0 0.0
        %1418 = vmatpush1.msra.mxu0 0.0
        %1419 = vmatprep.subr.mxu0 0.0
        %1420 = vmatpush1.msra.mxu0 0.0
        %1421 = vmatprep.subr.mxu0 0.0
        %1422 = vmatpush1.msra.mxu0 0.0
        %1423 = vmatprep.subr.mxu0 0.0
        %1424 = vmatpush1.msra.mxu0 0.0
        %1425 = vmatprep.subr.mxu0 0.0
        %1426 = vmatpush1.msra.mxu0 0.0
        %1427 = vmatprep.subr.mxu0 0.0
        %1428 = vmatpush1.msra.mxu0 0.0
        %1429 = vmatprep.subr.mxu0 0.0
        %1430 = vmatpush1.msra.mxu0 0.0
        %1431 = vmatprep.subr.mxu0 0.0
        %1432 = vmatpush1.msra.mxu0 0.0
        %1433 = vmatprep.subr.mxu0 0.0
        %1434 = vmatpush1.msra.mxu0 0.0
        %1435 = vmatprep.subr.mxu0 0.0
        %1436 = vmatpush1.msra.mxu0 0.0
        %1437 = vmatprep.subr.mxu0 0.0
        %1438 = vmatpush1.msra.mxu0 0.0
        %1439 = vmatprep.subr.mxu0 0.0
        %1440 = vmatpush1.msra.mxu0 0.0
        %1441 = vmatprep.subr.mxu0 0.0
        %1442 = vmatpush1.msra.mxu0 0.0
        %1443 = vmatprep.mubr.f32.mxu0 0.0
        %1444 = vmatmul.mubr.f32.gmra.mrb[0].mxu0 %v797
        %v1445 = vpop.f32.mrb[0].mxu0
        %v1446 = vadd.f32 0.0, %v1445
        %v1447 = vpop.f32.mrb[0].mxu0
        %v1448 = vadd.f32 0.0, %v1447
        %1449 = vdwg.mxu0
        %v1450 = vadd.f32 %v1375, %v1446
        %v1451 = vadd.f32 %v1377, %v1448
        %1452 = vmatprep.subr.mxu0 %v703
        %1453 = vmatpush1.msra.mxu0 %v702
        %1454 = vmatprep.subr.mxu0 %v705
        %1455 = vmatpush1.msra.mxu0 %v704
        %1456 = vmatprep.subr.mxu0 %v707
        %1457 = vmatpush1.msra.mxu0 %v706
        %1458 = vmatprep.subr.mxu0 %v709
        %1459 = vmatpush1.msra.mxu0 %v708
        %1460 = vmatprep.subr.mxu0 0.0
        %1461 = vmatpush1.msra.mxu0 0.0
        %1462 = vmatprep.subr.mxu0 0.0
        %1463 = vmatpush1.msra.mxu0 0.0
        %1464 = vmatprep.subr.mxu0 0.0
        %1465 = vmatpush1.msra.mxu0 0.0
        %1466 = vmatprep.subr.mxu0 0.0
        %1467 = vmatpush1.msra.mxu0 0.0
        %1468 = vmatprep.subr.mxu0 0.0
        %1469 = vmatpush1.msra.mxu0 0.0
        %1470 = vmatprep.subr.mxu0 0.0
        %1471 = vmatpush1.msra.mxu0 0.0
        %1472 = vmatprep.subr.mxu0 0.0
        %1473 = vmatpush1.msra.mxu0 0.0
        %1474 = vmatprep.subr.mxu0 0.0
        %1475 = vmatpush1.msra.mxu0 0.0
        %1476 = vmatprep.subr.mxu0 0.0
        %1477 = vmatpush1.msra.mxu0 0.0
        %1478 = vmatprep.subr.mxu0 0.0
        %1479 = vmatpush1.msra.mxu0 0.0
        %1480 = vmatprep.subr.mxu0 0.0
        %1481 = vmatpush1.msra.mxu0 0.0
        %1482 = vmatprep.subr.mxu0 0.0
        %1483 = vmatpush1.msra.mxu0 0.0
        %1484 = vmatprep.subr.mxu0 0.0
        %1485 = vmatpush1.msra.mxu0 0.0
        %1486 = vmatprep.subr.mxu0 0.0
        %1487 = vmatpush1.msra.mxu0 0.0
        %1488 = vmatprep.subr.mxu0 0.0
        %1489 = vmatpush1.msra.mxu0 0.0
        %1490 = vmatprep.subr.mxu0 0.0
        %1491 = vmatpush1.msra.mxu0 0.0
        %1492 = vmatprep.subr.mxu0 0.0
        %1493 = vmatpush1.msra.mxu0 0.0
        %1494 = vmatprep.subr.mxu0 0.0
        %1495 = vmatpush1.msra.mxu0 0.0
        %1496 = vmatprep.subr.mxu0 0.0
        %1497 = vmatpush1.msra.mxu0 0.0
        %1498 = vmatprep.subr.mxu0 0.0
        %1499 = vmatpush1.msra.mxu0 0.0
        %1500 = vmatprep.subr.mxu0 0.0
        %1501 = vmatpush1.msra.mxu0 0.0
        %1502 = vmatprep.subr.mxu0 0.0
        %1503 = vmatpush1.msra.mxu0 0.0
        %1504 = vmatprep.subr.mxu0 0.0
        %1505 = vmatpush1.msra.mxu0 0.0
        %1506 = vmatprep.subr.mxu0 0.0
        %1507 = vmatpush1.msra.mxu0 0.0
        %1508 = vmatprep.subr.mxu0 0.0
        %1509 = vmatpush1.msra.mxu0 0.0
        %1510 = vmatprep.subr.mxu0 0.0
        %1511 = vmatpush1.msra.mxu0 0.0
        %1512 = vmatprep.subr.mxu0 0.0
        %1513 = vmatpush1.msra.mxu0 0.0
        %1514 = vmatprep.subr.mxu0 0.0
        %1515 = vmatpush1.msra.mxu0 0.0
        %1516 = vmatprep.mubr.f32.mxu0 0.0
        %1517 = vmatmul.mubr.f32.gmra.mrb[0].mxu0 %v1162
        %v1518 = vpop.f32.mrb[0].mxu0
        %v1519 = vadd.f32 0.0, %v1518
        %v1520 = vpop.f32.mrb[0].mxu0
        %v1521 = vadd.f32 0.0, %v1520
        %1522 = vdwg.mxu0
        %v1523 = vadd.f32 %v1450, %v1519
        %v1524 = vadd.f32 %v1451, %v1521
        %v1525 = vld [vmem:[%s612 + $0x1] sm:$0x7f]
        %v1527 = vsel %vm463, %v1525, 0
        %1529 = vmatprep.subr.mxu0 %v789
        %1530 = vmatpush1.msra.mxu0 %v788
        %1531 = vmatprep.subr.mxu0 %v791
        %1532 = vmatpush1.msra.mxu0 %v790
        %1533 = vmatprep.subr.mxu0 %v793
        %1534 = vmatpush1.msra.mxu0 %v792
        %1535 = vmatprep.subr.mxu0 %v795
        %1536 = vmatpush1.msra.mxu0 %v794
        %1537 = vmatprep.subr.mxu0 0.0
        %1538 = vmatpush1.msra.mxu0 0.0
        %1539 = vmatprep.subr.mxu0 0.0
        %1540 = vmatpush1.msra.mxu0 0.0
        %1541 = vmatprep.subr.mxu0 0.0
        %1542 = vmatpush1.msra.mxu0 0.0
        %1543 = vmatprep.subr.mxu0 0.0
        %1544 = vmatpush1.msra.mxu0 0.0
        %1545 = vmatprep.subr.mxu0 0.0
        %1546 = vmatpush1.msra.mxu0 0.0
        %1547 = vmatprep.subr.mxu0 0.0
        %1548 = vmatpush1.msra.mxu0 0.0
        %1549 = vmatprep.subr.mxu0 0.0
        %1550 = vmatpush1.msra.mxu0 0.0
        %1551 = vmatprep.subr.mxu0 0.0
        %1552 = vmatpush1.msra.mxu0 0.0
        %1553 = vmatprep.subr.mxu0 0.0
        %1554 = vmatpush1.msra.mxu0 0.0
        %1555 = vmatprep.subr.mxu0 0.0
        %1556 = vmatpush1.msra.mxu0 0.0
        %1557 = vmatprep.subr.mxu0 0.0
        %1558 = vmatpush1.msra.mxu0 0.0
        %1559 = vmatprep.subr.mxu0 0.0
        %1560 = vmatpush1.msra.mxu0 0.0
        %1561 = vmatprep.subr.mxu0 0.0
        %1562 = vmatpush1.msra.mxu0 0.0
        %1563 = vmatprep.subr.mxu0 0.0
        %1564 = vmatpush1.msra.mxu0 0.0
        %1565 = vmatprep.subr.mxu0 0.0
        %1566 = vmatpush1.msra.mxu0 0.0
        %1567 = vmatprep.subr.mxu0 0.0
        %1568 = vmatpush1.msra.mxu0 0.0
        %1569 = vmatprep.subr.mxu0 0.0
        %1570 = vmatpush1.msra.mxu0 0.0
        %1571 = vmatprep.subr.mxu0 0.0
        %1572 = vmatpush1.msra.mxu0 0.0
        %1573 = vmatprep.subr.mxu0 0.0
        %1574 = vmatpush1.msra.mxu0 0.0
        %1575 = vmatprep.subr.mxu0 0.0
        %1576 = vmatpush1.msra.mxu0 0.0
        %1577 = vmatprep.subr.mxu0 0.0
        %1578 = vmatpush1.msra.mxu0 0.0
        %1579 = vmatprep.subr.mxu0 0.0
        %1580 = vmatpush1.msra.mxu0 0.0
        %1581 = vmatprep.subr.mxu0 0.0
        %1582 = vmatpush1.msra.mxu0 0.0
        %1583 = vmatprep.subr.mxu0 0.0
        %1584 = vmatpush1.msra.mxu0 0.0
        %1585 = vmatprep.subr.mxu0 0.0
        %1586 = vmatpush1.msra.mxu0 0.0
        %1587 = vmatprep.subr.mxu0 0.0
        %1588 = vmatpush1.msra.mxu0 0.0
        %1589 = vmatprep.subr.mxu0 0.0
        %1590 = vmatpush1.msra.mxu0 0.0
        %1591 = vmatprep.subr.mxu0 0.0
        %1592 = vmatpush1.msra.mxu0 0.0
        %1593 = vmatprep.mubr.f32.mxu0 0.0
        %1594 = vmatmul.mubr.f32.gmra.mrb[0].mxu0 %v1527
        %v1595 = vpop.f32.mrb[0].mxu0
        %v1596 = vadd.f32 0.0, %v1595
        %v1597 = vpop.f32.mrb[0].mxu0
        %v1598 = vadd.f32 0.0, %v1597
        %1599 = vdwg.mxu0
        %v1600 = vadd.f32 %v1523, %v1596
        %v1601 = vadd.f32 %v1524, %v1598
        %1602 = vmatprep.subr.mxu0 %v456
        %1603 = vmatpush1.msra.mxu0 %v455
        %1604 = vmatprep.subr.mxu0 %v458
        %1605 = vmatpush1.msra.mxu0 %v457
        %1606 = vmatprep.subr.mxu0 %v460
        %1607 = vmatpush1.msra.mxu0 %v459
        %1608 = vmatprep.subr.mxu0 %v462
        %1609 = vmatpush1.msra.mxu0 %v461
        %1610 = vmatprep.subr.mxu0 0.0
        %1611 = vmatpush1.msra.mxu0 0.0
        %1612 = vmatprep.subr.mxu0 0.0
        %1613 = vmatpush1.msra.mxu0 0.0
        %1614 = vmatprep.subr.mxu0 0.0
        %1615 = vmatpush1.msra.mxu0 0.0
        %1616 = vmatprep.subr.mxu0 0.0
        %1617 = vmatpush1.msra.mxu0 0.0
        %1618 = vmatprep.subr.mxu0 0.0
        %1619 = vmatpush1.msra.mxu0 0.0
        %1620 = vmatprep.subr.mxu0 0.0
        %1621 = vmatpush1.msra.mxu0 0.0
        %1622 = vmatprep.subr.mxu0 0.0
        %1623 = vmatpush1.msra.mxu0 0.0
        %1624 = vmatprep.subr.mxu0 0.0
        %1625 = vmatpush1.msra.mxu0 0.0
        %1626 = vmatprep.subr.mxu0 0.0
        %1627 = vmatpush1.msra.mxu0 0.0
        %1628 = vmatprep.subr.mxu0 0.0
        %1629 = vmatpush1.msra.mxu0 0.0
        %1630 = vmatprep.subr.mxu0 0.0
        %1631 = vmatpush1.msra.mxu0 0.0
        %1632 = vmatprep.subr.mxu0 0.0
        %1633 = vmatpush1.msra.mxu0 0.0
        %1634 = vmatprep.subr.mxu0 0.0
        %1635 = vmatpush1.msra.mxu0 0.0
        %1636 = vmatprep.subr.mxu0 0.0
        %1637 = vmatpush1.msra.mxu0 0.0
        %1638 = vmatprep.subr.mxu0 0.0
        %1639 = vmatpush1.msra.mxu0 0.0
        %1640 = vmatprep.subr.mxu0 0.0
        %1641 = vmatpush1.msra.mxu0 0.0
        %1642 = vmatprep.subr.mxu0 0.0
        %1643 = vmatpush1.msra.mxu0 0.0
        %1644 = vmatprep.subr.mxu0 0.0
        %1645 = vmatpush1.msra.mxu0 0.0
        %1646 = vmatprep.subr.mxu0 0.0
        %1647 = vmatpush1.msra.mxu0 0.0
        %1648 = vmatprep.subr.mxu0 0.0
        %1649 = vmatpush1.msra.mxu0 0.0
        %1650 = vmatprep.subr.mxu0 0.0
        %1651 = vmatpush1.msra.mxu0 0.0
        %1652 = vmatprep.subr.mxu0 0.0
        %1653 = vmatpush1.msra.mxu0 0.0
        %1654 = vmatprep.subr.mxu0 0.0
        %1655 = vmatpush1.msra.mxu0 0.0
        %1656 = vmatprep.subr.mxu0 0.0
        %1657 = vmatpush1.msra.mxu0 0.0
        %1658 = vmatprep.subr.mxu0 0.0
        %1659 = vmatpush1.msra.mxu0 0.0
        %1660 = vmatprep.subr.mxu0 0.0
        %1661 = vmatpush1.msra.mxu0 0.0
        %1662 = vmatprep.subr.mxu0 0.0
        %1663 = vmatpush1.msra.mxu0 0.0
        %1664 = vmatprep.subr.mxu0 0.0
        %1665 = vmatpush1.msra.mxu0 0.0
        %1666 = vmatprep.mubr.f32.mxu0 0.0
        %1667 = vmatmul.mubr.f32.gmra.mrb[0].mxu0 %v797
        %v1668 = vpop.f32.mrb[0].mxu0
        %v1669 = vadd.f32 0.0, %v1668
        %v1670 = vpop.f32.mrb[0].mxu0
        %v1671 = vadd.f32 0.0, %v1670
        %1672 = vdwg.mxu0
        %1673 = vmatprep.subr.mxu0 %v445
        %1674 = vmatpush1.msra.mxu0 %v444
        %1675 = vmatprep.subr.mxu0 %v447
        %1676 = vmatpush1.msra.mxu0 %v446
        %1677 = vmatprep.subr.mxu0 %v449
        %1678 = vmatpush1.msra.mxu0 %v448
        %1679 = vmatprep.subr.mxu0 %v451
        %1680 = vmatpush1.msra.mxu0 %v450
        %1681 = vmatprep.subr.mxu0 0.0
        %1682 = vmatpush1.msra.mxu0 0.0
        %1683 = vmatprep.subr.mxu0 0.0
        %1684 = vmatpush1.msra.mxu0 0.0
        %1685 = vmatprep.subr.mxu0 0.0
        %1686 = vmatpush1.msra.mxu0 0.0
        %1687 = vmatprep.subr.mxu0 0.0
        %1688 = vmatpush1.msra.mxu0 0.0
        %1689 = vmatprep.subr.mxu0 0.0
        %1690 = vmatpush1.msra.mxu0 0.0
        %1691 = vmatprep.subr.mxu0 0.0
        %1692 = vmatpush1.msra.mxu0 0.0
        %1693 = vmatprep.subr.mxu0 0.0
        %1694 = vmatpush1.msra.mxu0 0.0
        %1695 = vmatprep.subr.mxu0 0.0
        %1696 = vmatpush1.msra.mxu0 0.0
        %1697 = vmatprep.subr.mxu0 0.0
        %1698 = vmatpush1.msra.mxu0 0.0
        %1699 = vmatprep.subr.mxu0 0.0
        %1700 = vmatpush1.msra.mxu0 0.0
        %1701 = vmatprep.subr.mxu0 0.0
        %1702 = vmatpush1.msra.mxu0 0.0
        %1703 = vmatprep.subr.mxu0 0.0
        %1704 = vmatpush1.msra.mxu0 0.0
        %1705 = vmatprep.subr.mxu0 0.0
        %1706 = vmatpush1.msra.mxu0 0.0
        %1707 = vmatprep.subr.mxu0 0.0
        %1708 = vmatpush1.msra.mxu0 0.0
        %1709 = vmatprep.subr.mxu0 0.0
        %1710 = vmatpush1.msra.mxu0 0.0
        %1711 = vmatprep.subr.mxu0 0.0
        %1712 = vmatpush1.msra.mxu0 0.0
        %1713 = vmatprep.subr.mxu0 0.0
        %1714 = vmatpush1.msra.mxu0 0.0
        %1715 = vmatprep.subr.mxu0 0.0
        %1716 = vmatpush1.msra.mxu0 0.0
        %1717 = vmatprep.subr.mxu0 0.0
        %1718 = vmatpush1.msra.mxu0 0.0
        %1719 = vmatprep.subr.mxu0 0.0
        %1720 = vmatpush1.msra.mxu0 0.0
        %1721 = vmatprep.subr.mxu0 0.0
        %1722 = vmatpush1.msra.mxu0 0.0
        %1723 = vmatprep.subr.mxu0 0.0
        %1724 = vmatpush1.msra.mxu0 0.0
        %1725 = vmatprep.subr.mxu0 0.0
        %1726 = vmatpush1.msra.mxu0 0.0
        %1727 = vmatprep.subr.mxu0 0.0
        %1728 = vmatpush1.msra.mxu0 0.0
        %1729 = vmatprep.subr.mxu0 0.0
        %1730 = vmatpush1.msra.mxu0 0.0
        %1731 = vmatprep.subr.mxu0 0.0
        %1732 = vmatpush1.msra.mxu0 0.0
        %1733 = vmatprep.subr.mxu0 0.0
        %1734 = vmatpush1.msra.mxu0 0.0
        %1735 = vmatprep.subr.mxu0 0.0
        %1736 = vmatpush1.msra.mxu0 0.0
        %1737 = vmatprep.mubr.f32.mxu0 0.0
        %1738 = vmatmul.mubr.f32.gmra.mrb[0].mxu0 %v711
        %v1739 = vpop.f32.mrb[0].mxu0
        %v1740 = vadd.f32 %v1669, %v1739
        %v1741 = vpop.f32.mrb[0].mxu0
        %v1742 = vadd.f32 %v1671, %v1741
        %1743 = vdwg.mxu0
        %1744 = vmatprep.subr.mxu0 %v616
        %1745 = vmatpush1.msra.mxu0 %v615
        %1746 = vmatprep.subr.mxu0 %v618
        %1747 = vmatpush1.msra.mxu0 %v617
        %1748 = vmatprep.subr.mxu0 %v620
        %1749 = vmatpush1.msra.mxu0 %v619
        %1750 = vmatprep.subr.mxu0 %v622
        %1751 = vmatpush1.msra.mxu0 %v621
        %1752 = vmatprep.subr.mxu0 0.0
        %1753 = vmatpush1.msra.mxu0 0.0
        %1754 = vmatprep.subr.mxu0 0.0
        %1755 = vmatpush1.msra.mxu0 0.0
        %1756 = vmatprep.subr.mxu0 0.0
        %1757 = vmatpush1.msra.mxu0 0.0
        %1758 = vmatprep.subr.mxu0 0.0
        %1759 = vmatpush1.msra.mxu0 0.0
        %1760 = vmatprep.subr.mxu0 0.0
        %1761 = vmatpush1.msra.mxu0 0.0
        %1762 = vmatprep.subr.mxu0 0.0
        %1763 = vmatpush1.msra.mxu0 0.0
        %1764 = vmatprep.subr.mxu0 0.0
        %1765 = vmatpush1.msra.mxu0 0.0
        %1766 = vmatprep.subr.mxu0 0.0
        %1767 = vmatpush1.msra.mxu0 0.0
        %1768 = vmatprep.subr.mxu0 0.0
        %1769 = vmatpush1.msra.mxu0 0.0
        %1770 = vmatprep.subr.mxu0 0.0
        %1771 = vmatpush1.msra.mxu0 0.0
        %1772 = vmatprep.subr.mxu0 0.0
        %1773 = vmatpush1.msra.mxu0 0.0
        %1774 = vmatprep.subr.mxu0 0.0
        %1775 = vmatpush1.msra.mxu0 0.0
        %1776 = vmatprep.subr.mxu0 0.0
        %1777 = vmatpush1.msra.mxu0 0.0
        %1778 = vmatprep.subr.mxu0 0.0
        %1779 = vmatpush1.msra.mxu0 0.0
        %1780 = vmatprep.subr.mxu0 0.0
        %1781 = vmatpush1.msra.mxu0 0.0
        %1782 = vmatprep.subr.mxu0 0.0
        %1783 = vmatpush1.msra.mxu0 0.0
        %1784 = vmatprep.subr.mxu0 0.0
        %1785 = vmatpush1.msra.mxu0 0.0
        %1786 = vmatprep.subr.mxu0 0.0
        %1787 = vmatpush1.msra.mxu0 0.0
        %1788 = vmatprep.subr.mxu0 0.0
        %1789 = vmatpush1.msra.mxu0 0.0
        %1790 = vmatprep.subr.mxu0 0.0
        %1791 = vmatpush1.msra.mxu0 0.0
        %1792 = vmatprep.subr.mxu0 0.0
        %1793 = vmatpush1.msra.mxu0 0.0
        %1794 = vmatprep.subr.mxu0 0.0
        %1795 = vmatpush1.msra.mxu0 0.0
        %1796 = vmatprep.subr.mxu0 0.0
        %1797 = vmatpush1.msra.mxu0 0.0
        %1798 = vmatprep.subr.mxu0 0.0
        %1799 = vmatpush1.msra.mxu0 0.0
        %1800 = vmatprep.subr.mxu0 0.0
        %1801 = vmatpush1.msra.mxu0 0.0
        %1802 = vmatprep.subr.mxu0 0.0
        %1803 = vmatpush1.msra.mxu0 0.0
        %1804 = vmatprep.subr.mxu0 0.0
        %1805 = vmatpush1.msra.mxu0 0.0
        %1806 = vmatprep.subr.mxu0 0.0
        %1807 = vmatpush1.msra.mxu0 0.0
        %1808 = vmatprep.mubr.f32.mxu0 0.0
        %1809 = vmatmul.mubr.f32.gmra.mrb[0].mxu0 %v1162
        %v1810 = vpop.f32.mrb[0].mxu0
        %v1811 = vadd.f32 0.0, %v1810
        %v1812 = vpop.f32.mrb[0].mxu0
        %v1813 = vadd.f32 0.0, %v1812
        %1814 = vdwg.mxu0
        %v1815 = vadd.f32 %v1740, %v1811
        %v1816 = vadd.f32 %v1742, %v1813
        %1817 = vmatprep.subr.mxu0 %v703
        %1818 = vmatpush1.msra.mxu0 %v702
        %1819 = vmatprep.subr.mxu0 %v705
        %1820 = vmatpush1.msra.mxu0 %v704
        %1821 = vmatprep.subr.mxu0 %v707
        %1822 = vmatpush1.msra.mxu0 %v706
        %1823 = vmatprep.subr.mxu0 %v709
        %1824 = vmatpush1.msra.mxu0 %v708
        %1825 = vmatprep.subr.mxu0 0.0
        %1826 = vmatpush1.msra.mxu0 0.0
        %1827 = vmatprep.subr.mxu0 0.0
        %1828 = vmatpush1.msra.mxu0 0.0
        %1829 = vmatprep.subr.mxu0 0.0
        %1830 = vmatpush1.msra.mxu0 0.0
        %1831 = vmatprep.subr.mxu0 0.0
        %1832 = vmatpush1.msra.mxu0 0.0
        %1833 = vmatprep.subr.mxu0 0.0
        %1834 = vmatpush1.msra.mxu0 0.0
        %1835 = vmatprep.subr.mxu0 0.0
        %1836 = vmatpush1.msra.mxu0 0.0
        %1837 = vmatprep.subr.mxu0 0.0
        %1838 = vmatpush1.msra.mxu0 0.0
        %1839 = vmatprep.subr.mxu0 0.0
        %1840 = vmatpush1.msra.mxu0 0.0
        %1841 = vmatprep.subr.mxu0 0.0
        %1842 = vmatpush1.msra.mxu0 0.0
        %1843 = vmatprep.subr.mxu0 0.0
        %1844 = vmatpush1.msra.mxu0 0.0
        %1845 = vmatprep.subr.mxu0 0.0
        %1846 = vmatpush1.msra.mxu0 0.0
        %1847 = vmatprep.subr.mxu0 0.0
        %1848 = vmatpush1.msra.mxu0 0.0
        %1849 = vmatprep.subr.mxu0 0.0
        %1850 = vmatpush1.msra.mxu0 0.0
        %1851 = vmatprep.subr.mxu0 0.0
        %1852 = vmatpush1.msra.mxu0 0.0
        %1853 = vmatprep.subr.mxu0 0.0
        %1854 = vmatpush1.msra.mxu0 0.0
        %1855 = vmatprep.subr.mxu0 0.0
        %1856 = vmatpush1.msra.mxu0 0.0
        %1857 = vmatprep.subr.mxu0 0.0
        %1858 = vmatpush1.msra.mxu0 0.0
        %1859 = vmatprep.subr.mxu0 0.0
        %1860 = vmatpush1.msra.mxu0 0.0
        %1861 = vmatprep.subr.mxu0 0.0
        %1862 = vmatpush1.msra.mxu0 0.0
        %1863 = vmatprep.subr.mxu0 0.0
        %1864 = vmatpush1.msra.mxu0 0.0
        %1865 = vmatprep.subr.mxu0 0.0
        %1866 = vmatpush1.msra.mxu0 0.0
        %1867 = vmatprep.subr.mxu0 0.0
        %1868 = vmatpush1.msra.mxu0 0.0
        %1869 = vmatprep.subr.mxu0 0.0
        %1870 = vmatpush1.msra.mxu0 0.0
        %1871 = vmatprep.subr.mxu0 0.0
        %1872 = vmatpush1.msra.mxu0 0.0
        %1873 = vmatprep.subr.mxu0 0.0
        %1874 = vmatpush1.msra.mxu0 0.0
        %1875 = vmatprep.subr.mxu0 0.0
        %1876 = vmatpush1.msra.mxu0 0.0
        %1877 = vmatprep.subr.mxu0 0.0
        %1878 = vmatpush1.msra.mxu0 0.0
        %1879 = vmatprep.subr.mxu0 0.0
        %1880 = vmatpush1.msra.mxu0 0.0
        %1881 = vmatprep.mubr.f32.mxu0 0.0
        %1882 = vmatmul.mubr.f32.gmra.mrb[0].mxu0 %v1527
        %v1883 = vpop.f32.mrb[0].mxu0
        %v1884 = vadd.f32 0.0, %v1883
        %v1885 = vpop.f32.mrb[0].mxu0
        %v1886 = vadd.f32 0.0, %v1885
        %1887 = vdwg.mxu0
        %v1888 = vadd.f32 %v1815, %v1884
        %v1889 = vadd.f32 %v1816, %v1886
        %v1890 = vld [vmem:[%s699 + $0x1] sm:$0x7f]
        %v1892 = vsel %vm463, %v1890, 0
        %1894 = vmatprep.subr.mxu0 %v789
        %1895 = vmatpush1.msra.mxu0 %v788
        %1896 = vmatprep.subr.mxu0 %v791
        %1897 = vmatpush1.msra.mxu0 %v790
        %1898 = vmatprep.subr.mxu0 %v793
        %1899 = vmatpush1.msra.mxu0 %v792
        %1900 = vmatprep.subr.mxu0 %v795
        %1901 = vmatpush1.msra.mxu0 %v794
        %1902 = vmatprep.subr.mxu0 0.0
        %1903 = vmatpush1.msra.mxu0 0.0
        %1904 = vmatprep.subr.mxu0 0.0
        %1905 = vmatpush1.msra.mxu0 0.0
        %1906 = vmatprep.subr.mxu0 0.0
        %1907 = vmatpush1.msra.mxu0 0.0
        %1908 = vmatprep.subr.mxu0 0.0
        %1909 = vmatpush1.msra.mxu0 0.0
        %1910 = vmatprep.subr.mxu0 0.0
        %1911 = vmatpush1.msra.mxu0 0.0
        %1912 = vmatprep.subr.mxu0 0.0
        %1913 = vmatpush1.msra.mxu0 0.0
        %1914 = vmatprep.subr.mxu0 0.0
        %1915 = vmatpush1.msra.mxu0 0.0
        %1916 = vmatprep.subr.mxu0 0.0
        %1917 = vmatpush1.msra.mxu0 0.0
        %1918 = vmatprep.subr.mxu0 0.0
        %1919 = vmatpush1.msra.mxu0 0.0
        %1920 = vmatprep.subr.mxu0 0.0
        %1921 = vmatpush1.msra.mxu0 0.0
        %1922 = vmatprep.subr.mxu0 0.0
        %1923 = vmatpush1.msra.mxu0 0.0
        %1924 = vmatprep.subr.mxu0 0.0
        %1925 = vmatpush1.msra.mxu0 0.0
        %1926 = vmatprep.subr.mxu0 0.0
        %1927 = vmatpush1.msra.mxu0 0.0
        %1928 = vmatprep.subr.mxu0 0.0
        %1929 = vmatpush1.msra.mxu0 0.0
        %1930 = vmatprep.subr.mxu0 0.0
        %1931 = vmatpush1.msra.mxu0 0.0
        %1932 = vmatprep.subr.mxu0 0.0
        %1933 = vmatpush1.msra.mxu0 0.0
        %1934 = vmatprep.subr.mxu0 0.0
        %1935 = vmatpush1.msra.mxu0 0.0
        %1936 = vmatprep.subr.mxu0 0.0
        %1937 = vmatpush1.msra.mxu0 0.0
        %1938 = vmatprep.subr.mxu0 0.0
        %1939 = vmatpush1.msra.mxu0 0.0
        %1940 = vmatprep.subr.mxu0 0.0
        %1941 = vmatpush1.msra.mxu0 0.0
        %1942 = vmatprep.subr.mxu0 0.0
        %1943 = vmatpush1.msra.mxu0 0.0
        %1944 = vmatprep.subr.mxu0 0.0
        %1945 = vmatpush1.msra.mxu0 0.0
        %1946 = vmatprep.subr.mxu0 0.0
        %1947 = vmatpush1.msra.mxu0 0.0
        %1948 = vmatprep.subr.mxu0 0.0
        %1949 = vmatpush1.msra.mxu0 0.0
        %1950 = vmatprep.subr.mxu0 0.0
        %1951 = vmatpush1.msra.mxu0 0.0
        %1952 = vmatprep.subr.mxu0 0.0
        %1953 = vmatpush1.msra.mxu0 0.0
        %1954 = vmatprep.subr.mxu0 0.0
        %1955 = vmatpush1.msra.mxu0 0.0
        %1956 = vmatprep.subr.mxu0 0.0
        %1957 = vmatpush1.msra.mxu0 0.0
        %1958 = vmatprep.mubr.f32.mxu0 0.0
        %1959 = vmatmul.mubr.f32.gmra.mrb[0].mxu0 %v1892
        %v1960 = vpop.f32.mrb[0].mxu0
        %v1961 = vadd.f32 0.0, %v1960
        %v1962 = vpop.f32.mrb[0].mxu0
        %v1963 = vadd.f32 0.0, %v1962
        %1964 = vdwg.mxu0
        %v1965 = vadd.f32 %v1888, %v1961
        %v1966 = vadd.f32 %v1889, %v1963
        %v1967 = vmax.f32 %v870, %v1235
        %v1968 = vmax.f32 %v871, %v1236
        %v1969 = vmax.f32 %v1600, %v1965
        %v1970 = vmax.f32 %v1601, %v1966
        %v1971 = vmax.f32 %v1967, %v1968
        %v1972 = vld [vmem:[%s2] sm:$0x1]
        %v1974 = vlaneseq
        %v1975 = vshrl.u32 %v1974, 7
        %v1976 = vsub.s32 0, %v1975
        %v1977 = vrot.slane %v1972, %v1976
        %v1979 = vadd.f32 %v1971, %v1977
        %v1980 = vmax.f32 %v1979, 0.0
        %v1981 = vmax.f32 %v1969, %v1970
        %v1982 = vadd.f32 %v1981, %v1977
        %v1983 = vmax.f32 %v1982, 0.0
        %v1984 = vld [vmem:[#allocation5] sm:$0xff]
        %v1985 = vld [vmem:[#allocation5 + $0x8] sm:$0xff]
        %v1986 = vld [vmem:[#allocation5 + $0x10] sm:$0xff]
        %v1987 = vld [vmem:[#allocation5 + $0x18] sm:$0xff]
        %v1988 = vld [vmem:[#allocation5 + $0x20] sm:$0xff]
        %v1989 = vld [vmem:[#allocation5 + $0x28] sm:$0xff]
        %v1990 = vld [vmem:[#allocation5 + $0x30] sm:$0xff]
        %v1991 = vld [vmem:[#allocation5 + $0x38] sm:$0xff]
        %v1992 = vld [vmem:[#allocation5 + $0x40] sm:$0xff]
        %v1993 = vld [vmem:[#allocation5 + $0x48] sm:$0xff]
        %v1994 = vld [vmem:[#allocation5 + $0x50] sm:$0xff]
        %v1995 = vld [vmem:[#allocation5 + $0x58] sm:$0xff]
        %v1996 = vld [vmem:[#allocation5 + $0x60] sm:$0xff]
        %v1997 = vld [vmem:[#allocation5 + $0x68] sm:$0xff]
        %v1998 = vld [vmem:[#allocation5 + $0x70] sm:$0xff]
        %v1999 = vld [vmem:[#allocation5 + $0x78] sm:$0xff]
        %v2000 = vld [vmem:[#allocation5 + $0x80] sm:$0xff]
        %v2001 = vld [vmem:[#allocation5 + $0x88] sm:$0xff]
        %v2002 = vld [vmem:[#allocation5 + $0x90] sm:$0xff]
        %v2003 = vld [vmem:[#allocation5 + $0x98] sm:$0xff]
        %v2004 = vld [vmem:[#allocation5 + $0xa0] sm:$0xff]
        %v2005 = vld [vmem:[#allocation5 + $0xa8] sm:$0xff]
        %v2006 = vld [vmem:[#allocation5 + $0xb0] sm:$0xff]
        %v2007 = vld [vmem:[#allocation5 + $0xb8] sm:$0xff]
        %v2008 = vld [vmem:[#allocation5 + $0xc0] sm:$0xff]
        %v2009 = vld [vmem:[#allocation5 + $0xc8] sm:$0xff]
        %v2010 = vld [vmem:[#allocation5 + $0xd0] sm:$0xff]
        %v2011 = vld [vmem:[#allocation5 + $0xd8] sm:$0xff]
        %v2012 = vld [vmem:[#allocation5 + $0xe0] sm:$0xff]
        %v2013 = vld [vmem:[#allocation5 + $0xe8] sm:$0xff]
        %v2014 = vld [vmem:[#allocation5 + $0xf0] sm:$0xff]
        %v2015 = vld [vmem:[#allocation5 + $0xf8] sm:$0xff]
        %s2016 = scalar_lea.vmem [#allocation5], 256
        %v2017 = vld [vmem:[%s2016] sm:$0xff]
        %v2018 = vld [vmem:[%s2016 + $0x8] sm:$0xff]
        %v2019 = vld [vmem:[%s2016 + $0x10] sm:$0xff]
        %v2020 = vld [vmem:[%s2016 + $0x18] sm:$0xff]
        %v2021 = vld [vmem:[%s2016 + $0x20] sm:$0xff]
        %v2022 = vld [vmem:[%s2016 + $0x28] sm:$0xff]
        %v2023 = vld [vmem:[%s2016 + $0x30] sm:$0xff]
        %v2024 = vld [vmem:[%s2016 + $0x38] sm:$0xff]
        %v2025 = vld [vmem:[%s2016 + $0x40] sm:$0xff]
        %v2026 = vld [vmem:[%s2016 + $0x48] sm:$0xff]
        %v2027 = vld [vmem:[%s2016 + $0x50] sm:$0xff]
        %v2028 = vld [vmem:[%s2016 + $0x58] sm:$0xff]
        %v2029 = vld [vmem:[%s2016 + $0x60] sm:$0xff]
        %v2030 = vld [vmem:[%s2016 + $0x68] sm:$0xff]
        %v2031 = vld [vmem:[%s2016 + $0x70] sm:$0xff]
        %v2032 = vld [vmem:[%s2016 + $0x78] sm:$0xff]
        %v2033 = vld [vmem:[%s2016 + $0x80] sm:$0xff]
        %v2034 = vld [vmem:[%s2016 + $0x88] sm:$0xff]
        %v2035 = vld [vmem:[%s2016 + $0x90] sm:$0xff]
        %v2036 = vld [vmem:[%s2016 + $0x98] sm:$0xff]
        %v2037 = vld [vmem:[%s2016 + $0xa0] sm:$0xff]
        %v2038 = vld [vmem:[%s2016 + $0xa8] sm:$0xff]
        %v2039 = vld [vmem:[%s2016 + $0xb0] sm:$0xff]
        %v2040 = vld [vmem:[%s2016 + $0xb8] sm:$0xff]
        %v2041 = vld [vmem:[%s2016 + $0xc0] sm:$0xff]
        %v2042 = vld [vmem:[%s2016 + $0xc8] sm:$0xff]
        %v2043 = vld [vmem:[%s2016 + $0xd0] sm:$0xff]
        %v2044 = vld [vmem:[%s2016 + $0xd8] sm:$0xff]
        %v2045 = vld [vmem:[%s2016 + $0xe0] sm:$0xff]
        %v2046 = vld [vmem:[%s2016 + $0xe8] sm:$0xff]
        %v2047 = vld [vmem:[%s2016 + $0xf0] sm:$0xff]
        %v2048 = vld [vmem:[%s2016 + $0xf8] sm:$0xff]
        %2049 = vmatprep.subr.mxu0 %v2018
        %2050 = vmatpush1.msra.mxu0 %v2017
        %2051 = vmatprep.subr.mxu0 %v2020
        %2052 = vmatpush1.msra.mxu0 %v2019
        %2053 = vmatprep.subr.mxu0 %v2022
        %2054 = vmatpush1.msra.mxu0 %v2021
        %2055 = vmatprep.subr.mxu0 %v2024
        %2056 = vmatpush1.msra.mxu0 %v2023
        %2057 = vmatprep.subr.mxu0 %v2026
        %2058 = vmatpush1.msra.mxu0 %v2025
        %2059 = vmatprep.subr.mxu0 %v2028
        %2060 = vmatpush1.msra.mxu0 %v2027
        %2061 = vmatprep.subr.mxu0 %v2030
        %2062 = vmatpush1.msra.mxu0 %v2029
        %2063 = vmatprep.subr.mxu0 %v2032
        %2064 = vmatpush1.msra.mxu0 %v2031
        %2065 = vmatprep.subr.mxu0 %v2034
        %2066 = vmatpush1.msra.mxu0 %v2033
        %2067 = vmatprep.subr.mxu0 %v2036
        %2068 = vmatpush1.msra.mxu0 %v2035
        %2069 = vmatprep.subr.mxu0 %v2038
        %2070 = vmatpush1.msra.mxu0 %v2037
        %2071 = vmatprep.subr.mxu0 %v2040
        %2072 = vmatpush1.msra.mxu0 %v2039
        %2073 = vmatprep.subr.mxu0 %v2042
        %2074 = vmatpush1.msra.mxu0 %v2041
        %2075 = vmatprep.subr.mxu0 %v2044
        %2076 = vmatpush1.msra.mxu0 %v2043
        %2077 = vmatprep.subr.mxu0 %v2046
        %2078 = vmatpush1.msra.mxu0 %v2045
        %2079 = vmatprep.subr.mxu0 %v2048
        %2080 = vmatpush1.msra.mxu0 %v2047
        %2081 = vmatprep.subr.mxu0 0.0
        %2082 = vmatpush1.msra.mxu0 0.0
        %2083 = vmatprep.subr.mxu0 0.0
        %2084 = vmatpush1.msra.mxu0 0.0
        %2085 = vmatprep.subr.mxu0 0.0
        %2086 = vmatpush1.msra.mxu0 0.0
        %2087 = vmatprep.subr.mxu0 0.0
        %2088 = vmatpush1.msra.mxu0 0.0
        %2089 = vmatprep.subr.mxu0 0.0
        %2090 = vmatpush1.msra.mxu0 0.0
        %2091 = vmatprep.subr.mxu0 0.0
        %2092 = vmatpush1.msra.mxu0 0.0
        %2093 = vmatprep.subr.mxu0 0.0
        %2094 = vmatpush1.msra.mxu0 0.0
        %2095 = vmatprep.subr.mxu0 0.0
        %2096 = vmatpush1.msra.mxu0 0.0
        %2097 = vmatprep.subr.mxu0 0.0
        %2098 = vmatpush1.msra.mxu0 0.0
        %2099 = vmatprep.subr.mxu0 0.0
        %2100 = vmatpush1.msra.mxu0 0.0
        %2101 = vmatprep.subr.mxu0 0.0
        %2102 = vmatpush1.msra.mxu0 0.0
        %2103 = vmatprep.subr.mxu0 0.0
        %2104 = vmatpush1.msra.mxu0 0.0
        %2105 = vmatprep.subr.mxu0 0.0
        %2106 = vmatpush1.msra.mxu0 0.0
        %2107 = vmatprep.subr.mxu0 0.0
        %2108 = vmatpush1.msra.mxu0 0.0
        %2109 = vmatprep.subr.mxu0 0.0
        %2110 = vmatpush1.msra.mxu0 0.0
        %2111 = vmatprep.subr.mxu0 0.0
        %2112 = vmatpush1.msra.mxu0 0.0
        %2113 = vmatprep.mubr.f32.mxu0 0.0
        %2114 = vmatmul.mubr.f32.gmra.mrb[0].mxu0 %v1983
        %v2115 = vpop.f32.mrb[0].mxu0
        %v2116 = vadd.f32 0.0, %v2115
        %v2117 = vpop.f32.mrb[0].mxu0
        %v2118 = vadd.f32 0.0, %v2117
        %2119 = vdwg.mxu0
        %2120 = vmatprep.subr.mxu0 %v1985
        %2121 = vmatpush1.msra.mxu0 %v1984
        %2122 = vmatprep.subr.mxu0 %v1987
        %2123 = vmatpush1.msra.mxu0 %v1986
        %2124 = vmatprep.subr.mxu0 %v1989
        %2125 = vmatpush1.msra.mxu0 %v1988
        %2126 = vmatprep.subr.mxu0 %v1991
        %2127 = vmatpush1.msra.mxu0 %v1990
        %2128 = vmatprep.subr.mxu0 %v1993
        %2129 = vmatpush1.msra.mxu0 %v1992
        %2130 = vmatprep.subr.mxu0 %v1995
        %2131 = vmatpush1.msra.mxu0 %v1994
        %2132 = vmatprep.subr.mxu0 %v1997
        %2133 = vmatpush1.msra.mxu0 %v1996
        %2134 = vmatprep.subr.mxu0 %v1999
        %2135 = vmatpush1.msra.mxu0 %v1998
        %2136 = vmatprep.subr.mxu0 %v2001
        %2137 = vmatpush1.msra.mxu0 %v2000
        %2138 = vmatprep.subr.mxu0 %v2003
        %2139 = vmatpush1.msra.mxu0 %v2002
        %2140 = vmatprep.subr.mxu0 %v2005
        %2141 = vmatpush1.msra.mxu0 %v2004
        %2142 = vmatprep.subr.mxu0 %v2007
        %2143 = vmatpush1.msra.mxu0 %v2006
        %2144 = vmatprep.subr.mxu0 %v2009
        %2145 = vmatpush1.msra.mxu0 %v2008
        %2146 = vmatprep.subr.mxu0 %v2011
        %2147 = vmatpush1.msra.mxu0 %v2010
        %2148 = vmatprep.subr.mxu0 %v2013
        %2149 = vmatpush1.msra.mxu0 %v2012
        %2150 = vmatprep.subr.mxu0 %v2015
        %2151 = vmatpush1.msra.mxu0 %v2014
        %2152 = vmatprep.subr.mxu0 0.0
        %2153 = vmatpush1.msra.mxu0 0.0
        %2154 = vmatprep.subr.mxu0 0.0
        %2155 = vmatpush1.msra.mxu0 0.0
        %2156 = vmatprep.subr.mxu0 0.0
        %2157 = vmatpush1.msra.mxu0 0.0
        %2158 = vmatprep.subr.mxu0 0.0
        %2159 = vmatpush1.msra.mxu0 0.0
        %2160 = vmatprep.subr.mxu0 0.0
        %2161 = vmatpush1.msra.mxu0 0.0
        %2162 = vmatprep.subr.mxu0 0.0
        %2163 = vmatpush1.msra.mxu0 0.0
        %2164 = vmatprep.subr.mxu0 0.0
        %2165 = vmatpush1.msra.mxu0 0.0
        %2166 = vmatprep.subr.mxu0 0.0
        %2167 = vmatpush1.msra.mxu0 0.0
        %2168 = vmatprep.subr.mxu0 0.0
        %2169 = vmatpush1.msra.mxu0 0.0
        %2170 = vmatprep.subr.mxu0 0.0
        %2171 = vmatpush1.msra.mxu0 0.0
        %2172 = vmatprep.subr.mxu0 0.0
        %2173 = vmatpush1.msra.mxu0 0.0
        %2174 = vmatprep.subr.mxu0 0.0
        %2175 = vmatpush1.msra.mxu0 0.0
        %2176 = vmatprep.subr.mxu0 0.0
        %2177 = vmatpush1.msra.mxu0 0.0
        %2178 = vmatprep.subr.mxu0 0.0
        %2179 = vmatpush1.msra.mxu0 0.0
        %2180 = vmatprep.subr.mxu0 0.0
        %2181 = vmatpush1.msra.mxu0 0.0
        %2182 = vmatprep.subr.mxu0 0.0
        %2183 = vmatpush1.msra.mxu0 0.0
        %2184 = vmatprep.mubr.f32.mxu0 0.0
        %2185 = vmatmul.mubr.f32.gmra.mrb[0].mxu0 %v1980
        %v2186 = vpop.f32.mrb[0].mxu0
        %v2187 = vadd.f32 %v2116, %v2186
        %v2188 = vpop.f32.mrb[0].mxu0
        %v2189 = vadd.f32 %v2118, %v2188
        %2190 = vdwg.mxu0
        %s2191 = scalar_lea.vmem [#allocation5], 512
        %v2192 = vld [vmem:[%s2191] sm:$0xff]
        %v2193 = vld [vmem:[%s2191 + $0x8] sm:$0xff]
        %v2194 = vld [vmem:[%s2191 + $0x10] sm:$0xff]
        %v2195 = vld [vmem:[%s2191 + $0x18] sm:$0xff]
        %v2196 = vld [vmem:[%s2191 + $0x20] sm:$0xff]
        %v2197 = vld [vmem:[%s2191 + $0x28] sm:$0xff]
        %v2198 = vld [vmem:[%s2191 + $0x30] sm:$0xff]
        %v2199 = vld [vmem:[%s2191 + $0x38] sm:$0xff]
        %v2200 = vld [vmem:[%s2191 + $0x40] sm:$0xff]
        %v2201 = vld [vmem:[%s2191 + $0x48] sm:$0xff]
        %v2202 = vld [vmem:[%s2191 + $0x50] sm:$0xff]
        %v2203 = vld [vmem:[%s2191 + $0x58] sm:$0xff]
        %v2204 = vld [vmem:[%s2191 + $0x60] sm:$0xff]
        %v2205 = vld [vmem:[%s2191 + $0x68] sm:$0xff]
        %v2206 = vld [vmem:[%s2191 + $0x70] sm:$0xff]
        %v2207 = vld [vmem:[%s2191 + $0x78] sm:$0xff]
        %v2208 = vld [vmem:[%s2191 + $0x80] sm:$0xff]
        %v2209 = vld [vmem:[%s2191 + $0x88] sm:$0xff]
        %v2210 = vld [vmem:[%s2191 + $0x90] sm:$0xff]
        %v2211 = vld [vmem:[%s2191 + $0x98] sm:$0xff]
        %v2212 = vld [vmem:[%s2191 + $0xa0] sm:$0xff]
        %v2213 = vld [vmem:[%s2191 + $0xa8] sm:$0xff]
        %v2214 = vld [vmem:[%s2191 + $0xb0] sm:$0xff]
        %v2215 = vld [vmem:[%s2191 + $0xb8] sm:$0xff]
        %v2216 = vld [vmem:[%s2191 + $0xc0] sm:$0xff]
        %v2217 = vld [vmem:[%s2191 + $0xc8] sm:$0xff]
        %v2218 = vld [vmem:[%s2191 + $0xd0] sm:$0xff]
        %v2219 = vld [vmem:[%s2191 + $0xd8] sm:$0xff]
        %v2220 = vld [vmem:[%s2191 + $0xe0] sm:$0xff]
        %v2221 = vld [vmem:[%s2191 + $0xe8] sm:$0xff]
        %v2222 = vld [vmem:[%s2191 + $0xf0] sm:$0xff]
        %v2223 = vld [vmem:[%s2191 + $0xf8] sm:$0xff]
        %v2225 = vrot.slane %v1980, 1
        %2227 = vmatprep.subr.mxu0 %v2193
        %2228 = vmatpush1.msra.mxu0 %v2192
        %2229 = vmatprep.subr.mxu0 %v2195
        %2230 = vmatpush1.msra.mxu0 %v2194
        %2231 = vmatprep.subr.mxu0 %v2197
        %2232 = vmatpush1.msra.mxu0 %v2196
        %2233 = vmatprep.subr.mxu0 %v2199
        %2234 = vmatpush1.msra.mxu0 %v2198
        %2235 = vmatprep.subr.mxu0 %v2201
        %2236 = vmatpush1.msra.mxu0 %v2200
        %2237 = vmatprep.subr.mxu0 %v2203
        %2238 = vmatpush1.msra.mxu0 %v2202
        %2239 = vmatprep.subr.mxu0 %v2205
        %2240 = vmatpush1.msra.mxu0 %v2204
        %2241 = vmatprep.subr.mxu0 %v2207
        %2242 = vmatpush1.msra.mxu0 %v2206
        %2243 = vmatprep.subr.mxu0 %v2209
        %2244 = vmatpush1.msra.mxu0 %v2208
        %2245 = vmatprep.subr.mxu0 %v2211
        %2246 = vmatpush1.msra.mxu0 %v2210
        %2247 = vmatprep.subr.mxu0 %v2213
        %2248 = vmatpush1.msra.mxu0 %v2212
        %2249 = vmatprep.subr.mxu0 %v2215
        %2250 = vmatpush1.msra.mxu0 %v2214
        %2251 = vmatprep.subr.mxu0 %v2217
        %2252 = vmatpush1.msra.mxu0 %v2216
        %2253 = vmatprep.subr.mxu0 %v2219
        %2254 = vmatpush1.msra.mxu0 %v2218
        %2255 = vmatprep.subr.mxu0 %v2221
        %2256 = vmatpush1.msra.mxu0 %v2220
        %2257 = vmatprep.subr.mxu0 %v2223
        %2258 = vmatpush1.msra.mxu0 %v2222
        %2259 = vmatprep.subr.mxu0 0.0
        %2260 = vmatpush1.msra.mxu0 0.0
        %2261 = vmatprep.subr.mxu0 0.0
        %2262 = vmatpush1.msra.mxu0 0.0
        %2263 = vmatprep.subr.mxu0 0.0
        %2264 = vmatpush1.msra.mxu0 0.0
        %2265 = vmatprep.subr.mxu0 0.0
        %2266 = vmatpush1.msra.mxu0 0.0
        %2267 = vmatprep.subr.mxu0 0.0
        %2268 = vmatpush1.msra.mxu0 0.0
        %2269 = vmatprep.subr.mxu0 0.0
        %2270 = vmatpush1.msra.mxu0 0.0
        %2271 = vmatprep.subr.mxu0 0.0
        %2272 = vmatpush1.msra.mxu0 0.0
        %2273 = vmatprep.subr.mxu0 0.0
        %2274 = vmatpush1.msra.mxu0 0.0
        %2275 = vmatprep.subr.mxu0 0.0
        %2276 = vmatpush1.msra.mxu0 0.0
        %2277 = vmatprep.subr.mxu0 0.0
        %2278 = vmatpush1.msra.mxu0 0.0
        %2279 = vmatprep.subr.mxu0 0.0
        %2280 = vmatpush1.msra.mxu0 0.0
        %2281 = vmatprep.subr.mxu0 0.0
        %2282 = vmatpush1.msra.mxu0 0.0
        %2283 = vmatprep.subr.mxu0 0.0
        %2284 = vmatpush1.msra.mxu0 0.0
        %2285 = vmatprep.subr.mxu0 0.0
        %2286 = vmatpush1.msra.mxu0 0.0
        %2287 = vmatprep.subr.mxu0 0.0
        %2288 = vmatpush1.msra.mxu0 0.0
        %2289 = vmatprep.subr.mxu0 0.0
        %2290 = vmatpush1.msra.mxu0 0.0
        %2291 = vmatprep.mubr.f32.mxu0 0.0
        %2292 = vmatmul.mubr.f32.gmra.mrb[0].mxu0 %v2225
        %v2293 = vpop.f32.mrb[0].mxu0
        %v2294 = vadd.f32 0.0, %v2293
        %v2295 = vpop.f32.mrb[0].mxu0
        %v2296 = vadd.f32 0.0, %v2295
        %2297 = vdwg.mxu0
        %v2298 = vadd.f32 %v2187, %v2294
        %v2299 = vadd.f32 %v2189, %v2296
        %s2300 = scalar_lea.vmem [#allocation5], 768
        %v2301 = vld [vmem:[%s2300] sm:$0xff]
        %v2302 = vld [vmem:[%s2300 + $0x8] sm:$0xff]
        %v2303 = vld [vmem:[%s2300 + $0x10] sm:$0xff]
        %v2304 = vld [vmem:[%s2300 + $0x18] sm:$0xff]
        %v2305 = vld [vmem:[%s2300 + $0x20] sm:$0xff]
        %v2306 = vld [vmem:[%s2300 + $0x28] sm:$0xff]
        %v2307 = vld [vmem:[%s2300 + $0x30] sm:$0xff]
        %v2308 = vld [vmem:[%s2300 + $0x38] sm:$0xff]
        %v2309 = vld [vmem:[%s2300 + $0x40] sm:$0xff]
        %v2310 = vld [vmem:[%s2300 + $0x48] sm:$0xff]
        %v2311 = vld [vmem:[%s2300 + $0x50] sm:$0xff]
        %v2312 = vld [vmem:[%s2300 + $0x58] sm:$0xff]
        %v2313 = vld [vmem:[%s2300 + $0x60] sm:$0xff]
        %v2314 = vld [vmem:[%s2300 + $0x68] sm:$0xff]
        %v2315 = vld [vmem:[%s2300 + $0x70] sm:$0xff]
        %v2316 = vld [vmem:[%s2300 + $0x78] sm:$0xff]
        %v2317 = vld [vmem:[%s2300 + $0x80] sm:$0xff]
        %v2318 = vld [vmem:[%s2300 + $0x88] sm:$0xff]
        %v2319 = vld [vmem:[%s2300 + $0x90] sm:$0xff]
        %v2320 = vld [vmem:[%s2300 + $0x98] sm:$0xff]
        %v2321 = vld [vmem:[%s2300 + $0xa0] sm:$0xff]
        %v2322 = vld [vmem:[%s2300 + $0xa8] sm:$0xff]
        %v2323 = vld [vmem:[%s2300 + $0xb0] sm:$0xff]
        %v2324 = vld [vmem:[%s2300 + $0xb8] sm:$0xff]
        %v2325 = vld [vmem:[%s2300 + $0xc0] sm:$0xff]
        %v2326 = vld [vmem:[%s2300 + $0xc8] sm:$0xff]
        %v2327 = vld [vmem:[%s2300 + $0xd0] sm:$0xff]
        %v2328 = vld [vmem:[%s2300 + $0xd8] sm:$0xff]
        %v2329 = vld [vmem:[%s2300 + $0xe0] sm:$0xff]
        %v2330 = vld [vmem:[%s2300 + $0xe8] sm:$0xff]
        %v2331 = vld [vmem:[%s2300 + $0xf0] sm:$0xff]
        %v2332 = vld [vmem:[%s2300 + $0xf8] sm:$0xff]
        %v2334 = vrot.slane %v1983, 1
        %2336 = vmatprep.subr.mxu0 %v2302
        %2337 = vmatpush1.msra.mxu0 %v2301
        %2338 = vmatprep.subr.mxu0 %v2304
        %2339 = vmatpush1.msra.mxu0 %v2303
        %2340 = vmatprep.subr.mxu0 %v2306
        %2341 = vmatpush1.msra.mxu0 %v2305
        %2342 = vmatprep.subr.mxu0 %v2308
        %2343 = vmatpush1.msra.mxu0 %v2307
        %2344 = vmatprep.subr.mxu0 %v2310
        %2345 = vmatpush1.msra.mxu0 %v2309
        %2346 = vmatprep.subr.mxu0 %v2312
        %2347 = vmatpush1.msra.mxu0 %v2311
        %2348 = vmatprep.subr.mxu0 %v2314
        %2349 = vmatpush1.msra.mxu0 %v2313
        %2350 = vmatprep.subr.mxu0 %v2316
        %2351 = vmatpush1.msra.mxu0 %v2315
        %2352 = vmatprep.subr.mxu0 %v2318
        %2353 = vmatpush1.msra.mxu0 %v2317
        %2354 = vmatprep.subr.mxu0 %v2320
        %2355 = vmatpush1.msra.mxu0 %v2319
        %2356 = vmatprep.subr.mxu0 %v2322
        %2357 = vmatpush1.msra.mxu0 %v2321
        %2358 = vmatprep.subr.mxu0 %v2324
        %2359 = vmatpush1.msra.mxu0 %v2323
        %2360 = vmatprep.subr.mxu0 %v2326
        %2361 = vmatpush1.msra.mxu0 %v2325
        %2362 = vmatprep.subr.mxu0 %v2328
        %2363 = vmatpush1.msra.mxu0 %v2327
        %2364 = vmatprep.subr.mxu0 %v2330
        %2365 = vmatpush1.msra.mxu0 %v2329
        %2366 = vmatprep.subr.mxu0 %v2332
        %2367 = vmatpush1.msra.mxu0 %v2331
        %2368 = vmatprep.subr.mxu0 0.0
        %2369 = vmatpush1.msra.mxu0 0.0
        %2370 = vmatprep.subr.mxu0 0.0
        %2371 = vmatpush1.msra.mxu0 0.0
        %2372 = vmatprep.subr.mxu0 0.0
        %2373 = vmatpush1.msra.mxu0 0.0
        %2374 = vmatprep.subr.mxu0 0.0
        %2375 = vmatpush1.msra.mxu0 0.0
        %2376 = vmatprep.subr.mxu0 0.0
        %2377 = vmatpush1.msra.mxu0 0.0
        %2378 = vmatprep.subr.mxu0 0.0
        %2379 = vmatpush1.msra.mxu0 0.0
        %2380 = vmatprep.subr.mxu0 0.0
        %2381 = vmatpush1.msra.mxu0 0.0
        %2382 = vmatprep.subr.mxu0 0.0
        %2383 = vmatpush1.msra.mxu0 0.0
        %2384 = vmatprep.subr.mxu0 0.0
        %2385 = vmatpush1.msra.mxu0 0.0
        %2386 = vmatprep.subr.mxu0 0.0
        %2387 = vmatpush1.msra.mxu0 0.0
        %2388 = vmatprep.subr.mxu0 0.0
        %2389 = vmatpush1.msra.mxu0 0.0
        %2390 = vmatprep.subr.mxu0 0.0
        %2391 = vmatpush1.msra.mxu0 0.0
        %2392 = vmatprep.subr.mxu0 0.0
        %2393 = vmatpush1.msra.mxu0 0.0
        %2394 = vmatprep.subr.mxu0 0.0
        %2395 = vmatpush1.msra.mxu0 0.0
        %2396 = vmatprep.subr.mxu0 0.0
        %2397 = vmatpush1.msra.mxu0 0.0
        %2398 = vmatprep.subr.mxu0 0.0
        %2399 = vmatpush1.msra.mxu0 0.0
        %2400 = vmatprep.mubr.f32.mxu0 0.0
        %2401 = vmatmul.mubr.f32.gmra.mrb[0].mxu0 %v2334
        %v2402 = vpop.f32.mrb[0].mxu0
        %v2403 = vadd.f32 0.0, %v2402
        %v2404 = vpop.f32.mrb[0].mxu0
        %v2405 = vadd.f32 0.0, %v2404
        %2406 = vdwg.mxu0
        %v2407 = vadd.f32 %v2298, %v2403
        %v2408 = vadd.f32 %v2299, %v2405
        %s2409 = scalar_lea.vmem [#allocation5], 1024
        %v2410 = vld [vmem:[%s2409] sm:$0xff]
        %v2411 = vld [vmem:[%s2409 + $0x8] sm:$0xff]
        %v2412 = vld [vmem:[%s2409 + $0x10] sm:$0xff]
        %v2413 = vld [vmem:[%s2409 + $0x18] sm:$0xff]
        %v2414 = vld [vmem:[%s2409 + $0x20] sm:$0xff]
        %v2415 = vld [vmem:[%s2409 + $0x28] sm:$0xff]
        %v2416 = vld [vmem:[%s2409 + $0x30] sm:$0xff]
        %v2417 = vld [vmem:[%s2409 + $0x38] sm:$0xff]
        %v2418 = vld [vmem:[%s2409 + $0x40] sm:$0xff]
        %v2419 = vld [vmem:[%s2409 + $0x48] sm:$0xff]
        %v2420 = vld [vmem:[%s2409 + $0x50] sm:$0xff]
        %v2421 = vld [vmem:[%s2409 + $0x58] sm:$0xff]
        %v2422 = vld [vmem:[%s2409 + $0x60] sm:$0xff]
        %v2423 = vld [vmem:[%s2409 + $0x68] sm:$0xff]
        %v2424 = vld [vmem:[%s2409 + $0x70] sm:$0xff]
        %v2425 = vld [vmem:[%s2409 + $0x78] sm:$0xff]
        %v2426 = vld [vmem:[%s2409 + $0x80] sm:$0xff]
        %v2427 = vld [vmem:[%s2409 + $0x88] sm:$0xff]
        %v2428 = vld [vmem:[%s2409 + $0x90] sm:$0xff]
        %v2429 = vld [vmem:[%s2409 + $0x98] sm:$0xff]
        %v2430 = vld [vmem:[%s2409 + $0xa0] sm:$0xff]
        %v2431 = vld [vmem:[%s2409 + $0xa8] sm:$0xff]
        %v2432 = vld [vmem:[%s2409 + $0xb0] sm:$0xff]
        %v2433 = vld [vmem:[%s2409 + $0xb8] sm:$0xff]
        %v2434 = vld [vmem:[%s2409 + $0xc0] sm:$0xff]
        %v2435 = vld [vmem:[%s2409 + $0xc8] sm:$0xff]
        %v2436 = vld [vmem:[%s2409 + $0xd0] sm:$0xff]
        %v2437 = vld [vmem:[%s2409 + $0xd8] sm:$0xff]
        %v2438 = vld [vmem:[%s2409 + $0xe0] sm:$0xff]
        %v2439 = vld [vmem:[%s2409 + $0xe8] sm:$0xff]
        %v2440 = vld [vmem:[%s2409 + $0xf0] sm:$0xff]
        %v2441 = vld [vmem:[%s2409 + $0xf8] sm:$0xff]
        %v2442 = vrot.slane %v1980, 2
        %2444 = vmatprep.subr.mxu0 %v2411
        %2445 = vmatpush1.msra.mxu0 %v2410
        %2446 = vmatprep.subr.mxu0 %v2413
        %2447 = vmatpush1.msra.mxu0 %v2412
        %2448 = vmatprep.subr.mxu0 %v2415
        %2449 = vmatpush1.msra.mxu0 %v2414
        %2450 = vmatprep.subr.mxu0 %v2417
        %2451 = vmatpush1.msra.mxu0 %v2416
        %2452 = vmatprep.subr.mxu0 %v2419
        %2453 = vmatpush1.msra.mxu0 %v2418
        %2454 = vmatprep.subr.mxu0 %v2421
        %2455 = vmatpush1.msra.mxu0 %v2420
        %2456 = vmatprep.subr.mxu0 %v2423
        %2457 = vmatpush1.msra.mxu0 %v2422
        %2458 = vmatprep.subr.mxu0 %v2425
        %2459 = vmatpush1.msra.mxu0 %v2424
        %2460 = vmatprep.subr.mxu0 %v2427
        %2461 = vmatpush1.msra.mxu0 %v2426
        %2462 = vmatprep.subr.mxu0 %v2429
        %2463 = vmatpush1.msra.mxu0 %v2428
        %2464 = vmatprep.subr.mxu0 %v2431
        %2465 = vmatpush1.msra.mxu0 %v2430
        %2466 = vmatprep.subr.mxu0 %v2433
        %2467 = vmatpush1.msra.mxu0 %v2432
        %2468 = vmatprep.subr.mxu0 %v2435
        %2469 = vmatpush1.msra.mxu0 %v2434
        %2470 = vmatprep.subr.mxu0 %v2437
        %2471 = vmatpush1.msra.mxu0 %v2436
        %2472 = vmatprep.subr.mxu0 %v2439
        %2473 = vmatpush1.msra.mxu0 %v2438
        %2474 = vmatprep.subr.mxu0 %v2441
        %2475 = vmatpush1.msra.mxu0 %v2440
        %2476 = vmatprep.subr.mxu0 0.0
        %2477 = vmatpush1.msra.mxu0 0.0
        %2478 = vmatprep.subr.mxu0 0.0
        %2479 = vmatpush1.msra.mxu0 0.0
        %2480 = vmatprep.subr.mxu0 0.0
        %2481 = vmatpush1.msra.mxu0 0.0
        %2482 = vmatprep.subr.mxu0 0.0
        %2483 = vmatpush1.msra.mxu0 0.0
        %2484 = vmatprep.subr.mxu0 0.0
        %2485 = vmatpush1.msra.mxu0 0.0
        %2486 = vmatprep.subr.mxu0 0.0
        %2487 = vmatpush1.msra.mxu0 0.0
        %2488 = vmatprep.subr.mxu0 0.0
        %2489 = vmatpush1.msra.mxu0 0.0
        %2490 = vmatprep.subr.mxu0 0.0
        %2491 = vmatpush1.msra.mxu0 0.0
        %2492 = vmatprep.subr.mxu0 0.0
        %2493 = vmatpush1.msra.mxu0 0.0
        %2494 = vmatprep.subr.mxu0 0.0
        %2495 = vmatpush1.msra.mxu0 0.0
        %2496 = vmatprep.subr.mxu0 0.0
        %2497 = vmatpush1.msra.mxu0 0.0
        %2498 = vmatprep.subr.mxu0 0.0
        %2499 = vmatpush1.msra.mxu0 0.0
        %2500 = vmatprep.subr.mxu0 0.0
        %2501 = vmatpush1.msra.mxu0 0.0
        %2502 = vmatprep.subr.mxu0 0.0
        %2503 = vmatpush1.msra.mxu0 0.0
        %2504 = vmatprep.subr.mxu0 0.0
        %2505 = vmatpush1.msra.mxu0 0.0
        %2506 = vmatprep.subr.mxu0 0.0
        %2507 = vmatpush1.msra.mxu0 0.0
        %2508 = vmatprep.mubr.f32.mxu0 0.0
        %2509 = vmatmul.mubr.f32.gmra.mrb[0].mxu0 %v2442
        %v2510 = vpop.f32.mrb[0].mxu0
        %v2511 = vadd.f32 0.0, %v2510
        %v2512 = vpop.f32.mrb[0].mxu0
        %v2513 = vadd.f32 0.0, %v2512
        %2514 = vdwg.mxu0
        %v2515 = vadd.f32 %v2407, %v2511
        %v2516 = vadd.f32 %v2408, %v2513
        %2517 = vmatprep.subr.mxu0 %v2018
        %2518 = vmatpush1.msra.mxu0 %v2017
        %2519 = vmatprep.subr.mxu0 %v2020
        %2520 = vmatpush1.msra.mxu0 %v2019
        %2521 = vmatprep.subr.mxu0 %v2022
        %2522 = vmatpush1.msra.mxu0 %v2021
        %2523 = vmatprep.subr.mxu0 %v2024
        %2524 = vmatpush1.msra.mxu0 %v2023
        %2525 = vmatprep.subr.mxu0 %v2026
        %2526 = vmatpush1.msra.mxu0 %v2025
        %2527 = vmatprep.subr.mxu0 %v2028
        %2528 = vmatpush1.msra.mxu0 %v2027
        %2529 = vmatprep.subr.mxu0 %v2030
        %2530 = vmatpush1.msra.mxu0 %v2029
        %2531 = vmatprep.subr.mxu0 %v2032
        %2532 = vmatpush1.msra.mxu0 %v2031
        %2533 = vmatprep.subr.mxu0 %v2034
        %2534 = vmatpush1.msra.mxu0 %v2033
        %2535 = vmatprep.subr.mxu0 %v2036
        %2536 = vmatpush1.msra.mxu0 %v2035
        %2537 = vmatprep.subr.mxu0 %v2038
        %2538 = vmatpush1.msra.mxu0 %v2037
        %2539 = vmatprep.subr.mxu0 %v2040
        %2540 = vmatpush1.msra.mxu0 %v2039
        %2541 = vmatprep.subr.mxu0 %v2042
        %2542 = vmatpush1.msra.mxu0 %v2041
        %2543 = vmatprep.subr.mxu0 %v2044
        %2544 = vmatpush1.msra.mxu0 %v2043
        %2545 = vmatprep.subr.mxu0 %v2046
        %2546 = vmatpush1.msra.mxu0 %v2045
        %2547 = vmatprep.subr.mxu0 %v2048
        %2548 = vmatpush1.msra.mxu0 %v2047
        %2549 = vmatprep.subr.mxu0 0.0
        %2550 = vmatpush1.msra.mxu0 0.0
        %2551 = vmatprep.subr.mxu0 0.0
        %2552 = vmatpush1.msra.mxu0 0.0
        %2553 = vmatprep.subr.mxu0 0.0
        %2554 = vmatpush1.msra.mxu0 0.0
        %2555 = vmatprep.subr.mxu0 0.0
        %2556 = vmatpush1.msra.mxu0 0.0
        %2557 = vmatprep.subr.mxu0 0.0
        %2558 = vmatpush1.msra.mxu0 0.0
        %2559 = vmatprep.subr.mxu0 0.0
        %2560 = vmatpush1.msra.mxu0 0.0
        %2561 = vmatprep.subr.mxu0 0.0
        %2562 = vmatpush1.msra.mxu0 0.0
        %2563 = vmatprep.subr.mxu0 0.0
        %2564 = vmatpush1.msra.mxu0 0.0
        %2565 = vmatprep.subr.mxu0 0.0
        %2566 = vmatpush1.msra.mxu0 0.0
        %2567 = vmatprep.subr.mxu0 0.0
        %2568 = vmatpush1.msra.mxu0 0.0
        %2569 = vmatprep.subr.mxu0 0.0
        %2570 = vmatpush1.msra.mxu0 0.0
        %2571 = vmatprep.subr.mxu0 0.0
        %2572 = vmatpush1.msra.mxu0 0.0
        %2573 = vmatprep.subr.mxu0 0.0
        %2574 = vmatpush1.msra.mxu0 0.0
        %2575 = vmatprep.subr.mxu0 0.0
        %2576 = vmatpush1.msra.mxu0 0.0
        %2577 = vmatprep.subr.mxu0 0.0
        %2578 = vmatpush1.msra.mxu0 0.0
        %2579 = vmatprep.subr.mxu0 0.0
        %2580 = vmatpush1.msra.mxu0 0.0
        %2581 = vmatprep.mubr.f32.mxu0 0.0
        %2582 = vmatmul.mubr.f32.gmra.mrb[0].mxu0 %v2225
        %v2583 = vpop.f32.mrb[0].mxu0
        %v2584 = vadd.f32 0.0, %v2583
        %v2585 = vpop.f32.mrb[0].mxu0
        %v2586 = vadd.f32 0.0, %v2585
        %2587 = vdwg.mxu0
        %2588 = vmatprep.subr.mxu0 %v1985
        %2589 = vmatpush1.msra.mxu0 %v1984
        %2590 = vmatprep.subr.mxu0 %v1987
        %2591 = vmatpush1.msra.mxu0 %v1986
        %2592 = vmatprep.subr.mxu0 %v1989
        %2593 = vmatpush1.msra.mxu0 %v1988
        %2594 = vmatprep.subr.mxu0 %v1991
        %2595 = vmatpush1.msra.mxu0 %v1990
        %2596 = vmatprep.subr.mxu0 %v1993
        %2597 = vmatpush1.msra.mxu0 %v1992
        %2598 = vmatprep.subr.mxu0 %v1995
        %2599 = vmatpush1.msra.mxu0 %v1994
        %2600 = vmatprep.subr.mxu0 %v1997
        %2601 = vmatpush1.msra.mxu0 %v1996
        %2602 = vmatprep.subr.mxu0 %v1999
        %2603 = vmatpush1.msra.mxu0 %v1998
        %2604 = vmatprep.subr.mxu0 %v2001
        %2605 = vmatpush1.msra.mxu0 %v2000
        %2606 = vmatprep.subr.mxu0 %v2003
        %2607 = vmatpush1.msra.mxu0 %v2002
        %2608 = vmatprep.subr.mxu0 %v2005
        %2609 = vmatpush1.msra.mxu0 %v2004
        %2610 = vmatprep.subr.mxu0 %v2007
        %2611 = vmatpush1.msra.mxu0 %v2006
        %2612 = vmatprep.subr.mxu0 %v2009
        %2613 = vmatpush1.msra.mxu0 %v2008
        %2614 = vmatprep.subr.mxu0 %v2011
        %2615 = vmatpush1.msra.mxu0 %v2010
        %2616 = vmatprep.subr.mxu0 %v2013
        %2617 = vmatpush1.msra.mxu0 %v2012
        %2618 = vmatprep.subr.mxu0 %v2015
        %2619 = vmatpush1.msra.mxu0 %v2014
        %2620 = vmatprep.subr.mxu0 0.0
        %2621 = vmatpush1.msra.mxu0 0.0
        %2622 = vmatprep.subr.mxu0 0.0
        %2623 = vmatpush1.msra.mxu0 0.0
        %2624 = vmatprep.subr.mxu0 0.0
        %2625 = vmatpush1.msra.mxu0 0.0
        %2626 = vmatprep.subr.mxu0 0.0
        %2627 = vmatpush1.msra.mxu0 0.0
        %2628 = vmatprep.subr.mxu0 0.0
        %2629 = vmatpush1.msra.mxu0 0.0
        %2630 = vmatprep.subr.mxu0 0.0
        %2631 = vmatpush1.msra.mxu0 0.0
        %2632 = vmatprep.subr.mxu0 0.0
        %2633 = vmatpush1.msra.mxu0 0.0
        %2634 = vmatprep.subr.mxu0 0.0
        %2635 = vmatpush1.msra.mxu0 0.0
        %2636 = vmatprep.subr.mxu0 0.0
        %2637 = vmatpush1.msra.mxu0 0.0
        %2638 = vmatprep.subr.mxu0 0.0
        %2639 = vmatpush1.msra.mxu0 0.0
        %2640 = vmatprep.subr.mxu0 0.0
        %2641 = vmatpush1.msra.mxu0 0.0
        %2642 = vmatprep.subr.mxu0 0.0
        %2643 = vmatpush1.msra.mxu0 0.0
        %2644 = vmatprep.subr.mxu0 0.0
        %2645 = vmatpush1.msra.mxu0 0.0
        %2646 = vmatprep.subr.mxu0 0.0
        %2647 = vmatpush1.msra.mxu0 0.0
        %2648 = vmatprep.subr.mxu0 0.0
        %2649 = vmatpush1.msra.mxu0 0.0
        %2650 = vmatprep.subr.mxu0 0.0
        %2651 = vmatpush1.msra.mxu0 0.0
        %2652 = vmatprep.mubr.f32.mxu0 0.0
        %2653 = vmatmul.mubr.f32.gmra.mrb[0].mxu0 %v1983
        %v2654 = vpop.f32.mrb[0].mxu0
        %v2655 = vadd.f32 %v2584, %v2654
        %v2656 = vpop.f32.mrb[0].mxu0
        %v2657 = vadd.f32 %v2586, %v2656
        %2658 = vdwg.mxu0
        %2659 = vmatprep.subr.mxu0 %v2193
        %2660 = vmatpush1.msra.mxu0 %v2192
        %2661 = vmatprep.subr.mxu0 %v2195
        %2662 = vmatpush1.msra.mxu0 %v2194
        %2663 = vmatprep.subr.mxu0 %v2197
        %2664 = vmatpush1.msra.mxu0 %v2196
        %2665 = vmatprep.subr.mxu0 %v2199
        %2666 = vmatpush1.msra.mxu0 %v2198
        %2667 = vmatprep.subr.mxu0 %v2201
        %2668 = vmatpush1.msra.mxu0 %v2200
        %2669 = vmatprep.subr.mxu0 %v2203
        %2670 = vmatpush1.msra.mxu0 %v2202
        %2671 = vmatprep.subr.mxu0 %v2205
        %2672 = vmatpush1.msra.mxu0 %v2204
        %2673 = vmatprep.subr.mxu0 %v2207
        %2674 = vmatpush1.msra.mxu0 %v2206
        %2675 = vmatprep.subr.mxu0 %v2209
        %2676 = vmatpush1.msra.mxu0 %v2208
        %2677 = vmatprep.subr.mxu0 %v2211
        %2678 = vmatpush1.msra.mxu0 %v2210
        %2679 = vmatprep.subr.mxu0 %v2213
        %2680 = vmatpush1.msra.mxu0 %v2212
        %2681 = vmatprep.subr.mxu0 %v2215
        %2682 = vmatpush1.msra.mxu0 %v2214
        %2683 = vmatprep.subr.mxu0 %v2217
        %2684 = vmatpush1.msra.mxu0 %v2216
        %2685 = vmatprep.subr.mxu0 %v2219
        %2686 = vmatpush1.msra.mxu0 %v2218
        %2687 = vmatprep.subr.mxu0 %v2221
        %2688 = vmatpush1.msra.mxu0 %v2220
        %2689 = vmatprep.subr.mxu0 %v2223
        %2690 = vmatpush1.msra.mxu0 %v2222
        %2691 = vmatprep.subr.mxu0 0.0
        %2692 = vmatpush1.msra.mxu0 0.0
        %2693 = vmatprep.subr.mxu0 0.0
        %2694 = vmatpush1.msra.mxu0 0.0
        %2695 = vmatprep.subr.mxu0 0.0
        %2696 = vmatpush1.msra.mxu0 0.0
        %2697 = vmatprep.subr.mxu0 0.0
        %2698 = vmatpush1.msra.mxu0 0.0
        %2699 = vmatprep.subr.mxu0 0.0
        %2700 = vmatpush1.msra.mxu0 0.0
        %2701 = vmatprep.subr.mxu0 0.0
        %2702 = vmatpush1.msra.mxu0 0.0
        %2703 = vmatprep.subr.mxu0 0.0
        %2704 = vmatpush1.msra.mxu0 0.0
        %2705 = vmatprep.subr.mxu0 0.0
        %2706 = vmatpush1.msra.mxu0 0.0
        %2707 = vmatprep.subr.mxu0 0.0
        %2708 = vmatpush1.msra.mxu0 0.0
        %2709 = vmatprep.subr.mxu0 0.0
        %2710 = vmatpush1.msra.mxu0 0.0
        %2711 = vmatprep.subr.mxu0 0.0
        %2712 = vmatpush1.msra.mxu0 0.0
        %2713 = vmatprep.subr.mxu0 0.0
        %2714 = vmatpush1.msra.mxu0 0.0
        %2715 = vmatprep.subr.mxu0 0.0
        %2716 = vmatpush1.msra.mxu0 0.0
        %2717 = vmatprep.subr.mxu0 0.0
        %2718 = vmatpush1.msra.mxu0 0.0
        %2719 = vmatprep.subr.mxu0 0.0
        %2720 = vmatpush1.msra.mxu0 0.0
        %2721 = vmatprep.subr.mxu0 0.0
        %2722 = vmatpush1.msra.mxu0 0.0
        %2723 = vmatprep.mubr.f32.mxu0 0.0
        %2724 = vmatmul.mubr.f32.gmra.mrb[0].mxu0 %v2334
        %v2725 = vpop.f32.mrb[0].mxu0
        %v2726 = vadd.f32 0.0, %v2725
        %v2727 = vpop.f32.mrb[0].mxu0
        %v2728 = vadd.f32 0.0, %v2727
        %2729 = vdwg.mxu0
        %v2730 = vadd.f32 %v2655, %v2726
        %v2731 = vadd.f32 %v2657, %v2728
        %2732 = vmatprep.subr.mxu0 %v2302
        %2733 = vmatpush1.msra.mxu0 %v2301
        %2734 = vmatprep.subr.mxu0 %v2304
        %2735 = vmatpush1.msra.mxu0 %v2303
        %2736 = vmatprep.subr.mxu0 %v2306
        %2737 = vmatpush1.msra.mxu0 %v2305
        %2738 = vmatprep.subr.mxu0 %v2308
        %2739 = vmatpush1.msra.mxu0 %v2307
        %2740 = vmatprep.subr.mxu0 %v2310
        %2741 = vmatpush1.msra.mxu0 %v2309
        %2742 = vmatprep.subr.mxu0 %v2312
        %2743 = vmatpush1.msra.mxu0 %v2311
        %2744 = vmatprep.subr.mxu0 %v2314
        %2745 = vmatpush1.msra.mxu0 %v2313
        %2746 = vmatprep.subr.mxu0 %v2316
        %2747 = vmatpush1.msra.mxu0 %v2315
        %2748 = vmatprep.subr.mxu0 %v2318
        %2749 = vmatpush1.msra.mxu0 %v2317
        %2750 = vmatprep.subr.mxu0 %v2320
        %2751 = vmatpush1.msra.mxu0 %v2319
        %2752 = vmatprep.subr.mxu0 %v2322
        %2753 = vmatpush1.msra.mxu0 %v2321
        %2754 = vmatprep.subr.mxu0 %v2324
        %2755 = vmatpush1.msra.mxu0 %v2323
        %2756 = vmatprep.subr.mxu0 %v2326
        %2757 = vmatpush1.msra.mxu0 %v2325
        %2758 = vmatprep.subr.mxu0 %v2328
        %2759 = vmatpush1.msra.mxu0 %v2327
        %2760 = vmatprep.subr.mxu0 %v2330
        %2761 = vmatpush1.msra.mxu0 %v2329
        %2762 = vmatprep.subr.mxu0 %v2332
        %2763 = vmatpush1.msra.mxu0 %v2331
        %2764 = vmatprep.subr.mxu0 0.0
        %2765 = vmatpush1.msra.mxu0 0.0
        %2766 = vmatprep.subr.mxu0 0.0
        %2767 = vmatpush1.msra.mxu0 0.0
        %2768 = vmatprep.subr.mxu0 0.0
        %2769 = vmatpush1.msra.mxu0 0.0
        %2770 = vmatprep.subr.mxu0 0.0
        %2771 = vmatpush1.msra.mxu0 0.0
        %2772 = vmatprep.subr.mxu0 0.0
        %2773 = vmatpush1.msra.mxu0 0.0
        %2774 = vmatprep.subr.mxu0 0.0
        %2775 = vmatpush1.msra.mxu0 0.0
        %2776 = vmatprep.subr.mxu0 0.0
        %2777 = vmatpush1.msra.mxu0 0.0
        %2778 = vmatprep.subr.mxu0 0.0
        %2779 = vmatpush1.msra.mxu0 0.0
        %2780 = vmatprep.subr.mxu0 0.0
        %2781 = vmatpush1.msra.mxu0 0.0
        %2782 = vmatprep.subr.mxu0 0.0
        %2783 = vmatpush1.msra.mxu0 0.0
        %2784 = vmatprep.subr.mxu0 0.0
        %2785 = vmatpush1.msra.mxu0 0.0
        %2786 = vmatprep.subr.mxu0 0.0
        %2787 = vmatpush1.msra.mxu0 0.0
        %2788 = vmatprep.subr.mxu0 0.0
        %2789 = vmatpush1.msra.mxu0 0.0
        %2790 = vmatprep.subr.mxu0 0.0
        %2791 = vmatpush1.msra.mxu0 0.0
        %2792 = vmatprep.subr.mxu0 0.0
        %2793 = vmatpush1.msra.mxu0 0.0
        %2794 = vmatprep.subr.mxu0 0.0
        %2795 = vmatpush1.msra.mxu0 0.0
        %2796 = vmatprep.mubr.f32.mxu0 0.0
        %2797 = vmatmul.mubr.f32.gmra.mrb[0].mxu0 %v2442
        %v2798 = vpop.f32.mrb[0].mxu0
        %v2799 = vadd.f32 0.0, %v2798
        %v2800 = vpop.f32.mrb[0].mxu0
        %v2801 = vadd.f32 0.0, %v2800
        %2802 = vdwg.mxu0
        %v2803 = vadd.f32 %v2730, %v2799
        %v2804 = vadd.f32 %v2731, %v2801
        %v2805 = vrot.slane %v1983, 2
        %2807 = vmatprep.subr.mxu0 %v2411
        %2808 = vmatpush1.msra.mxu0 %v2410
        %2809 = vmatprep.subr.mxu0 %v2413
        %2810 = vmatpush1.msra.mxu0 %v2412
        %2811 = vmatprep.subr.mxu0 %v2415
        %2812 = vmatpush1.msra.mxu0 %v2414
        %2813 = vmatprep.subr.mxu0 %v2417
        %2814 = vmatpush1.msra.mxu0 %v2416
        %2815 = vmatprep.subr.mxu0 %v2419
        %2816 = vmatpush1.msra.mxu0 %v2418
        %2817 = vmatprep.subr.mxu0 %v2421
        %2818 = vmatpush1.msra.mxu0 %v2420
        %2819 = vmatprep.subr.mxu0 %v2423
        %2820 = vmatpush1.msra.mxu0 %v2422
        %2821 = vmatprep.subr.mxu0 %v2425
        %2822 = vmatpush1.msra.mxu0 %v2424
        %2823 = vmatprep.subr.mxu0 %v2427
        %2824 = vmatpush1.msra.mxu0 %v2426
        %2825 = vmatprep.subr.mxu0 %v2429
        %2826 = vmatpush1.msra.mxu0 %v2428
        %2827 = vmatprep.subr.mxu0 %v2431
        %2828 = vmatpush1.msra.mxu0 %v2430
        %2829 = vmatprep.subr.mxu0 %v2433
        %2830 = vmatpush1.msra.mxu0 %v2432
        %2831 = vmatprep.subr.mxu0 %v2435
        %2832 = vmatpush1.msra.mxu0 %v2434
        %2833 = vmatprep.subr.mxu0 %v2437
        %2834 = vmatpush1.msra.mxu0 %v2436
        %2835 = vmatprep.subr.mxu0 %v2439
        %2836 = vmatpush1.msra.mxu0 %v2438
        %2837 = vmatprep.subr.mxu0 %v2441
        %2838 = vmatpush1.msra.mxu0 %v2440
        %2839 = vmatprep.subr.mxu0 0.0
        %2840 = vmatpush1.msra.mxu0 0.0
        %2841 = vmatprep.subr.mxu0 0.0
        %2842 = vmatpush1.msra.mxu0 0.0
        %2843 = vmatprep.subr.mxu0 0.0
        %2844 = vmatpush1.msra.mxu0 0.0
        %2845 = vmatprep.subr.mxu0 0.0
        %2846 = vmatpush1.msra.mxu0 0.0
        %2847 = vmatprep.subr.mxu0 0.0
        %2848 = vmatpush1.msra.mxu0 0.0
        %2849 = vmatprep.subr.mxu0 0.0
        %2850 = vmatpush1.msra.mxu0 0.0
        %2851 = vmatprep.subr.mxu0 0.0
        %2852 = vmatpush1.msra.mxu0 0.0
        %2853 = vmatprep.subr.mxu0 0.0
        %2854 = vmatpush1.msra.mxu0 0.0
        %2855 = vmatprep.subr.mxu0 0.0
        %2856 = vmatpush1.msra.mxu0 0.0
        %2857 = vmatprep.subr.mxu0 0.0
        %2858 = vmatpush1.msra.mxu0 0.0
        %2859 = vmatprep.subr.mxu0 0.0
        %2860 = vmatpush1.msra.mxu0 0.0
        %2861 = vmatprep.subr.mxu0 0.0
        %2862 = vmatpush1.msra.mxu0 0.0
        %2863 = vmatprep.subr.mxu0 0.0
        %2864 = vmatpush1.msra.mxu0 0.0
        %2865 = vmatprep.subr.mxu0 0.0
        %2866 = vmatpush1.msra.mxu0 0.0
        %2867 = vmatprep.subr.mxu0 0.0
        %2868 = vmatpush1.msra.mxu0 0.0
        %2869 = vmatprep.subr.mxu0 0.0
        %2870 = vmatpush1.msra.mxu0 0.0
        %2871 = vmatprep.mubr.f32.mxu0 0.0
        %2872 = vmatmul.mubr.f32.gmra.mrb[0].mxu0 %v2805
        %v2873 = vpop.f32.mrb[0].mxu0
        %v2874 = vadd.f32 0.0, %v2873
        %v2875 = vpop.f32.mrb[0].mxu0
        %v2876 = vadd.f32 0.0, %v2875
        %2877 = vdwg.mxu0
        %v2878 = vadd.f32 %v2803, %v2874
        %v2879 = vadd.f32 %v2804, %v2876
        %v2880 = vmax.f32 %v2515, %v2878
        %v2881 = vmax.f32 %v2516, %v2879
        %v2882 = vmax.f32 %v2880, %v2881
        %v2883 = vld [vmem:[%s4] sm:$0x1]
        %v2885 = vlaneseq
        %v2886 = vshrl.u32 %v2885, 7
        %v2887 = vsub.s32 0, %v2886
        %v2888 = vrot.slane %v2883, %v2887
        %v2890 = vadd.f32 %v2882, %v2888
        %v2891 = vmax.f32 %v2890, 0.0
        %v2892 = vld [vmem:[%s6] sm:$0x1]
        %v2893 = vld [vmem:[#allocation7] sm:$0xff]
        %v2894 = vld [vmem:[#allocation7 + $0x8] sm:$0xff]
        %v2895 = vld [vmem:[#allocation7 + $0x10] sm:$0xff]
        %v2896 = vld [vmem:[#allocation7 + $0x18] sm:$0xff]
        %v2897 = vld [vmem:[#allocation7 + $0x20] sm:$0xff]
        %v2898 = vld [vmem:[#allocation7 + $0x28] sm:$0xff]
        %v2899 = vld [vmem:[#allocation7 + $0x30] sm:$0xff]
        %v2900 = vld [vmem:[#allocation7 + $0x38] sm:$0xff]
        %v2901 = vld [vmem:[#allocation7 + $0x40] sm:$0xff]
        %v2902 = vld [vmem:[#allocation7 + $0x48] sm:$0xff]
        %v2903 = vld [vmem:[#allocation7 + $0x50] sm:$0xff]
        %v2904 = vld [vmem:[#allocation7 + $0x58] sm:$0xff]
        %v2905 = vld [vmem:[#allocation7 + $0x60] sm:$0xff]
        %v2906 = vld [vmem:[#allocation7 + $0x68] sm:$0xff]
        %v2907 = vld [vmem:[#allocation7 + $0x70] sm:$0xff]
        %v2908 = vld [vmem:[#allocation7 + $0x78] sm:$0xff]
        %2909 = vmatprep.subr.mxu0 0.0
        %2910 = vmatpush1.msra.mxu0 %v2893
        %2911 = vmatprep.subr.mxu0 0.0
        %2912 = vmatpush1.msra.mxu0 %v2894
        %2913 = vmatprep.subr.mxu0 0.0
        %2914 = vmatpush1.msra.mxu0 %v2895
        %2915 = vmatprep.subr.mxu0 0.0
        %2916 = vmatpush1.msra.mxu0 %v2896
        %2917 = vmatprep.subr.mxu0 0.0
        %2918 = vmatpush1.msra.mxu0 %v2897
        %2919 = vmatprep.subr.mxu0 0.0
        %2920 = vmatpush1.msra.mxu0 %v2898
        %2921 = vmatprep.subr.mxu0 0.0
        %2922 = vmatpush1.msra.mxu0 %v2899
        %2923 = vmatprep.subr.mxu0 0.0
        %2924 = vmatpush1.msra.mxu0 %v2900
        %2925 = vmatprep.subr.mxu0 0.0
        %2926 = vmatpush1.msra.mxu0 %v2901
        %2927 = vmatprep.subr.mxu0 0.0
        %2928 = vmatpush1.msra.mxu0 %v2902
        %2929 = vmatprep.subr.mxu0 0.0
        %2930 = vmatpush1.msra.mxu0 %v2903
        %2931 = vmatprep.subr.mxu0 0.0
        %2932 = vmatpush1.msra.mxu0 %v2904
        %2933 = vmatprep.subr.mxu0 0.0
        %2934 = vmatpush1.msra.mxu0 %v2905
        %2935 = vmatprep.subr.mxu0 0.0
        %2936 = vmatpush1.msra.mxu0 %v2906
        %2937 = vmatprep.subr.mxu0 0.0
        %2938 = vmatpush1.msra.mxu0 %v2907
        %2939 = vmatprep.subr.mxu0 0.0
        %2940 = vmatpush1.msra.mxu0 %v2908
        %2941 = vmatprep.subr.mxu0 0.0
        %2942 = vmatpush1.msra.mxu0 0.0
        %2943 = vmatprep.subr.mxu0 0.0
        %2944 = vmatpush1.msra.mxu0 0.0
        %2945 = vmatprep.subr.mxu0 0.0
        %2946 = vmatpush1.msra.mxu0 0.0
        %2947 = vmatprep.subr.mxu0 0.0
        %2948 = vmatpush1.msra.mxu0 0.0
        %2949 = vmatprep.subr.mxu0 0.0
        %2950 = vmatpush1.msra.mxu0 0.0
        %2951 = vmatprep.subr.mxu0 0.0
        %2952 = vmatpush1.msra.mxu0 0.0
        %2953 = vmatprep.subr.mxu0 0.0
        %2954 = vmatpush1.msra.mxu0 0.0
        %2955 = vmatprep.subr.mxu0 0.0
        %2956 = vmatpush1.msra.mxu0 0.0
        %2957 = vmatprep.subr.mxu0 0.0
        %2958 = vmatpush1.msra.mxu0 0.0
        %2959 = vmatprep.subr.mxu0 0.0
        %2960 = vmatpush1.msra.mxu0 0.0
        %2961 = vmatprep.subr.mxu0 0.0
        %2962 = vmatpush1.msra.mxu0 0.0
        %2963 = vmatprep.subr.mxu0 0.0
        %2964 = vmatpush1.msra.mxu0 0.0
        %2965 = vmatprep.subr.mxu0 0.0
        %2966 = vmatpush1.msra.mxu0 0.0
        %2967 = vmatprep.subr.mxu0 0.0
        %2968 = vmatpush1.msra.mxu0 0.0
        %2969 = vmatprep.subr.mxu0 0.0
        %2970 = vmatpush1.msra.mxu0 0.0
        %2971 = vmatprep.subr.mxu0 0.0
        %2972 = vmatpush1.msra.mxu0 0.0
        %2973 = vmatprep.mubr.f32.mxu0 0.0
        %2974 = vmatmul.mubr.f32.gmra.mrb[0].mxu0 %v2891
        %v2975 = vpop.f32.mrb[0].mxu0
        %v2976 = vadd.f32 0.0, %v2975
        %v2977 = vpop.f32.mrb[0].mxu0
        %2978 = vdwg.mxu0
        %v2979 = vadd.f32 %v2892, %v2976
        %s2980 = scalar_lea.vmem [#allocation7], 128
        %v2981 = vld [vmem:[%s2980] sm:$0xff]
        %v2982 = vld [vmem:[%s2980 + $0x8] sm:$0xff]
        %v2983 = vld [vmem:[%s2980 + $0x10] sm:$0xff]
        %v2984 = vld [vmem:[%s2980 + $0x18] sm:$0xff]
        %v2985 = vld [vmem:[%s2980 + $0x20] sm:$0xff]
        %v2986 = vld [vmem:[%s2980 + $0x28] sm:$0xff]
        %v2987 = vld [vmem:[%s2980 + $0x30] sm:$0xff]
        %v2988 = vld [vmem:[%s2980 + $0x38] sm:$0xff]
        %v2989 = vld [vmem:[%s2980 + $0x40] sm:$0xff]
        %v2990 = vld [vmem:[%s2980 + $0x48] sm:$0xff]
        %v2991 = vld [vmem:[%s2980 + $0x50] sm:$0xff]
        %v2992 = vld [vmem:[%s2980 + $0x58] sm:$0xff]
        %v2993 = vld [vmem:[%s2980 + $0x60] sm:$0xff]
        %v2994 = vld [vmem:[%s2980 + $0x68] sm:$0xff]
        %v2995 = vld [vmem:[%s2980 + $0x70] sm:$0xff]
        %v2996 = vld [vmem:[%s2980 + $0x78] sm:$0xff]
        %v2998 = vrot.slane %v2891, 1
        %3000 = vmatprep.subr.mxu0 0.0
        %3001 = vmatpush1.msra.mxu0 %v2981
        %3002 = vmatprep.subr.mxu0 0.0
        %3003 = vmatpush1.msra.mxu0 %v2982
        %3004 = vmatprep.subr.mxu0 0.0
        %3005 = vmatpush1.msra.mxu0 %v2983
        %3006 = vmatprep.subr.mxu0 0.0
        %3007 = vmatpush1.msra.mxu0 %v2984
        %3008 = vmatprep.subr.mxu0 0.0
        %3009 = vmatpush1.msra.mxu0 %v2985
        %3010 = vmatprep.subr.mxu0 0.0
        %3011 = vmatpush1.msra.mxu0 %v2986
        %3012 = vmatprep.subr.mxu0 0.0
        %3013 = vmatpush1.msra.mxu0 %v2987
        %3014 = vmatprep.subr.mxu0 0.0
        %3015 = vmatpush1.msra.mxu0 %v2988
        %3016 = vmatprep.subr.mxu0 0.0
        %3017 = vmatpush1.msra.mxu0 %v2989
        %3018 = vmatprep.subr.mxu0 0.0
        %3019 = vmatpush1.msra.mxu0 %v2990
        %3020 = vmatprep.subr.mxu0 0.0
        %3021 = vmatpush1.msra.mxu0 %v2991
        %3022 = vmatprep.subr.mxu0 0.0
        %3023 = vmatpush1.msra.mxu0 %v2992
        %3024 = vmatprep.subr.mxu0 0.0
        %3025 = vmatpush1.msra.mxu0 %v2993
        %3026 = vmatprep.subr.mxu0 0.0
        %3027 = vmatpush1.msra.mxu0 %v2994
        %3028 = vmatprep.subr.mxu0 0.0
        %3029 = vmatpush1.msra.mxu0 %v2995
        %3030 = vmatprep.subr.mxu0 0.0
        %3031 = vmatpush1.msra.mxu0 %v2996
        %3032 = vmatprep.subr.mxu0 0.0
        %3033 = vmatpush1.msra.mxu0 0.0
        %3034 = vmatprep.subr.mxu0 0.0
        %3035 = vmatpush1.msra.mxu0 0.0
        %3036 = vmatprep.subr.mxu0 0.0
        %3037 = vmatpush1.msra.mxu0 0.0
        %3038 = vmatprep.subr.mxu0 0.0
        %3039 = vmatpush1.msra.mxu0 0.0
        %3040 = vmatprep.subr.mxu0 0.0
        %3041 = vmatpush1.msra.mxu0 0.0
        %3042 = vmatprep.subr.mxu0 0.0
        %3043 = vmatpush1.msra.mxu0 0.0
        %3044 = vmatprep.subr.mxu0 0.0
        %3045 = vmatpush1.msra.mxu0 0.0
        %3046 = vmatprep.subr.mxu0 0.0
        %3047 = vmatpush1.msra.mxu0 0.0
        %3048 = vmatprep.subr.mxu0 0.0
        %3049 = vmatpush1.msra.mxu0 0.0
        %3050 = vmatprep.subr.mxu0 0.0
        %3051 = vmatpush1.msra.mxu0 0.0
        %3052 = vmatprep.subr.mxu0 0.0
        %3053 = vmatpush1.msra.mxu0 0.0
        %3054 = vmatprep.subr.mxu0 0.0
        %3055 = vmatpush1.msra.mxu0 0.0
        %3056 = vmatprep.subr.mxu0 0.0
        %3057 = vmatpush1.msra.mxu0 0.0
        %3058 = vmatprep.subr.mxu0 0.0
        %3059 = vmatpush1.msra.mxu0 0.0
        %3060 = vmatprep.subr.mxu0 0.0
        %3061 = vmatpush1.msra.mxu0 0.0
        %3062 = vmatprep.subr.mxu0 0.0
        %3063 = vmatpush1.msra.mxu0 0.0
        %3064 = vmatprep.mubr.f32.mxu0 0.0
        %3065 = vmatmul.mubr.f32.gmra.mrb[0].mxu0 %v2998
        %v3066 = vpop.f32.mrb[0].mxu0
        %v3067 = vadd.f32 0.0, %v3066
        %v3068 = vpop.f32.mrb[0].mxu0
        %3069 = vdwg.mxu0
        %v3070 = vadd.f32 %v2979, %v3067
        %s3071 = scalar_lea.vmem [#allocation7], 256
        %v3072 = vld [vmem:[%s3071] sm:$0xff]
        %v3073 = vld [vmem:[%s3071 + $0x8] sm:$0xff]
        %v3074 = vld [vmem:[%s3071 + $0x10] sm:$0xff]
        %v3075 = vld [vmem:[%s3071 + $0x18] sm:$0xff]
        %v3076 = vld [vmem:[%s3071 + $0x20] sm:$0xff]
        %v3077 = vld [vmem:[%s3071 + $0x28] sm:$0xff]
        %v3078 = vld [vmem:[%s3071 + $0x30] sm:$0xff]
        %v3079 = vld [vmem:[%s3071 + $0x38] sm:$0xff]
        %v3080 = vld [vmem:[%s3071 + $0x40] sm:$0xff]
        %v3081 = vld [vmem:[%s3071 + $0x48] sm:$0xff]
        %v3082 = vld [vmem:[%s3071 + $0x50] sm:$0xff]
        %v3083 = vld [vmem:[%s3071 + $0x58] sm:$0xff]
        %v3084 = vld [vmem:[%s3071 + $0x60] sm:$0xff]
        %v3085 = vld [vmem:[%s3071 + $0x68] sm:$0xff]
        %v3086 = vld [vmem:[%s3071 + $0x70] sm:$0xff]
        %v3087 = vld [vmem:[%s3071 + $0x78] sm:$0xff]
        %v3088 = vrot.slane %v2891, 2
        %3090 = vmatprep.subr.mxu0 0.0
        %3091 = vmatpush1.msra.mxu0 %v3072
        %3092 = vmatprep.subr.mxu0 0.0
        %3093 = vmatpush1.msra.mxu0 %v3073
        %3094 = vmatprep.subr.mxu0 0.0
        %3095 = vmatpush1.msra.mxu0 %v3074
        %3096 = vmatprep.subr.mxu0 0.0
        %3097 = vmatpush1.msra.mxu0 %v3075
        %3098 = vmatprep.subr.mxu0 0.0
        %3099 = vmatpush1.msra.mxu0 %v3076
        %3100 = vmatprep.subr.mxu0 0.0
        %3101 = vmatpush1.msra.mxu0 %v3077
        %3102 = vmatprep.subr.mxu0 0.0
        %3103 = vmatpush1.msra.mxu0 %v3078
        %3104 = vmatprep.subr.mxu0 0.0
        %3105 = vmatpush1.msra.mxu0 %v3079
        %3106 = vmatprep.subr.mxu0 0.0
        %3107 = vmatpush1.msra.mxu0 %v3080
        %3108 = vmatprep.subr.mxu0 0.0
        %3109 = vmatpush1.msra.mxu0 %v3081
        %3110 = vmatprep.subr.mxu0 0.0
        %3111 = vmatpush1.msra.mxu0 %v3082
        %3112 = vmatprep.subr.mxu0 0.0
        %3113 = vmatpush1.msra.mxu0 %v3083
        %3114 = vmatprep.subr.mxu0 0.0
        %3115 = vmatpush1.msra.mxu0 %v3084
        %3116 = vmatprep.subr.mxu0 0.0
        %3117 = vmatpush1.msra.mxu0 %v3085
        %3118 = vmatprep.subr.mxu0 0.0
        %3119 = vmatpush1.msra.mxu0 %v3086
        %3120 = vmatprep.subr.mxu0 0.0
        %3121 = vmatpush1.msra.mxu0 %v3087
        %3122 = vmatprep.subr.mxu0 0.0
        %3123 = vmatpush1.msra.mxu0 0.0
        %3124 = vmatprep.subr.mxu0 0.0
        %3125 = vmatpush1.msra.mxu0 0.0
        %3126 = vmatprep.subr.mxu0 0.0
        %3127 = vmatpush1.msra.mxu0 0.0
        %3128 = vmatprep.subr.mxu0 0.0
        %3129 = vmatpush1.msra.mxu0 0.0
        %3130 = vmatprep.subr.mxu0 0.0
        %3131 = vmatpush1.msra.mxu0 0.0
        %3132 = vmatprep.subr.mxu0 0.0
        %3133 = vmatpush1.msra.mxu0 0.0
        %3134 = vmatprep.subr.mxu0 0.0
        %3135 = vmatpush1.msra.mxu0 0.0
        %3136 = vmatprep.subr.mxu0 0.0
        %3137 = vmatpush1.msra.mxu0 0.0
        %3138 = vmatprep.subr.mxu0 0.0
        %3139 = vmatpush1.msra.mxu0 0.0
        %3140 = vmatprep.subr.mxu0 0.0
        %3141 = vmatpush1.msra.mxu0 0.0
        %3142 = vmatprep.subr.mxu0 0.0
        %3143 = vmatpush1.msra.mxu0 0.0
        %3144 = vmatprep.subr.mxu0 0.0
        %3145 = vmatpush1.msra.mxu0 0.0
        %3146 = vmatprep.subr.mxu0 0.0
        %3147 = vmatpush1.msra.mxu0 0.0
        %3148 = vmatprep.subr.mxu0 0.0
        %3149 = vmatpush1.msra.mxu0 0.0
        %3150 = vmatprep.subr.mxu0 0.0
        %3151 = vmatpush1.msra.mxu0 0.0
        %3152 = vmatprep.subr.mxu0 0.0
        %3153 = vmatpush1.msra.mxu0 0.0
        %3154 = vmatprep.mubr.f32.mxu0 0.0
        %3155 = vmatmul.mubr.f32.gmra.mrb[0].mxu0 %v3088
        %v3156 = vpop.f32.mrb[0].mxu0
        %v3157 = vadd.f32 0.0, %v3156
        %v3158 = vpop.f32.mrb[0].mxu0
        %3159 = vdwg.mxu0
        %v3160 = vadd.f32 %v3070, %v3157
        %s3161 = scalar_lea.vmem [#allocation7], 384
        %v3162 = vld [vmem:[%s3161] sm:$0xff]
        %v3163 = vld [vmem:[%s3161 + $0x8] sm:$0xff]
        %v3164 = vld [vmem:[%s3161 + $0x10] sm:$0xff]
        %v3165 = vld [vmem:[%s3161 + $0x18] sm:$0xff]
        %v3166 = vld [vmem:[%s3161 + $0x20] sm:$0xff]
        %v3167 = vld [vmem:[%s3161 + $0x28] sm:$0xff]
        %v3168 = vld [vmem:[%s3161 + $0x30] sm:$0xff]
        %v3169 = vld [vmem:[%s3161 + $0x38] sm:$0xff]
        %v3170 = vld [vmem:[%s3161 + $0x40] sm:$0xff]
        %v3171 = vld [vmem:[%s3161 + $0x48] sm:$0xff]
        %v3172 = vld [vmem:[%s3161 + $0x50] sm:$0xff]
        %v3173 = vld [vmem:[%s3161 + $0x58] sm:$0xff]
        %v3174 = vld [vmem:[%s3161 + $0x60] sm:$0xff]
        %v3175 = vld [vmem:[%s3161 + $0x68] sm:$0xff]
        %v3176 = vld [vmem:[%s3161 + $0x70] sm:$0xff]
        %v3177 = vld [vmem:[%s3161 + $0x78] sm:$0xff]
        %v3178 = vrot.slane %v2891, 3
        %3180 = vmatprep.subr.mxu0 0.0
        %3181 = vmatpush1.msra.mxu0 %v3162
        %3182 = vmatprep.subr.mxu0 0.0
        %3183 = vmatpush1.msra.mxu0 %v3163
        %3184 = vmatprep.subr.mxu0 0.0
        %3185 = vmatpush1.msra.mxu0 %v3164
        %3186 = vmatprep.subr.mxu0 0.0
        %3187 = vmatpush1.msra.mxu0 %v3165
        %3188 = vmatprep.subr.mxu0 0.0
        %3189 = vmatpush1.msra.mxu0 %v3166
        %3190 = vmatprep.subr.mxu0 0.0
        %3191 = vmatpush1.msra.mxu0 %v3167
        %3192 = vmatprep.subr.mxu0 0.0
        %3193 = vmatpush1.msra.mxu0 %v3168
        %3194 = vmatprep.subr.mxu0 0.0
        %3195 = vmatpush1.msra.mxu0 %v3169
        %3196 = vmatprep.subr.mxu0 0.0
        %3197 = vmatpush1.msra.mxu0 %v3170
        %3198 = vmatprep.subr.mxu0 0.0
        %3199 = vmatpush1.msra.mxu0 %v3171
        %3200 = vmatprep.subr.mxu0 0.0
        %3201 = vmatpush1.msra.mxu0 %v3172
        %3202 = vmatprep.subr.mxu0 0.0
        %3203 = vmatpush1.msra.mxu0 %v3173
        %3204 = vmatprep.subr.mxu0 0.0
        %3205 = vmatpush1.msra.mxu0 %v3174
        %3206 = vmatprep.subr.mxu0 0.0
        %3207 = vmatpush1.msra.mxu0 %v3175
        %3208 = vmatprep.subr.mxu0 0.0
        %3209 = vmatpush1.msra.mxu0 %v3176
        %3210 = vmatprep.subr.mxu0 0.0
        %3211 = vmatpush1.msra.mxu0 %v3177
        %3212 = vmatprep.subr.mxu0 0.0
        %3213 = vmatpush1.msra.mxu0 0.0
        %3214 = vmatprep.subr.mxu0 0.0
        %3215 = vmatpush1.msra.mxu0 0.0
        %3216 = vmatprep.subr.mxu0 0.0
        %3217 = vmatpush1.msra.mxu0 0.0
        %3218 = vmatprep.subr.mxu0 0.0
        %3219 = vmatpush1.msra.mxu0 0.0
        %3220 = vmatprep.subr.mxu0 0.0
        %3221 = vmatpush1.msra.mxu0 0.0
        %3222 = vmatprep.subr.mxu0 0.0
        %3223 = vmatpush1.msra.mxu0 0.0
        %3224 = vmatprep.subr.mxu0 0.0
        %3225 = vmatpush1.msra.mxu0 0.0
        %3226 = vmatprep.subr.mxu0 0.0
        %3227 = vmatpush1.msra.mxu0 0.0
        %3228 = vmatprep.subr.mxu0 0.0
        %3229 = vmatpush1.msra.mxu0 0.0
        %3230 = vmatprep.subr.mxu0 0.0
        %3231 = vmatpush1.msra.mxu0 0.0
        %3232 = vmatprep.subr.mxu0 0.0
        %3233 = vmatpush1.msra.mxu0 0.0
        %3234 = vmatprep.subr.mxu0 0.0
        %3235 = vmatpush1.msra.mxu0 0.0
        %3236 = vmatprep.subr.mxu0 0.0
        %3237 = vmatpush1.msra.mxu0 0.0
        %3238 = vmatprep.subr.mxu0 0.0
        %3239 = vmatpush1.msra.mxu0 0.0
        %3240 = vmatprep.subr.mxu0 0.0
        %3241 = vmatpush1.msra.mxu0 0.0
        %3242 = vmatprep.subr.mxu0 0.0
        %3243 = vmatpush1.msra.mxu0 0.0
        %3244 = vmatprep.mubr.f32.mxu0 0.0
        %3245 = vmatmul.mubr.f32.gmra.mrb[0].mxu0 %v3178
        %v3246 = vpop.f32.mrb[0].mxu0
        %v3247 = vadd.f32 0.0, %v3246
        %v3248 = vpop.f32.mrb[0].mxu0
        %3249 = vdwg.mxu0
        %v3250 = vadd.f32 %v3160, %v3247
        %s3251 = scalar_lea.vmem [#allocation7], 512
        %v3252 = vld [vmem:[%s3251] sm:$0xff]
        %v3253 = vld [vmem:[%s3251 + $0x8] sm:$0xff]
        %v3254 = vld [vmem:[%s3251 + $0x10] sm:$0xff]
        %v3255 = vld [vmem:[%s3251 + $0x18] sm:$0xff]
        %v3256 = vld [vmem:[%s3251 + $0x20] sm:$0xff]
        %v3257 = vld [vmem:[%s3251 + $0x28] sm:$0xff]
        %v3258 = vld [vmem:[%s3251 + $0x30] sm:$0xff]
        %v3259 = vld [vmem:[%s3251 + $0x38] sm:$0xff]
        %v3260 = vld [vmem:[%s3251 + $0x40] sm:$0xff]
        %v3261 = vld [vmem:[%s3251 + $0x48] sm:$0xff]
        %v3262 = vld [vmem:[%s3251 + $0x50] sm:$0xff]
        %v3263 = vld [vmem:[%s3251 + $0x58] sm:$0xff]
        %v3264 = vld [vmem:[%s3251 + $0x60] sm:$0xff]
        %v3265 = vld [vmem:[%s3251 + $0x68] sm:$0xff]
        %v3266 = vld [vmem:[%s3251 + $0x70] sm:$0xff]
        %v3267 = vld [vmem:[%s3251 + $0x78] sm:$0xff]
        %v3268 = vrot.slane %v2891, 4
        %3270 = vmatprep.subr.mxu0 0.0
        %3271 = vmatpush1.msra.mxu0 %v3252
        %3272 = vmatprep.subr.mxu0 0.0
        %3273 = vmatpush1.msra.mxu0 %v3253
        %3274 = vmatprep.subr.mxu0 0.0
        %3275 = vmatpush1.msra.mxu0 %v3254
        %3276 = vmatprep.subr.mxu0 0.0
        %3277 = vmatpush1.msra.mxu0 %v3255
        %3278 = vmatprep.subr.mxu0 0.0
        %3279 = vmatpush1.msra.mxu0 %v3256
        %3280 = vmatprep.subr.mxu0 0.0
        %3281 = vmatpush1.msra.mxu0 %v3257
        %3282 = vmatprep.subr.mxu0 0.0
        %3283 = vmatpush1.msra.mxu0 %v3258
        %3284 = vmatprep.subr.mxu0 0.0
        %3285 = vmatpush1.msra.mxu0 %v3259
        %3286 = vmatprep.subr.mxu0 0.0
        %3287 = vmatpush1.msra.mxu0 %v3260
        %3288 = vmatprep.subr.mxu0 0.0
        %3289 = vmatpush1.msra.mxu0 %v3261
        %3290 = vmatprep.subr.mxu0 0.0
        %3291 = vmatpush1.msra.mxu0 %v3262
        %3292 = vmatprep.subr.mxu0 0.0
        %3293 = vmatpush1.msra.mxu0 %v3263
        %3294 = vmatprep.subr.mxu0 0.0
        %3295 = vmatpush1.msra.mxu0 %v3264
        %3296 = vmatprep.subr.mxu0 0.0
        %3297 = vmatpush1.msra.mxu0 %v3265
        %3298 = vmatprep.subr.mxu0 0.0
        %3299 = vmatpush1.msra.mxu0 %v3266
        %3300 = vmatprep.subr.mxu0 0.0
        %3301 = vmatpush1.msra.mxu0 %v3267
        %3302 = vmatprep.subr.mxu0 0.0
        %3303 = vmatpush1.msra.mxu0 0.0
        %3304 = vmatprep.subr.mxu0 0.0
        %3305 = vmatpush1.msra.mxu0 0.0
        %3306 = vmatprep.subr.mxu0 0.0
        %3307 = vmatpush1.msra.mxu0 0.0
        %3308 = vmatprep.subr.mxu0 0.0
        %3309 = vmatpush1.msra.mxu0 0.0
        %3310 = vmatprep.subr.mxu0 0.0
        %3311 = vmatpush1.msra.mxu0 0.0
        %3312 = vmatprep.subr.mxu0 0.0
        %3313 = vmatpush1.msra.mxu0 0.0
        %3314 = vmatprep.subr.mxu0 0.0
        %3315 = vmatpush1.msra.mxu0 0.0
        %3316 = vmatprep.subr.mxu0 0.0
        %3317 = vmatpush1.msra.mxu0 0.0
        %3318 = vmatprep.subr.mxu0 0.0
        %3319 = vmatpush1.msra.mxu0 0.0
        %3320 = vmatprep.subr.mxu0 0.0
        %3321 = vmatpush1.msra.mxu0 0.0
        %3322 = vmatprep.subr.mxu0 0.0
        %3323 = vmatpush1.msra.mxu0 0.0
        %3324 = vmatprep.subr.mxu0 0.0
        %3325 = vmatpush1.msra.mxu0 0.0
        %3326 = vmatprep.subr.mxu0 0.0
        %3327 = vmatpush1.msra.mxu0 0.0
        %3328 = vmatprep.subr.mxu0 0.0
        %3329 = vmatpush1.msra.mxu0 0.0
        %3330 = vmatprep.subr.mxu0 0.0
        %3331 = vmatpush1.msra.mxu0 0.0
        %3332 = vmatprep.subr.mxu0 0.0
        %3333 = vmatpush1.msra.mxu0 0.0
        %3334 = vmatprep.mubr.f32.mxu0 0.0
        %3335 = vmatmul.mubr.f32.gmra.mrb[0].mxu0 %v3268
        %v3336 = vpop.f32.mrb[0].mxu0
        %v3337 = vadd.f32 0.0, %v3336
        %v3338 = vpop.f32.mrb[0].mxu0
        %3339 = vdwg.mxu0
        %v3340 = vadd.f32 %v3250, %v3337
        %v3341 = vmax.f32 %v3340, 0.0
        %v3342 = vld [vmem:[%s7] sm:$0xff]
        %v3343 = vld [vmem:[%s7 + $0x8] sm:$0xff]
        %v3344 = vld [vmem:[%s7 + $0x10] sm:$0xff]
        %v3345 = vld [vmem:[%s7 + $0x18] sm:$0xff]
        %v3346 = vld [vmem:[%s7 + $0x20] sm:$0xff]
        %v3347 = vld [vmem:[%s7 + $0x28] sm:$0xff]
        %v3348 = vld [vmem:[%s7 + $0x30] sm:$0xff]
        %v3349 = vld [vmem:[%s7 + $0x38] sm:$0xff]
        %v3350 = vld [vmem:[%s7 + $0x40] sm:$0xff]
        %v3351 = vld [vmem:[%s7 + $0x48] sm:$0xff]
        %v3352 = vld [vmem:[%s7 + $0x50] sm:$0xff]
        %v3353 = vld [vmem:[%s7 + $0x58] sm:$0xff]
        %v3354 = vld [vmem:[%s7 + $0x60] sm:$0xff]
        %v3355 = vld [vmem:[%s7 + $0x68] sm:$0xff]
        %v3356 = vld [vmem:[%s7 + $0x70] sm:$0xff]
        %v3357 = vld [vmem:[%s7 + $0x78] sm:$0xff]
        %v3358 = vld [vmem:[%s8] sm:$0x1]
        %3359 = vmatprep.subr.mxu0 0.0
        %3360 = vmatpush1.msra.mxu0 %v3342
        %3361 = vmatprep.subr.mxu0 0.0
        %3362 = vmatpush1.msra.mxu0 %v3343
        %3363 = vmatprep.subr.mxu0 0.0
        %3364 = vmatpush1.msra.mxu0 %v3344
        %3365 = vmatprep.subr.mxu0 0.0
        %3366 = vmatpush1.msra.mxu0 %v3345
        %3367 = vmatprep.subr.mxu0 0.0
        %3368 = vmatpush1.msra.mxu0 %v3346
        %3369 = vmatprep.subr.mxu0 0.0
        %3370 = vmatpush1.msra.mxu0 %v3347
        %3371 = vmatprep.subr.mxu0 0.0
        %3372 = vmatpush1.msra.mxu0 %v3348
        %3373 = vmatprep.subr.mxu0 0.0
        %3374 = vmatpush1.msra.mxu0 %v3349
        %3375 = vmatprep.subr.mxu0 0.0
        %3376 = vmatpush1.msra.mxu0 %v3350
        %3377 = vmatprep.subr.mxu0 0.0
        %3378 = vmatpush1.msra.mxu0 %v3351
        %3379 = vmatprep.subr.mxu0 0.0
        %3380 = vmatpush1.msra.mxu0 %v3352
        %3381 = vmatprep.subr.mxu0 0.0
        %3382 = vmatpush1.msra.mxu0 %v3353
        %3383 = vmatprep.subr.mxu0 0.0
        %3384 = vmatpush1.msra.mxu0 %v3354
        %3385 = vmatprep.subr.mxu0 0.0
        %3386 = vmatpush1.msra.mxu0 %v3355
        %3387 = vmatprep.subr.mxu0 0.0
        %3388 = vmatpush1.msra.mxu0 %v3356
        %3389 = vmatprep.subr.mxu0 0.0
        %3390 = vmatpush1.msra.mxu0 %v3357
        %3391 = vmatprep.subr.mxu0 0.0
        %3392 = vmatpush1.msra.mxu0 0.0
        %3393 = vmatprep.subr.mxu0 0.0
        %3394 = vmatpush1.msra.mxu0 0.0
        %3395 = vmatprep.subr.mxu0 0.0
        %3396 = vmatpush1.msra.mxu0 0.0
        %3397 = vmatprep.subr.mxu0 0.0
        %3398 = vmatpush1.msra.mxu0 0.0
        %3399 = vmatprep.subr.mxu0 0.0
        %3400 = vmatpush1.msra.mxu0 0.0
        %3401 = vmatprep.subr.mxu0 0.0
        %3402 = vmatpush1.msra.mxu0 0.0
        %3403 = vmatprep.subr.mxu0 0.0
        %3404 = vmatpush1.msra.mxu0 0.0
        %3405 = vmatprep.subr.mxu0 0.0
        %3406 = vmatpush1.msra.mxu0 0.0
        %3407 = vmatprep.subr.mxu0 0.0
        %3408 = vmatpush1.msra.mxu0 0.0
        %3409 = vmatprep.subr.mxu0 0.0
        %3410 = vmatpush1.msra.mxu0 0.0
        %3411 = vmatprep.subr.mxu0 0.0
        %3412 = vmatpush1.msra.mxu0 0.0
        %3413 = vmatprep.subr.mxu0 0.0
        %3414 = vmatpush1.msra.mxu0 0.0
        %3415 = vmatprep.subr.mxu0 0.0
        %3416 = vmatpush1.msra.mxu0 0.0
        %3417 = vmatprep.subr.mxu0 0.0
        %3418 = vmatpush1.msra.mxu0 0.0
        %3419 = vmatprep.subr.mxu0 0.0
        %3420 = vmatpush1.msra.mxu0 0.0
        %3421 = vmatprep.subr.mxu0 0.0
        %3422 = vmatpush1.msra.mxu0 0.0
        %3423 = vmatprep.mubr.f32.mxu0 0.0
        %3424 = vmatmul.mubr.f32.gmra.mrb[0].mxu0 %v3341
        %v3425 = vpop.f32.mrb[0].mxu0
        %v3426 = vadd.f32 %v3358, %v3425
        %v3427 = vpop.f32.mrb[0].mxu0
        %3428 = vdwg.mxu0
        %v3429 = vmax.f32 %v3426, 0.0
        %v3430 = vld [vmem:[#allocation8] sm:$0xff]
        %v3431 = vld [vmem:[#allocation8 + $0x8] sm:$0xff]
        %v3432 = vld [vmem:[#allocation8 + $0x10] sm:$0xff]
        %v3433 = vld [vmem:[#allocation8 + $0x18] sm:$0xff]
        %v3434 = vld [vmem:[#allocation8 + $0x20] sm:$0xff]
        %v3435 = vld [vmem:[#allocation8 + $0x28] sm:$0xff]
        %v3436 = vld [vmem:[#allocation8 + $0x30] sm:$0xff]
        %v3437 = vld [vmem:[#allocation8 + $0x38] sm:$0xff]
        %v3438 = vld [vmem:[#allocation8 + $0x40] sm:$0xff]
        %v3439 = vld [vmem:[#allocation8 + $0x48] sm:$0xff]
        %v3440 = vld [vmem:[#allocation8 + $0x50] sm:$0xff]
        %v3441 = vld [vmem:[#allocation8 + $0x58] sm:$0xff]
        %v3442 = vld [vmem:[#allocation8 + $0x60] sm:$0xff]
        %v3443 = vld [vmem:[#allocation8 + $0x68] sm:$0xff]
        %v3444 = vld [vmem:[#allocation8 + $0x70] sm:$0xff]
        %v3445 = vld [vmem:[#allocation8 + $0x78] sm:$0xff]
        %v3446 = vld [vmem:[%s10] sm:$0x1]
        %3447 = vmatprep.subr.mxu0 0.0
        %3448 = vmatpush1.msra.mxu0 %v3430
        %3449 = vmatprep.subr.mxu0 0.0
        %3450 = vmatpush1.msra.mxu0 %v3431
        %3451 = vmatprep.subr.mxu0 0.0
        %3452 = vmatpush1.msra.mxu0 %v3432
        %3453 = vmatprep.subr.mxu0 0.0
        %3454 = vmatpush1.msra.mxu0 %v3433
        %3455 = vmatprep.subr.mxu0 0.0
        %3456 = vmatpush1.msra.mxu0 %v3434
        %3457 = vmatprep.subr.mxu0 0.0
        %3458 = vmatpush1.msra.mxu0 %v3435
        %3459 = vmatprep.subr.mxu0 0.0
        %3460 = vmatpush1.msra.mxu0 %v3436
        %3461 = vmatprep.subr.mxu0 0.0
        %3462 = vmatpush1.msra.mxu0 %v3437
        %3463 = vmatprep.subr.mxu0 0.0
        %3464 = vmatpush1.msra.mxu0 %v3438
        %3465 = vmatprep.subr.mxu0 0.0
        %3466 = vmatpush1.msra.mxu0 %v3439
        %3467 = vmatprep.subr.mxu0 0.0
        %3468 = vmatpush1.msra.mxu0 %v3440
        %3469 = vmatprep.subr.mxu0 0.0
        %3470 = vmatpush1.msra.mxu0 %v3441
        %3471 = vmatprep.subr.mxu0 0.0
        %3472 = vmatpush1.msra.mxu0 %v3442
        %3473 = vmatprep.subr.mxu0 0.0
        %3474 = vmatpush1.msra.mxu0 %v3443
        %3475 = vmatprep.subr.mxu0 0.0
        %3476 = vmatpush1.msra.mxu0 %v3444
        %3477 = vmatprep.subr.mxu0 0.0
        %3478 = vmatpush1.msra.mxu0 %v3445
        %3479 = vmatprep.subr.mxu0 0.0
        %3480 = vmatpush1.msra.mxu0 0.0
        %3481 = vmatprep.subr.mxu0 0.0
        %3482 = vmatpush1.msra.mxu0 0.0
        %3483 = vmatprep.subr.mxu0 0.0
        %3484 = vmatpush1.msra.mxu0 0.0
        %3485 = vmatprep.subr.mxu0 0.0
        %3486 = vmatpush1.msra.mxu0 0.0
        %3487 = vmatprep.subr.mxu0 0.0
        %3488 = vmatpush1.msra.mxu0 0.0
        %3489 = vmatprep.subr.mxu0 0.0
        %3490 = vmatpush1.msra.mxu0 0.0
        %3491 = vmatprep.subr.mxu0 0.0
        %3492 = vmatpush1.msra.mxu0 0.0
        %3493 = vmatprep.subr.mxu0 0.0
        %3494 = vmatpush1.msra.mxu0 0.0
        %3495 = vmatprep.subr.mxu0 0.0
        %3496 = vmatpush1.msra.mxu0 0.0
        %3497 = vmatprep.subr.mxu0 0.0
        %3498 = vmatpush1.msra.mxu0 0.0
        %3499 = vmatprep.subr.mxu0 0.0
        %3500 = vmatpush1.msra.mxu0 0.0
        %3501 = vmatprep.subr.mxu0 0.0
        %3502 = vmatpush1.msra.mxu0 0.0
        %3503 = vmatprep.subr.mxu0 0.0
        %3504 = vmatpush1.msra.mxu0 0.0
        %3505 = vmatprep.subr.mxu0 0.0
        %3506 = vmatpush1.msra.mxu0 0.0
        %3507 = vmatprep.subr.mxu0 0.0
        %3508 = vmatpush1.msra.mxu0 0.0
        %3509 = vmatprep.subr.mxu0 0.0
        %3510 = vmatpush1.msra.mxu0 0.0
        %3511 = vmatprep.mubr.f32.mxu0 0.0
        %3512 = vmatmul.mubr.f32.gmra.mrb[0].mxu0 %v3429
        %v3513 = vpop.f32.mrb[0].mxu0
        %v3514 = vadd.f32 %v3446, %v3513
        %v3515 = vpop.f32.mrb[0].mxu0
        %3516 = vdwg.mxu0
        %vm3517 = vcmask 73728
        %3518 = vst.msk [vmem:[%s437] sm:$0x1] %vm3517, %v3514
        %s3519 = sand.u32 %s272, 1
        %s3520 = scalar_lea.sflag [#allocation4], %s3519
        %s3521 = sand.u32 %s272, 1
        %s3522 = scalar_lea.vmem [#allocation10], %s3521
        // Predicated region
        $region81: #{lenet_forward_pallas.1} parent=63 // pred_check
          %p3523 = pneg %p282
        $region82: #{lenet_forward_pallas.1} parent=63 // pred_check_branch
          %3525 = sbr.rel (%p3523) target = $region84
        $region83: #{lenet_forward_pallas.1} parent=63 // pred_region
          %s3527 = ssub.s32 16, 16
          %3528 = vsyncadd %s3520, %s3527
          %s3529 = smul.addr %s28, 16
          %s3530 = scalar_lea.hbm %s11, %s3529
          %s3532 = sshll.u32 %s3522, 4
          %s3533 = int_to_ptr.vmem [resolvable:$true] %s3532
          %3535 = dma.vmem_to_hbm [thread:$0]  %s3533, 16, %s3530, %s3520
        $region84: #{lenet_forward_pallas.1} parent=63 // pred_fallthru
          _
      $region64: #{lenet_forward_pallas.1} parent=5 // pred_fallthru
        _
      %p3536 = scmp.le.s32.totalorder 2, %s23
      // Predicated region
      $region85: #{lenet_forward_pallas.1} parent=5 // pred_check
        %p3537 = pneg %p3536
      $region86: #{lenet_forward_pallas.1} parent=5 // pred_check_branch
        %3539 = sbr.rel (%p3537) target = $region88
      $region87: #{lenet_forward_pallas.1} parent=5 // pred_region
        %s3540 = ssub.s32 %s23, 2
        // Predicated region
        $region89: #{lenet_forward_pallas.1} parent=87 // pred_check
          %p3541 = pneg %p288
        $region90: #{lenet_forward_pallas.1} parent=87 // pred_check_branch
          %3543 = sbr.rel (%p3541) target = $region92
        $region91: #{lenet_forward_pallas.1} parent=87 // pred_region
          %s3544 = sand.u32 %s273, 1
          %s3545 = scalar_lea.sflag [#allocation4], %s3544
          %s3546 = sand.u32 %s273, 1
          %s3547 = scalar_lea.vmem [#allocation10], %s3546
          %3548 = dma.done %s3545, 16
        $region92: #{lenet_forward_pallas.1} parent=87 // pred_fallthru
          _
      $region88: #{lenet_forward_pallas.1} parent=5 // pred_fallthru
        _
    $region6: #{lenet_forward_pallas.1} parent=1 // loop_footer
      %s27 = sadd.s32 1, %s23
    $region7: #{lenet_forward_pallas.1} parent=1 // loop_footer_branch
      %22 = sbr.rel target = $region3
    $region8: #{lenet_forward_pallas.1} parent=1 // loop_exit
      _
    %3549 = vsyncpa [#allocation3], 1
    %s3550 = scalar_lea.sflag [#allocation3], 1
    %3551 = vsyncpa %s3550, 1
    %3552 = vsyncpa [#allocation6], 1
    %3553 = vsyncpa [#allocation9], 1
    %3554 = vsyncpa [#allocation4], 1
    %s3555 = scalar_lea.sflag [#allocation4], 1
    %3556 = vsyncpa %s3555, 1

</llo_original>
